<compile_context>
chip_gen: v6e
topology: v6e:2x2x1
jax: 0.10.0
libtpu: 0.0.40
codegen_flags: <defaults>
</compile_context>

<pallas_src>
import jax
import jax.numpy as jnp
from jax import lax
from jax.experimental import pallas as pl
from jax.experimental.pallas import tpu as pltpu

# bf16 operands for every MXU matmul (f32 accumulation via preferred_element_type).
MXU_DTYPE = jnp.bfloat16


# ---------------------------------------------------------------------------
# Fused bidirectional LSTM, streamed over sequence chunks.
# Grid = (num_chunks,), "arbitrary" (chunks are dependent through h/c state).
# ---------------------------------------------------------------------------
def _bilstm_kernel(xa_f_ref, xb_f_ref, xa_b_ref, xb_b_ref,
                   wihA_ref, wihB_ref, whh_ref, b_ref,
                   out_f_ref, out_b_ref,
                   gx_f_ref, gx_b_ref, h_ref, c_ref):
    Sc, B, _ = xa_f_ref.shape          # chunk length, batch, input-half width
    H = whh_ref.shape[1]

    # Zero the carried recurrent state on the first chunk only.
    @pl.when(pl.program_id(0) == 0)
    def _():
        h_ref[...] = jnp.zeros_like(h_ref)
        c_ref[...] = jnp.zeros_like(c_ref)

    # Hoisted input projection for this chunk, both directions.  The layer
    # input arrives as two feature halves (xA, xB) with W_ih's rows split to
    # match, so the inter-layer concat never has to be materialized in HBM.
    def proj(xa_ref, xb_ref, d, gx_ref):
        xa = xa_ref[...].reshape(Sc * B, -1).astype(MXU_DTYPE)
        xb = xb_ref[...].reshape(Sc * B, -1).astype(MXU_DTYPE)
        g = (jnp.dot(xa, wihA_ref[d].astype(MXU_DTYPE),
                     preferred_element_type=jnp.float32)
             + jnp.dot(xb, wihB_ref[d].astype(MXU_DTYPE),
                       preferred_element_type=jnp.float32)
             + b_ref[d])
        gx_ref[...] = g.reshape(Sc, B, 4 * H).astype(gx_ref.dtype)   # bf16 scratch

    proj(xa_f_ref, xb_f_ref, 0, gx_f_ref)
    proj(xa_b_ref, xb_b_ref, 1, gx_b_ref)

    whh_f = whh_ref[0].astype(MXU_DTYPE)
    whh_b = whh_ref[1].astype(MXU_DTYPE)

    def cell(gates, c_prev):
        i_g = jax.nn.sigmoid(gates[:, 0 * H:1 * H])   # torch gate order i,f,g,o
        f_g = jax.nn.sigmoid(gates[:, 1 * H:2 * H])
        g_g = jnp.tanh(gates[:, 2 * H:3 * H])
        o_g = jax.nn.sigmoid(gates[:, 3 * H:4 * H])
        c_new = f_g * c_prev + i_g * g_g               # f32 recurrent state
        h_new = o_g * jnp.tanh(c_new)
        return h_new, c_new

    def step(i, carry):
        hf, cf, hb, cb = carry
        j = Sc - 1 - i                                  # bwd walks its chunk in reverse
        gates_f = gx_f_ref[i].astype(jnp.float32) + jnp.dot(
            hf.astype(MXU_DTYPE), whh_f, preferred_element_type=jnp.float32)
        gates_b = gx_b_ref[j].astype(jnp.float32) + jnp.dot(
            hb.astype(MXU_DTYPE), whh_b, preferred_element_type=jnp.float32)
        hf, cf = cell(gates_f, cf)
        hb, cb = cell(gates_b, cb)
        out_f_ref[i] = hf.astype(out_f_ref.dtype)
        out_b_ref[j] = hb.astype(out_b_ref.dtype)
        return hf, cf, hb, cb

    hf, cf, hb, cb = lax.fori_loop(
        0, Sc, step, (h_ref[0], c_ref[0], h_ref[1], c_ref[1]))
    h_ref[0] = hf
    c_ref[0] = cf
    h_ref[1] = hb
    c_ref[1] = cb


def bilstm(xa, xb, p, *, out_dtype=jnp.float32, chunk=None):
    """Fused bidirectional LSTM layer.

    xa/xb: (S, B, Hin) time-major feature halves of the layer input (the layer
    input is concat([xa, xb], -1); W_ih is split into wihA/wihB row blocks to
    match).  Returns (out_fwd, out_bwd), each (S, B, H) in `out_dtype`.
    """
    S, B, Hin = xa.shape
    H = p['whh'].shape[1]
    if chunk is None or chunk <= 0 or chunk > S or S % chunk != 0:
        chunk = S
    C = S // chunk

    x_spec_f = pl.BlockSpec((chunk, B, Hin), lambda c: (c, 0, 0))
    x_spec_b = pl.BlockSpec((chunk, B, Hin), lambda c: (C - 1 - c, 0, 0))
    w_spec = lambda shape: pl.BlockSpec(shape, lambda c, _s=shape: (0,) * len(_s))

    return pl.pallas_call(
        _bilstm_kernel,
        out_shape=(jax.ShapeDtypeStruct((S, B, H), out_dtype),
                   jax.ShapeDtypeStruct((S, B, H), out_dtype)),
        grid=(C,),
        in_specs=[
            x_spec_f, x_spec_f,                # xa, xb : chunk for fwd direction
            x_spec_b, x_spec_b,                # xa, xb : chunk for bwd direction
            w_spec((2, Hin, 4 * H)),           # W_ih rows for the xa half (both dirs)
            w_spec((2, Hin, 4 * H)),           # W_ih rows for the xb half
            w_spec((2, H, 4 * H)),             # W_hh
            w_spec((2, 1, 4 * H)),             # bias (= b_ih + b_hh)
        ],
        out_specs=(pl.BlockSpec((chunk, B, H), lambda c: (c, 0, 0)),
                   pl.BlockSpec((chunk, B, H), lambda c: (C - 1 - c, 0, 0))),
        scratch_shapes=[
            pltpu.VMEM((chunk, B, 4 * H), MXU_DTYPE),   # gx, fwd chunk (bf16)
            pltpu.VMEM((chunk, B, 4 * H), MXU_DTYPE),   # gx, bwd chunk (bf16)
            pltpu.VMEM((2, B, H), jnp.float32),         # carried h state [fwd, bwd]
            pltpu.VMEM((2, B, H), jnp.float32),         # carried c state
        ],
        compiler_params=pltpu.CompilerParams(
            dimension_semantics=("arbitrary",),         # chunks carry state
            vmem_limit_bytes=64 * 1024 * 1024),
    )(xa, xb, xa, xb, p['wihA'], p['wihB'], p['whh'], p['b'])


# ---------------------------------------------------------------------------
# Fused epilogue: seq_max_pool + seq_and_vec + Conv1d(k=3,p=1) + ReLU + heads.
# Grid over batch blocks of Bt rows.
# ---------------------------------------------------------------------------
def _epilogue_kernel(t_ref, mask_ref, wt3_ref, wv3_ref, bc_ref, wp_ref, bp_ref,
                     ps_ref, tmax_ref):
    Bt, S, E = t_ref.shape
    t3 = t_ref[...]                                     # (Bt,S,E) f32
    m = mask_ref[...]                                   # (Bt,S,1)

    # seq_max_pool: masked max over the sequence axis (matches t - (1-m)*1e10).
    tmax = jnp.max(t3 - (1.0 - m) * 1e10, axis=1, keepdims=True)   # (Bt,1,E)
    tmax_ref[...] = tmax

    # Conv1d over concat([t, broadcast(t_max)]) without materializing it.
    # All 3 taps of the t half in ONE matmul: wt3 = [tap0 | tap1 | tap2], (E,3E).
    tb = t3.reshape(Bt * S, E).astype(MXU_DTYPE)
    taps = jnp.dot(tb, wt3_ref[...].astype(MXU_DTYPE),
                   preferred_element_type=jnp.float32).reshape(Bt, S, 3 * E)
    a0 = taps[:, :, 0:E]
    a1 = taps[:, :, E:2 * E]
    a2 = taps[:, :, 2 * E:3 * E]

    # Broadcast (t_max) half: one (Bt,E)@(E,3E) matmul per block, constant over S.
    vm = jnp.dot(tmax.reshape(Bt, E).astype(MXU_DTYPE),
                 wv3_ref[...].astype(MXU_DTYPE),
                 preferred_element_type=jnp.float32)                # (Bt,3E)
    v0 = vm[:, None, 0:E]
    v1 = vm[:, None, E:2 * E]
    v2 = vm[:, None, 2 * E:3 * E]

    # y[s] = tap0(in[s-1]) + tap1(in[s]) + tap2(in[s+1]); zero-padded ends are
    # handled by the zero-row shifts (both halves of the padded column are 0).
    zrow = jnp.zeros((Bt, 1, E), jnp.float32)
    A0 = a0 + v0
    A2 = a2 + v2
    y = (jnp.concatenate([zrow, A0[:, :-1, :]], axis=1)
         + (a1 + v1)
         + jnp.concatenate([A2[:, 1:, :], zrow], axis=1))
    y = jnp.maximum(y + bc_ref[...], 0.0)               # conv bias + ReLU (f32)

    # fc_ps1 / fc_ps2: tiny (E->1) heads done as VPU mul + lane reduction so the
    # store is lane-dense along S (output laid out (B, 2, S)).
    wp = wp_ref[...]                                    # (2,E)
    ps0 = jnp.sum(y * wp[0:1, :].reshape(1, 1, E), axis=-1)   # (Bt,S)
    ps1 = jnp.sum(y * wp[1:2, :].reshape(1, 1, E), axis=-1)
    ps_ref[:, 0:1, :] = (ps0 + bp_ref[0])[:, None, :]
    ps_ref[:, 1:2, :] = (ps1 + bp_ref[1])[:, None, :]


def conv_heads(t, mask, params):
    B, S, E = t.shape
    bt = max(d for d in range(1, min(B, 8) + 1) if B % d == 0)   # batch rows / step
    return pl.pallas_call(
        _epilogue_kernel,
        out_shape=(jax.ShapeDtypeStruct((B, 2, S), jnp.float32),
                   jax.ShapeDtypeStruct((B, 1, E), jnp.float32)),
        grid=(B // bt,),
        in_specs=[
            pl.BlockSpec((bt, S, E), lambda bi: (bi, 0, 0)),
            pl.BlockSpec((bt, S, 1), lambda bi: (bi, 0, 0)),
            pl.BlockSpec((E, 3 * E), lambda bi: (0, 0)),
            pl.BlockSpec((E, 3 * E), lambda bi: (0, 0)),
            pl.BlockSpec((1, E), lambda bi: (0, 0)),
            pl.BlockSpec((2, E), lambda bi: (0, 0)),
            pl.BlockSpec((2, 1, 1), lambda bi: (0, 0, 0)),
        ],
        out_specs=(pl.BlockSpec((bt, 2, S), lambda bi: (bi, 0, 0)),
                   pl.BlockSpec((bt, 1, E), lambda bi: (bi, 0, 0))),
        compiler_params=pltpu.CompilerParams(
            dimension_semantics=("parallel",),
            vmem_limit_bytes=64 * 1024 * 1024),
    )(t, mask, params['wt3'], params['wv3'], params['bc'], params['wp'], params['bp'])


# ---------------------------------------------------------------------------
# Full forward pass (glue: embedding gather, transpose/split, output slicing).
# ---------------------------------------------------------------------------
def s_model_forward(tokens, params, *, seq_chunk=None):
    B, S = tokens.shape
    mask = (tokens[:, :, None] > 0).astype(jnp.float32)          # (B,S,1)
    emb = jnp.take(params['emb'], tokens, axis=0)                # embedding gather (glue)
    # fc1_dropout(p=0.25) is identity at inference time.
    x_tm = jnp.transpose(emb * mask, (1, 0, 2))                  # (S,B,E) time-major
    E = x_tm.shape[-1]
    H = E // 2
    xa, xb = x_tm[..., :H], x_tm[..., H:]                        # two feature halves

    # Layer 1 emits bf16 activations (consumed only by layer 2's bf16 MXU path).
    f1, b1 = bilstm(xa, xb, params['lstm1'], out_dtype=MXU_DTYPE, chunk=seq_chunk)
    # Layer 2 emits f32: its output `t` is a model output and feeds the masked max.
    f2, b2 = bilstm(f1, b1, params['lstm2'], out_dtype=jnp.float32, chunk=seq_chunk)

    # `t` is returned by the model, so one relayout to batch-first concat is
    # mandatory; it is the only full-activation relayout left in the forward.
    t = jnp.transpose(jnp.concatenate([f2, b2], axis=-1), (1, 0, 2))   # (B,S,2H)

    ps, tmax3 = conv_heads(t, mask, params)                      # (B,2,S), (B,1,E)
    ps1 = ps[:, 0, :, None]                                      # (B,S,1)
    ps2 = ps[:, 1, :, None]                                      # (B,S,1)
    t_max = tmax3.reshape(B, -1)                                 # (B,E)
    return ps1, ps2, t, t_max, mask


def init_params(key, vocab, emb_size):
    E = emb_size
    H = emb_size // 2
    keys = iter(jax.random.split(key, 16))
    rnd = lambda shape, scale=0.1: jax.random.normal(next(keys), shape, jnp.float32) * scale

    def lstm_params():
        # Stacked over direction (0 = forward, 1 = backward); torch gate order
        # i,f,g,o.  Porting torch weights per direction:
        #   wihA = weight_ih.T[:H]   wihB = weight_ih.T[H:]
        #   whh  = weight_hh.T       b    = (bias_ih + bias_hh)[None, :]
        return {'wihA': rnd((2, H, 4 * H)),
                'wihB': rnd((2, H, 4 * H)),
                'whh':  rnd((2, H, 4 * H)),
                'b':    rnd((2, 1, 4 * H))}

    return {
        'emb': rnd((vocab, E), 1.0),
        'lstm1': lstm_params(),
        'lstm2': lstm_params(),
        # Conv1d(2E->E, k=3, pad=1) weight W[o, c, k] split by input half and
        # packed with the 3 taps fused along columns:
        #   wt3 = concat([W[:, :E, k].T for k in 0..2], axis=1)   (E, 3E)  t half
        #   wv3 = concat([W[:, E:, k].T for k in 0..2], axis=1)   (E, 3E)  t_max half
        'wt3': rnd((E, 3 * E)),
        'wv3': rnd((E, 3 * E)),
        'bc': rnd((1, E)),
        # fc_ps1 / fc_ps2 heads stacked: wp[0] = fc_ps1.weight[0], wp[1] = fc_ps2.weight[0].
        'wp': rnd((2, E)),
        'bp': rnd((2, 1, 1)),
    }


if __name__ == "__main__":
    VOCAB, EMB, B, S = 100, 32, 2, 8
    key = jax.random.PRNGKey(0)
    pkey, tkey = jax.random.split(key)
    params = init_params(pkey, VOCAB, EMB)
    tokens = jax.random.randint(tkey, (B, S), 0, VOCAB, dtype=jnp.int32)
    tokens = tokens.at[:, -2:].set(0)     # padding positions to exercise the mask

    # seq_chunk=4 exercises the chunked-streaming path (2 chunks of 4 steps).
    fwd = jax.jit(lambda tk, pr: s_model_forward(tk, pr, seq_chunk=4))
    ps1, ps2, t, t_max, mask = fwd(tokens, params)
    for out in (ps1, ps2, t, t_max, mask):
        jax.block_until_ready(out)
    assert ps1.shape == (B, S, 1) and ps2.shape == (B, S, 1)
    assert t.shape == (B, S, EMB) and t_max.shape == (B, EMB) and mask.shape == (B, S, 1)
    print("KERNEL_OK")
</pallas_src>

<mosaic_0001>
module attributes {stable_mosaic.version = 11 : i64} {
  func.func @_bilstm_kernel(%arg0: i32, %arg1: memref<4x2x16xf32, #tpu.memory_space<vmem>>, %arg2: memref<4x2x16xf32, #tpu.memory_space<vmem>>, %arg3: memref<4x2x16xf32, #tpu.memory_space<vmem>>, %arg4: memref<4x2x16xf32, #tpu.memory_space<vmem>>, %arg5: memref<2x16x64xf32, #tpu.memory_space<vmem>>, %arg6: memref<2x16x64xf32, #tpu.memory_space<vmem>>, %arg7: memref<2x16x64xf32, #tpu.memory_space<vmem>>, %arg8: memref<2x1x64xf32, #tpu.memory_space<vmem>>, %arg9: memref<4x2x16xbf16, #tpu.memory_space<vmem>>, %arg10: memref<4x2x16xbf16, #tpu.memory_space<vmem>>, %arg11: memref<4x2x64xbf16, #tpu.memory_space<vmem>>, %arg12: memref<4x2x64xbf16, #tpu.memory_space<vmem>>, %arg13: memref<2x2x16xf32, #tpu.memory_space<vmem>>, %arg14: memref<2x2x16xf32, #tpu.memory_space<vmem>>) attributes {dimension_semantics = [#tpu.dimension_semantics<arbitrary>], iteration_bounds = array<i64: 2>, scalar_prefetch = 0 : i64, scratch_operands = 4 : i64, tpu.core_type = #tpu.core_type<tc>, window_params = [{transform_indices = @transform_0, window_bounds = array<i64: 4, 2, 16>}, {transform_indices = @transform_1, window_bounds = array<i64: 4, 2, 16>}, {transform_indices = @transform_2, window_bounds = array<i64: 4, 2, 16>}, {transform_indices = @transform_3, window_bounds = array<i64: 4, 2, 16>}, {pipeline_mode = #tpu.pipeline_mode<synchronous>, transform_indices = @transform_4, window_bounds = array<i64: 2, 16, 64>}, {pipeline_mode = #tpu.pipeline_mode<synchronous>, transform_indices = @transform_5, window_bounds = array<i64: 2, 16, 64>}, {pipeline_mode = #tpu.pipeline_mode<synchronous>, transform_indices = @transform_6, window_bounds = array<i64: 2, 16, 64>}, {pipeline_mode = #tpu.pipeline_mode<synchronous>, transform_indices = @transform_7, window_bounds = array<i64: 2, 1, 64>}, {transform_indices = @transform_8, window_bounds = array<i64: 4, 2, 16>}, {transform_indices = @transform_9, window_bounds = array<i64: 4, 2, 16>}]} {
    %c0_i32 = arith.constant 0 : i32
    %0 = arith.cmpi eq, %arg0, %c0_i32 : i32
    %1 = arith.extui %0 : i1 to i32
    %c0_i32_0 = arith.constant 0 : i32
    %2 = arith.cmpi ne, %1, %c0_i32_0 : i32
    scf.if %2 {
      %cst_70 = arith.constant 0.000000e+00 : f32
      %75 = vector.broadcast %cst_70 : f32 to vector<2x2x16xf32>
      %c0_71 = arith.constant 0 : index
      %c0_72 = arith.constant 0 : index
      %c0_73 = arith.constant 0 : index
      %76 = vector.load %arg13[%c0_71, %c0_72, %c0_73] : memref<2x2x16xf32, #tpu.memory_space<vmem>>, vector<2x2x16xf32>
      tpu.vector_store %arg13[%c0_71, %c0_72, %c0_73], %75 {strides = array<i32>} : memref<2x2x16xf32, #tpu.memory_space<vmem>>, vector<2x2x16xf32>,
      %cst_74 = arith.constant 0.000000e+00 : f32
      %77 = vector.broadcast %cst_74 : f32 to vector<2x2x16xf32>
      %c0_75 = arith.constant 0 : index
      %c0_76 = arith.constant 0 : index
      %c0_77 = arith.constant 0 : index
      %78 = vector.load %arg14[%c0_75, %c0_76, %c0_77] : memref<2x2x16xf32, #tpu.memory_space<vmem>>, vector<2x2x16xf32>
      tpu.vector_store %arg14[%c0_75, %c0_76, %c0_77], %77 {strides = array<i32>} : memref<2x2x16xf32, #tpu.memory_space<vmem>>, vector<2x2x16xf32>,
    } else {
    }
    %c0 = arith.constant 0 : index
    %c0_1 = arith.constant 0 : index
    %c0_2 = arith.constant 0 : index
    %3 = vector.load %arg1[%c0, %c0_1, %c0_2] : memref<4x2x16xf32, #tpu.memory_space<vmem>>, vector<4x2x16xf32>
    %4 = vector.shape_cast %3 : vector<4x2x16xf32> to vector<8x16xf32>
    %5 = arith.truncf %4 : vector<8x16xf32> to vector<8x16xbf16>
    %c0_3 = arith.constant 0 : index
    %c0_4 = arith.constant 0 : index
    %c0_5 = arith.constant 0 : index
    %6 = vector.load %arg2[%c0_3, %c0_4, %c0_5] : memref<4x2x16xf32, #tpu.memory_space<vmem>>, vector<4x2x16xf32>
    %7 = vector.shape_cast %6 : vector<4x2x16xf32> to vector<8x16xf32>
    %8 = arith.truncf %7 : vector<8x16xf32> to vector<8x16xbf16>
    %c0_6 = arith.constant 0 : index
    %c0_7 = arith.constant 0 : index
    %c0_8 = arith.constant 0 : index
    %9 = vector.load %arg5[%c0_6, %c0_7, %c0_8] : memref<2x16x64xf32, #tpu.memory_space<vmem>>, vector<1x16x64xf32>
    %10 = vector.shape_cast %9 : vector<1x16x64xf32> to vector<16x64xf32>
    %11 = arith.truncf %10 : vector<16x64xf32> to vector<16x64xbf16>
    %cst = arith.constant dense<0.000000e+00> : vector<8x64xf32>
    %12 = tpu.matmul %5, %11, %cst {dimension_numbers = #tpu.dot_dimension_numbers<[1], [0], [0], [1], [0, 0, 1, 1], [], []>} : vector<8x16xbf16>, vector<16x64xbf16>, vector<8x64xf32> -> vector<8x64xf32>
    %c0_9 = arith.constant 0 : index
    %c0_10 = arith.constant 0 : index
    %c0_11 = arith.constant 0 : index
    %13 = vector.load %arg6[%c0_9, %c0_10, %c0_11] : memref<2x16x64xf32, #tpu.memory_space<vmem>>, vector<1x16x64xf32>
    %14 = vector.shape_cast %13 : vector<1x16x64xf32> to vector<16x64xf32>
    %15 = arith.truncf %14 : vector<16x64xf32> to vector<16x64xbf16>
    %cst_12 = arith.constant dense<0.000000e+00> : vector<8x64xf32>
    %16 = tpu.matmul %8, %15, %cst_12 {dimension_numbers = #tpu.dot_dimension_numbers<[1], [0], [0], [1], [0, 0, 1, 1], [], []>} : vector<8x16xbf16>, vector<16x64xbf16>, vector<8x64xf32> -> vector<8x64xf32>
    %17 = arith.addf %12, %16 : vector<8x64xf32>
    %c0_13 = arith.constant 0 : index
    %c0_14 = arith.constant 0 : index
    %c0_15 = arith.constant 0 : index
    %18 = vector.load %arg8[%c0_13, %c0_14, %c0_15] : memref<2x1x64xf32, #tpu.memory_space<vmem>>, vector<1x1x64xf32>
    %19 = vector.shape_cast %18 : vector<1x1x64xf32> to vector<1x64xf32>
    %20 = vector.broadcast %19 : vector<1x64xf32> to vector<8x64xf32>
    %21 = arith.addf %17, %20 : vector<8x64xf32>
    %22 = vector.shape_cast %21 : vector<8x64xf32> to vector<4x2x64xf32>
    %23 = arith.truncf %22 : vector<4x2x64xf32> to vector<4x2x64xbf16>
    %c0_16 = arith.constant 0 : index
    %c0_17 = arith.constant 0 : index
    %c0_18 = arith.constant 0 : index
    %24 = vector.load %arg11[%c0_16, %c0_17, %c0_18] : memref<4x2x64xbf16, #tpu.memory_space<vmem>>, vector<4x2x64xbf16>
    tpu.vector_store %arg11[%c0_16, %c0_17, %c0_18], %23 {strides = array<i32>} : memref<4x2x64xbf16, #tpu.memory_space<vmem>>, vector<4x2x64xbf16>,
    %c0_19 = arith.constant 0 : index
    %c0_20 = arith.constant 0 : index
    %c0_21 = arith.constant 0 : index
    %25 = vector.load %arg3[%c0_19, %c0_20, %c0_21] : memref<4x2x16xf32, #tpu.memory_space<vmem>>, vector<4x2x16xf32>
    %26 = vector.shape_cast %25 : vector<4x2x16xf32> to vector<8x16xf32>
    %27 = arith.truncf %26 : vector<8x16xf32> to vector<8x16xbf16>
    %c0_22 = arith.constant 0 : index
    %c0_23 = arith.constant 0 : index
    %c0_24 = arith.constant 0 : index
    %28 = vector.load %arg4[%c0_22, %c0_23, %c0_24] : memref<4x2x16xf32, #tpu.memory_space<vmem>>, vector<4x2x16xf32>
    %29 = vector.shape_cast %28 : vector<4x2x16xf32> to vector<8x16xf32>
    %30 = arith.truncf %29 : vector<8x16xf32> to vector<8x16xbf16>
    %c1 = arith.constant 1 : index
    %c0_25 = arith.constant 0 : index
    %c0_26 = arith.constant 0 : index
    %31 = vector.load %arg5[%c1, %c0_25, %c0_26] : memref<2x16x64xf32, #tpu.memory_space<vmem>>, vector<1x16x64xf32>
    %32 = vector.shape_cast %31 : vector<1x16x64xf32> to vector<16x64xf32>
    %33 = arith.truncf %32 : vector<16x64xf32> to vector<16x64xbf16>
    %cst_27 = arith.constant dense<0.000000e+00> : vector<8x64xf32>
    %34 = tpu.matmul %27, %33, %cst_27 {dimension_numbers = #tpu.dot_dimension_numbers<[1], [0], [0], [1], [0, 0, 1, 1], [], []>} : vector<8x16xbf16>, vector<16x64xbf16>, vector<8x64xf32> -> vector<8x64xf32>
    %c1_28 = arith.constant 1 : index
    %c0_29 = arith.constant 0 : index
    %c0_30 = arith.constant 0 : index
    %35 = vector.load %arg6[%c1_28, %c0_29, %c0_30] : memref<2x16x64xf32, #tpu.memory_space<vmem>>, vector<1x16x64xf32>
    %36 = vector.shape_cast %35 : vector<1x16x64xf32> to vector<16x64xf32>
    %37 = arith.truncf %36 : vector<16x64xf32> to vector<16x64xbf16>
    %cst_31 = arith.constant dense<0.000000e+00> : vector<8x64xf32>
    %38 = tpu.matmul %30, %37, %cst_31 {dimension_numbers = #tpu.dot_dimension_numbers<[1], [0], [0], [1], [0, 0, 1, 1], [], []>} : vector<8x16xbf16>, vector<16x64xbf16>, vector<8x64xf32> -> vector<8x64xf32>
    %39 = arith.addf %34, %38 : vector<8x64xf32>
    %c1_32 = arith.constant 1 : index
    %c0_33 = arith.constant 0 : index
    %c0_34 = arith.constant 0 : index
    %40 = vector.load %arg8[%c1_32, %c0_33, %c0_34] : memref<2x1x64xf32, #tpu.memory_space<vmem>>, vector<1x1x64xf32>
    %41 = vector.shape_cast %40 : vector<1x1x64xf32> to vector<1x64xf32>
    %42 = vector.broadcast %41 : vector<1x64xf32> to vector<8x64xf32>
    %43 = arith.addf %39, %42 : vector<8x64xf32>
    %44 = vector.shape_cast %43 : vector<8x64xf32> to vector<4x2x64xf32>
    %45 = arith.truncf %44 : vector<4x2x64xf32> to vector<4x2x64xbf16>
    %c0_35 = arith.constant 0 : index
    %c0_36 = arith.constant 0 : index
    %c0_37 = arith.constant 0 : index
    %46 = vector.load %arg12[%c0_35, %c0_36, %c0_37] : memref<4x2x64xbf16, #tpu.memory_space<vmem>>, vector<4x2x64xbf16>
    tpu.vector_store %arg12[%c0_35, %c0_36, %c0_37], %45 {strides = array<i32>} : memref<4x2x64xbf16, #tpu.memory_space<vmem>>, vector<4x2x64xbf16>,
    %c0_38 = arith.constant 0 : index
    %c0_39 = arith.constant 0 : index
    %c0_40 = arith.constant 0 : index
    %47 = vector.load %arg7[%c0_38, %c0_39, %c0_40] : memref<2x16x64xf32, #tpu.memory_space<vmem>>, vector<1x16x64xf32>
    %48 = vector.shape_cast %47 : vector<1x16x64xf32> to vector<16x64xf32>
    %49 = arith.truncf %48 : vector<16x64xf32> to vector<16x64xbf16>
    %c1_41 = arith.constant 1 : index
    %c0_42 = arith.constant 0 : index
    %c0_43 = arith.constant 0 : index
    %50 = vector.load %arg7[%c1_41, %c0_42, %c0_43] : memref<2x16x64xf32, #tpu.memory_space<vmem>>, vector<1x16x64xf32>
    %51 = vector.shape_cast %50 : vector<1x16x64xf32> to vector<16x64xf32>
    %52 = arith.truncf %51 : vector<16x64xf32> to vector<16x64xbf16>
    %c0_44 = arith.constant 0 : index
    %c0_45 = arith.constant 0 : index
    %c0_46 = arith.constant 0 : index
    %53 = vector.load %arg13[%c0_44, %c0_45, %c0_46] : memref<2x2x16xf32, #tpu.memory_space<vmem>>, vector<1x2x16xf32>
    %54 = vector.shape_cast %53 : vector<1x2x16xf32> to vector<2x16xf32>
    %c0_47 = arith.constant 0 : index
    %c0_48 = arith.constant 0 : index
    %c0_49 = arith.constant 0 : index
    %55 = vector.load %arg14[%c0_47, %c0_48, %c0_49] : memref<2x2x16xf32, #tpu.memory_space<vmem>>, vector<1x2x16xf32>
    %56 = vector.shape_cast %55 : vector<1x2x16xf32> to vector<2x16xf32>
    %c1_50 = arith.constant 1 : index
    %c0_51 = arith.constant 0 : index
    %c0_52 = arith.constant 0 : index
    %57 = vector.load %arg13[%c1_50, %c0_51, %c0_52] : memref<2x2x16xf32, #tpu.memory_space<vmem>>, vector<1x2x16xf32>
    %58 = vector.shape_cast %57 : vector<1x2x16xf32> to vector<2x16xf32>
    %c1_53 = arith.constant 1 : index
    %c0_54 = arith.constant 0 : index
    %c0_55 = arith.constant 0 : index
    %59 = vector.load %arg14[%c1_53, %c0_54, %c0_55] : memref<2x2x16xf32, #tpu.memory_space<vmem>>, vector<1x2x16xf32>
    %60 = vector.shape_cast %59 : vector<1x2x16xf32> to vector<2x16xf32>
    %c0_i32_56 = arith.constant 0 : i32
    %c4_i32 = arith.constant 4 : i32
    %61 = arith.addi %c0_i32_56, %c4_i32 : i32
    %c1_i32 = arith.constant 1 : i32
    %62:4 = scf.for %arg15 = %c0_i32_56 to %61 step %c1_i32 iter_args(%arg16 = %54, %arg17 = %56, %arg18 = %58, %arg19 = %60) -> (vector<2x16xf32>, vector<2x16xf32>, vector<2x16xf32>, vector<2x16xf32>)  : i32 {
      %c3_i32 = arith.constant 3 : i32
      %75 = arith.subi %c3_i32, %arg15 : i32
      %76 = arith.index_cast %arg15 : i32 to index
      %c0_70 = arith.constant 0 : index
      %c0_71 = arith.constant 0 : index
      %77 = vector.load %arg11[%76, %c0_70, %c0_71] : memref<4x2x64xbf16, #tpu.memory_space<vmem>>, vector<1x2x64xbf16>
      %78 = vector.shape_cast %77 : vector<1x2x64xbf16> to vector<2x64xbf16>
      %79 = arith.extf %78 : vector<2x64xbf16> to vector<2x64xf32>
      %80 = arith.truncf %arg16 : vector<2x16xf32> to vector<2x16xbf16>
      %cst_72 = arith.constant dense<0.000000e+00> : vector<2x64xf32>
      %81 = tpu.matmul %80, %49, %cst_72 {dimension_numbers = #tpu.dot_dimension_numbers<[1], [0], [0], [1], [0, 0, 1, 1], [], []>} : vector<2x16xbf16>, vector<16x64xbf16>, vector<2x64xf32> -> vector<2x64xf32>
      %82 = arith.addf %79, %81 : vector<2x64xf32>
      %83 = arith.index_cast %75 : i32 to index
      %c0_73 = arith.constant 0 : index
      %c0_74 = arith.constant 0 : index
      %84 = vector.load %arg12[%83, %c0_73, %c0_74] : memref<4x2x64xbf16, #tpu.memory_space<vmem>>, vector<1x2x64xbf16>
      %85 = vector.shape_cast %84 : vector<1x2x64xbf16> to vector<2x64xbf16>
      %86 = arith.extf %85 : vector<2x64xbf16> to vector<2x64xf32>
      %87 = arith.truncf %arg18 : vector<2x16xf32> to vector<2x16xbf16>
      %cst_75 = arith.constant dense<0.000000e+00> : vector<2x64xf32>
      %88 = tpu.matmul %87, %52, %cst_75 {dimension_numbers = #tpu.dot_dimension_numbers<[1], [0], [0], [1], [0, 0, 1, 1], [], []>} : vector<2x16xbf16>, vector<16x64xbf16>, vector<2x64xf32> -> vector<2x64xf32>
      %89 = arith.addf %86, %88 : vector<2x64xf32>
      %90 = vector.extract_strided_slice %82 {offsets = [0, 0], sizes = [2, 16], strides = [1, 1]} : vector<2x64xf32> to vector<2x16xf32>
      %91 = arith.negf %90 : vector<2x16xf32>
      %92 = math.exp %91 : vector<2x16xf32>
      %cst_76 = arith.constant 1.000000e+00 : f32
      %93 = vector.broadcast %cst_76 : f32 to vector<2x16xf32>
      %94 = arith.addf %93, %92 : vector<2x16xf32>
      %95 = arith.divf %93, %94 : vector<2x16xf32>
      %96 = vector.extract_strided_slice %82 {offsets = [0, 16], sizes = [2, 16], strides = [1, 1]} : vector<2x64xf32> to vector<2x16xf32>
      %97 = arith.negf %96 : vector<2x16xf32>
      %98 = math.exp %97 : vector<2x16xf32>
      %cst_77 = arith.constant 1.000000e+00 : f32
      %99 = vector.broadcast %cst_77 : f32 to vector<2x16xf32>
      %100 = arith.addf %99, %98 : vector<2x16xf32>
      %101 = arith.divf %99, %100 : vector<2x16xf32>
      %102 = vector.extract_strided_slice %82 {offsets = [0, 32], sizes = [2, 16], strides = [1, 1]} : vector<2x64xf32> to vector<2x16xf32>
      %103 = math.tanh %102 : vector<2x16xf32>
      %104 = vector.extract_strided_slice %82 {offsets = [0, 48], sizes = [2, 16], strides = [1, 1]} : vector<2x64xf32> to vector<2x16xf32>
      %105 = arith.negf %104 : vector<2x16xf32>
      %106 = math.exp %105 : vector<2x16xf32>
      %cst_78 = arith.constant 1.000000e+00 : f32
      %107 = vector.broadcast %cst_78 : f32 to vector<2x16xf32>
      %108 = arith.addf %107, %106 : vector<2x16xf32>
      %109 = arith.divf %107, %108 : vector<2x16xf32>
      %110 = arith.mulf %101, %arg17 : vector<2x16xf32>
      %111 = arith.mulf %95, %103 : vector<2x16xf32>
      %112 = arith.addf %110, %111 : vector<2x16xf32>
      %113 = math.tanh %112 : vector<2x16xf32>
      %114 = arith.mulf %109, %113 : vector<2x16xf32>
      %115 = vector.extract_strided_slice %89 {offsets = [0, 0], sizes = [2, 16], strides = [1, 1]} : vector<2x64xf32> to vector<2x16xf32>
      %116 = arith.negf %115 : vector<2x16xf32>
      %117 = math.exp %116 : vector<2x16xf32>
      %cst_79 = arith.constant 1.000000e+00 : f32
      %118 = vector.broadcast %cst_79 : f32 to vector<2x16xf32>
      %119 = arith.addf %118, %117 : vector<2x16xf32>
      %120 = arith.divf %118, %119 : vector<2x16xf32>
      %121 = vector.extract_strided_slice %89 {offsets = [0, 16], sizes = [2, 16], strides = [1, 1]} : vector<2x64xf32> to vector<2x16xf32>
      %122 = arith.negf %121 : vector<2x16xf32>
      %123 = math.exp %122 : vector<2x16xf32>
      %cst_80 = arith.constant 1.000000e+00 : f32
      %124 = vector.broadcast %cst_80 : f32 to vector<2x16xf32>
      %125 = arith.addf %124, %123 : vector<2x16xf32>
      %126 = arith.divf %124, %125 : vector<2x16xf32>
      %127 = vector.extract_strided_slice %89 {offsets = [0, 32], sizes = [2, 16], strides = [1, 1]} : vector<2x64xf32> to vector<2x16xf32>
      %128 = math.tanh %127 : vector<2x16xf32>
      %129 = vector.extract_strided_slice %89 {offsets = [0, 48], sizes = [2, 16], strides = [1, 1]} : vector<2x64xf32> to vector<2x16xf32>
      %130 = arith.negf %129 : vector<2x16xf32>
      %131 = math.exp %130 : vector<2x16xf32>
      %cst_81 = arith.constant 1.000000e+00 : f32
      %132 = vector.broadcast %cst_81 : f32 to vector<2x16xf32>
      %133 = arith.addf %132, %131 : vector<2x16xf32>
      %134 = arith.divf %132, %133 : vector<2x16xf32>
      %135 = arith.mulf %126, %arg19 : vector<2x16xf32>
      %136 = arith.mulf %120, %128 : vector<2x16xf32>
      %137 = arith.addf %135, %136 : vector<2x16xf32>
      %138 = math.tanh %137 : vector<2x16xf32>
      %139 = arith.mulf %134, %138 : vector<2x16xf32>
      %140 = arith.truncf %114 : vector<2x16xf32> to vector<2x16xbf16>
      %141 = arith.index_cast %arg15 : i32 to index
      %c0_82 = arith.constant 0 : index
      %c0_83 = arith.constant 0 : index
      %142 = vector.load %arg9[%141, %c0_82, %c0_83] : memref<4x2x16xbf16, #tpu.memory_space<vmem>>, vector<1x2x16xbf16>
      %143 = vector.shape_cast %142 : vector<1x2x16xbf16> to vector<2x16xbf16>
      %144 = vector.shape_cast %140 : vector<2x16xbf16> to vector<1x2x16xbf16>
      tpu.vector_store %arg9[%141, %c0_82, %c0_83], %144 {strides = array<i32>} : memref<4x2x16xbf16, #tpu.memory_space<vmem>>, vector<1x2x16xbf16>,
      %145 = arith.truncf %139 : vector<2x16xf32> to vector<2x16xbf16>
      %146 = arith.index_cast %75 : i32 to index
      %c0_84 = arith.constant 0 : index
      %c0_85 = arith.constant 0 : index
      %147 = vector.load %arg10[%146, %c0_84, %c0_85] : memref<4x2x16xbf16, #tpu.memory_space<vmem>>, vector<1x2x16xbf16>
      %148 = vector.shape_cast %147 : vector<1x2x16xbf16> to vector<2x16xbf16>
      %149 = vector.shape_cast %145 : vector<2x16xbf16> to vector<1x2x16xbf16>
      tpu.vector_store %arg10[%146, %c0_84, %c0_85], %149 {strides = array<i32>} : memref<4x2x16xbf16, #tpu.memory_space<vmem>>, vector<1x2x16xbf16>,
      scf.yield %114, %112, %139, %137 : vector<2x16xf32>, vector<2x16xf32>, vector<2x16xf32>, vector<2x16xf32>
    }
    %c4_i32_57 = arith.constant 4 : i32
    %c0_58 = arith.constant 0 : index
    %c0_59 = arith.constant 0 : index
    %c0_60 = arith.constant 0 : index
    %63 = vector.load %arg13[%c0_58, %c0_59, %c0_60] : memref<2x2x16xf32, #tpu.memory_space<vmem>>, vector<1x2x16xf32>
    %64 = vector.shape_cast %63 : vector<1x2x16xf32> to vector<2x16xf32>
    %65 = vector.shape_cast %62#0 : vector<2x16xf32> to vector<1x2x16xf32>
    tpu.vector_store %arg13[%c0_58, %c0_59, %c0_60], %65 {strides = array<i32>} : memref<2x2x16xf32, #tpu.memory_space<vmem>>, vector<1x2x16xf32>,
    %c0_61 = arith.constant 0 : index
    %c0_62 = arith.constant 0 : index
    %c0_63 = arith.constant 0 : index
    %66 = vector.load %arg14[%c0_61, %c0_62, %c0_63] : memref<2x2x16xf32, #tpu.memory_space<vmem>>, vector<1x2x16xf32>
    %67 = vector.shape_cast %66 : vector<1x2x16xf32> to vector<2x16xf32>
    %68 = vector.shape_cast %62#1 : vector<2x16xf32> to vector<1x2x16xf32>
    tpu.vector_store %arg14[%c0_61, %c0_62, %c0_63], %68 {strides = array<i32>} : memref<2x2x16xf32, #tpu.memory_space<vmem>>, vector<1x2x16xf32>,
    %c1_64 = arith.constant 1 : index
    %c0_65 = arith.constant 0 : index
    %c0_66 = arith.constant 0 : index
    %69 = vector.load %arg13[%c1_64, %c0_65, %c0_66] : memref<2x2x16xf32, #tpu.memory_space<vmem>>, vector<1x2x16xf32>
    %70 = vector.shape_cast %69 : vector<1x2x16xf32> to vector<2x16xf32>
    %71 = vector.shape_cast %62#2 : vector<2x16xf32> to vector<1x2x16xf32>
    tpu.vector_store %arg13[%c1_64, %c0_65, %c0_66], %71 {strides = array<i32>} : memref<2x2x16xf32, #tpu.memory_space<vmem>>, vector<1x2x16xf32>,
    %c1_67 = arith.constant 1 : index
    %c0_68 = arith.constant 0 : index
    %c0_69 = arith.constant 0 : index
    %72 = vector.load %arg14[%c1_67, %c0_68, %c0_69] : memref<2x2x16xf32, #tpu.memory_space<vmem>>, vector<1x2x16xf32>
    %73 = vector.shape_cast %72 : vector<1x2x16xf32> to vector<2x16xf32>
    %74 = vector.shape_cast %62#3 : vector<2x16xf32> to vector<1x2x16xf32>
    tpu.vector_store %arg14[%c1_67, %c0_68, %c0_69], %74 {strides = array<i32>} : memref<2x2x16xf32, #tpu.memory_space<vmem>>, vector<1x2x16xf32>,
    return
  }
  func.func @transform_0(%arg0: i32) -> (i32, i32, i32) {
    %c0_i32 = arith.constant 0 : i32
    %c0_i32_0 = arith.constant 0 : i32
    %c0_i32_1 = arith.constant 0 : i32
    return %arg0, %c0_i32, %c0_i32_0 : i32, i32, i32
  }
  func.func @transform_1(%arg0: i32) -> (i32, i32, i32) {
    %c0_i32 = arith.constant 0 : i32
    %c0_i32_0 = arith.constant 0 : i32
    %c0_i32_1 = arith.constant 0 : i32
    return %arg0, %c0_i32, %c0_i32_0 : i32, i32, i32
  }
  func.func @transform_2(%arg0: i32) -> (i32, i32, i32) {
    %c1_i32 = arith.constant 1 : i32
    %0 = arith.subi %c1_i32, %arg0 : i32
    %c0_i32 = arith.constant 0 : i32
    %c0_i32_0 = arith.constant 0 : i32
    %c0_i32_1 = arith.constant 0 : i32
    return %0, %c0_i32, %c0_i32_0 : i32, i32, i32
  }
  func.func @transform_3(%arg0: i32) -> (i32, i32, i32) {
    %c1_i32 = arith.constant 1 : i32
    %0 = arith.subi %c1_i32, %arg0 : i32
    %c0_i32 = arith.constant 0 : i32
    %c0_i32_0 = arith.constant 0 : i32
    %c0_i32_1 = arith.constant 0 : i32
    return %0, %c0_i32, %c0_i32_0 : i32, i32, i32
  }
  func.func @transform_4(%arg0: i32) -> (i32, i32, i32) {
    %c0_i32 = arith.constant 0 : i32
    %c0_i32_0 = arith.constant 0 : i32
    %c0_i32_1 = arith.constant 0 : i32
    %c0_i32_2 = arith.constant 0 : i32
    return %c0_i32, %c0_i32_0, %c0_i32_1 : i32, i32, i32
  }
  func.func @transform_5(%arg0: i32) -> (i32, i32, i32) {
    %c0_i32 = arith.constant 0 : i32
    %c0_i32_0 = arith.constant 0 : i32
    %c0_i32_1 = arith.constant 0 : i32
    %c0_i32_2 = arith.constant 0 : i32
    return %c0_i32, %c0_i32_0, %c0_i32_1 : i32, i32, i32
  }
  func.func @transform_6(%arg0: i32) -> (i32, i32, i32) {
    %c0_i32 = arith.constant 0 : i32
    %c0_i32_0 = arith.constant 0 : i32
    %c0_i32_1 = arith.constant 0 : i32
    %c0_i32_2 = arith.constant 0 : i32
    return %c0_i32, %c0_i32_0, %c0_i32_1 : i32, i32, i32
  }
  func.func @transform_7(%arg0: i32) -> (i32, i32, i32) {
    %c0_i32 = arith.constant 0 : i32
    %c0_i32_0 = arith.constant 0 : i32
    %c0_i32_1 = arith.constant 0 : i32
    %c0_i32_2 = arith.constant 0 : i32
    return %c0_i32, %c0_i32_0, %c0_i32_1 : i32, i32, i32
  }
  func.func @transform_8(%arg0: i32) -> (i32, i32, i32) {
    %c0_i32 = arith.constant 0 : i32
    %c0_i32_0 = arith.constant 0 : i32
    %c0_i32_1 = arith.constant 0 : i32
    return %arg0, %c0_i32, %c0_i32_0 : i32, i32, i32
  }
  func.func @transform_9(%arg0: i32) -> (i32, i32, i32) {
    %c1_i32 = arith.constant 1 : i32
    %0 = arith.subi %c1_i32, %arg0 : i32
    %c0_i32 = arith.constant 0 : i32
    %c0_i32_0 = arith.constant 0 : i32
    %c0_i32_1 = arith.constant 0 : i32
    return %0, %c0_i32, %c0_i32_0 : i32, i32, i32
  }
}

module attributes {stable_mosaic.version = 11 : i64} {
  func.func @_bilstm_kernel(%arg0: i32, %arg1: memref<4x2x16xbf16, #tpu.memory_space<vmem>>, %arg2: memref<4x2x16xbf16, #tpu.memory_space<vmem>>, %arg3: memref<4x2x16xbf16, #tpu.memory_space<vmem>>, %arg4: memref<4x2x16xbf16, #tpu.memory_space<vmem>>, %arg5: memref<2x16x64xf32, #tpu.memory_space<vmem>>, %arg6: memref<2x16x64xf32, #tpu.memory_space<vmem>>, %arg7: memref<2x16x64xf32, #tpu.memory_space<vmem>>, %arg8: memref<2x1x64xf32, #tpu.memory_space<vmem>>, %arg9: memref<4x2x16xf32, #tpu.memory_space<vmem>>, %arg10: memref<4x2x16xf32, #tpu.memory_space<vmem>>, %arg11: memref<4x2x64xbf16, #tpu.memory_space<vmem>>, %arg12: memref<4x2x64xbf16, #tpu.memory_space<vmem>>, %arg13: memref<2x2x16xf32, #tpu.memory_space<vmem>>, %arg14: memref<2x2x16xf32, #tpu.memory_space<vmem>>) attributes {dimension_semantics = [#tpu.dimension_semantics<arbitrary>], iteration_bounds = array<i64: 2>, scalar_prefetch = 0 : i64, scratch_operands = 4 : i64, tpu.core_type = #tpu.core_type<tc>, window_params = [{transform_indices = @transform_0, window_bounds = array<i64: 4, 2, 16>}, {transform_indices = @transform_1, window_bounds = array<i64: 4, 2, 16>}, {transform_indices = @transform_2, window_bounds = array<i64: 4, 2, 16>}, {transform_indices = @transform_3, window_bounds = array<i64: 4, 2, 16>}, {pipeline_mode = #tpu.pipeline_mode<synchronous>, transform_indices = @transform_4, window_bounds = array<i64: 2, 16, 64>}, {pipeline_mode = #tpu.pipeline_mode<synchronous>, transform_indices = @transform_5, window_bounds = array<i64: 2, 16, 64>}, {pipeline_mode = #tpu.pipeline_mode<synchronous>, transform_indices = @transform_6, window_bounds = array<i64: 2, 16, 64>}, {pipeline_mode = #tpu.pipeline_mode<synchronous>, transform_indices = @transform_7, window_bounds = array<i64: 2, 1, 64>}, {transform_indices = @transform_8, window_bounds = array<i64: 4, 2, 16>}, {transform_indices = @transform_9, window_bounds = array<i64: 4, 2, 16>}]} {
    %c0_i32 = arith.constant 0 : i32
    %0 = arith.cmpi eq, %arg0, %c0_i32 : i32
    %1 = arith.extui %0 : i1 to i32
    %c0_i32_0 = arith.constant 0 : i32
    %2 = arith.cmpi ne, %1, %c0_i32_0 : i32
    scf.if %2 {
      %cst_70 = arith.constant 0.000000e+00 : f32
      %71 = vector.broadcast %cst_70 : f32 to vector<2x2x16xf32>
      %c0_71 = arith.constant 0 : index
      %c0_72 = arith.constant 0 : index
      %c0_73 = arith.constant 0 : index
      %72 = vector.load %arg13[%c0_71, %c0_72, %c0_73] : memref<2x2x16xf32, #tpu.memory_space<vmem>>, vector<2x2x16xf32>
      tpu.vector_store %arg13[%c0_71, %c0_72, %c0_73], %71 {strides = array<i32>} : memref<2x2x16xf32, #tpu.memory_space<vmem>>, vector<2x2x16xf32>,
      %cst_74 = arith.constant 0.000000e+00 : f32
      %73 = vector.broadcast %cst_74 : f32 to vector<2x2x16xf32>
      %c0_75 = arith.constant 0 : index
      %c0_76 = arith.constant 0 : index
      %c0_77 = arith.constant 0 : index
      %74 = vector.load %arg14[%c0_75, %c0_76, %c0_77] : memref<2x2x16xf32, #tpu.memory_space<vmem>>, vector<2x2x16xf32>
      tpu.vector_store %arg14[%c0_75, %c0_76, %c0_77], %73 {strides = array<i32>} : memref<2x2x16xf32, #tpu.memory_space<vmem>>, vector<2x2x16xf32>,
    } else {
    }
    %c0 = arith.constant 0 : index
    %c0_1 = arith.constant 0 : index
    %c0_2 = arith.constant 0 : index
    %3 = vector.load %arg1[%c0, %c0_1, %c0_2] : memref<4x2x16xbf16, #tpu.memory_space<vmem>>, vector<4x2x16xbf16>
    %4 = vector.shape_cast %3 : vector<4x2x16xbf16> to vector<8x16xbf16>
    %c0_3 = arith.constant 0 : index
    %c0_4 = arith.constant 0 : index
    %c0_5 = arith.constant 0 : index
    %5 = vector.load %arg2[%c0_3, %c0_4, %c0_5] : memref<4x2x16xbf16, #tpu.memory_space<vmem>>, vector<4x2x16xbf16>
    %6 = vector.shape_cast %5 : vector<4x2x16xbf16> to vector<8x16xbf16>
    %c0_6 = arith.constant 0 : index
    %c0_7 = arith.constant 0 : index
    %c0_8 = arith.constant 0 : index
    %7 = vector.load %arg5[%c0_6, %c0_7, %c0_8] : memref<2x16x64xf32, #tpu.memory_space<vmem>>, vector<1x16x64xf32>
    %8 = vector.shape_cast %7 : vector<1x16x64xf32> to vector<16x64xf32>
    %9 = arith.truncf %8 : vector<16x64xf32> to vector<16x64xbf16>
    %cst = arith.constant dense<0.000000e+00> : vector<8x64xf32>
    %10 = tpu.matmul %4, %9, %cst {dimension_numbers = #tpu.dot_dimension_numbers<[1], [0], [0], [1], [0, 0, 1, 1], [], []>} : vector<8x16xbf16>, vector<16x64xbf16>, vector<8x64xf32> -> vector<8x64xf32>
    %c0_9 = arith.constant 0 : index
    %c0_10 = arith.constant 0 : index
    %c0_11 = arith.constant 0 : index
    %11 = vector.load %arg6[%c0_9, %c0_10, %c0_11] : memref<2x16x64xf32, #tpu.memory_space<vmem>>, vector<1x16x64xf32>
    %12 = vector.shape_cast %11 : vector<1x16x64xf32> to vector<16x64xf32>
    %13 = arith.truncf %12 : vector<16x64xf32> to vector<16x64xbf16>
    %cst_12 = arith.constant dense<0.000000e+00> : vector<8x64xf32>
    %14 = tpu.matmul %6, %13, %cst_12 {dimension_numbers = #tpu.dot_dimension_numbers<[1], [0], [0], [1], [0, 0, 1, 1], [], []>} : vector<8x16xbf16>, vector<16x64xbf16>, vector<8x64xf32> -> vector<8x64xf32>
    %15 = arith.addf %10, %14 : vector<8x64xf32>
    %c0_13 = arith.constant 0 : index
    %c0_14 = arith.constant 0 : index
    %c0_15 = arith.constant 0 : index
    %16 = vector.load %arg8[%c0_13, %c0_14, %c0_15] : memref<2x1x64xf32, #tpu.memory_space<vmem>>, vector<1x1x64xf32>
    %17 = vector.shape_cast %16 : vector<1x1x64xf32> to vector<1x64xf32>
    %18 = vector.broadcast %17 : vector<1x64xf32> to vector<8x64xf32>
    %19 = arith.addf %15, %18 : vector<8x64xf32>
    %20 = vector.shape_cast %19 : vector<8x64xf32> to vector<4x2x64xf32>
    %21 = arith.truncf %20 : vector<4x2x64xf32> to vector<4x2x64xbf16>
    %c0_16 = arith.constant 0 : index
    %c0_17 = arith.constant 0 : index
    %c0_18 = arith.constant 0 : index
    %22 = vector.load %arg11[%c0_16, %c0_17, %c0_18] : memref<4x2x64xbf16, #tpu.memory_space<vmem>>, vector<4x2x64xbf16>
    tpu.vector_store %arg11[%c0_16, %c0_17, %c0_18], %21 {strides = array<i32>} : memref<4x2x64xbf16, #tpu.memory_space<vmem>>, vector<4x2x64xbf16>,
    %c0_19 = arith.constant 0 : index
    %c0_20 = arith.constant 0 : index
    %c0_21 = arith.constant 0 : index
    %23 = vector.load %arg3[%c0_19, %c0_20, %c0_21] : memref<4x2x16xbf16, #tpu.memory_space<vmem>>, vector<4x2x16xbf16>
    %24 = vector.shape_cast %23 : vector<4x2x16xbf16> to vector<8x16xbf16>
    %c0_22 = arith.constant 0 : index
    %c0_23 = arith.constant 0 : index
    %c0_24 = arith.constant 0 : index
    %25 = vector.load %arg4[%c0_22, %c0_23, %c0_24] : memref<4x2x16xbf16, #tpu.memory_space<vmem>>, vector<4x2x16xbf16>
    %26 = vector.shape_cast %25 : vector<4x2x16xbf16> to vector<8x16xbf16>
    %c1 = arith.constant 1 : index
    %c0_25 = arith.constant 0 : index
    %c0_26 = arith.constant 0 : index
    %27 = vector.load %arg5[%c1, %c0_25, %c0_26] : memref<2x16x64xf32, #tpu.memory_space<vmem>>, vector<1x16x64xf32>
    %28 = vector.shape_cast %27 : vector<1x16x64xf32> to vector<16x64xf32>
    %29 = arith.truncf %28 : vector<16x64xf32> to vector<16x64xbf16>
    %cst_27 = arith.constant dense<0.000000e+00> : vector<8x64xf32>
    %30 = tpu.matmul %24, %29, %cst_27 {dimension_numbers = #tpu.dot_dimension_numbers<[1], [0], [0], [1], [0, 0, 1, 1], [], []>} : vector<8x16xbf16>, vector<16x64xbf16>, vector<8x64xf32> -> vector<8x64xf32>
    %c1_28 = arith.constant 1 : index
    %c0_29 = arith.constant 0 : index
    %c0_30 = arith.constant 0 : index
    %31 = vector.load %arg6[%c1_28, %c0_29, %c0_30] : memref<2x16x64xf32, #tpu.memory_space<vmem>>, vector<1x16x64xf32>
    %32 = vector.shape_cast %31 : vector<1x16x64xf32> to vector<16x64xf32>
    %33 = arith.truncf %32 : vector<16x64xf32> to vector<16x64xbf16>
    %cst_31 = arith.constant dense<0.000000e+00> : vector<8x64xf32>
    %34 = tpu.matmul %26, %33, %cst_31 {dimension_numbers = #tpu.dot_dimension_numbers<[1], [0], [0], [1], [0, 0, 1, 1], [], []>} : vector<8x16xbf16>, vector<16x64xbf16>, vector<8x64xf32> -> vector<8x64xf32>
    %35 = arith.addf %30, %34 : vector<8x64xf32>
    %c1_32 = arith.constant 1 : index
    %c0_33 = arith.constant 0 : index
    %c0_34 = arith.constant 0 : index
    %36 = vector.load %arg8[%c1_32, %c0_33, %c0_34] : memref<2x1x64xf32, #tpu.memory_space<vmem>>, vector<1x1x64xf32>
    %37 = vector.shape_cast %36 : vector<1x1x64xf32> to vector<1x64xf32>
    %38 = vector.broadcast %37 : vector<1x64xf32> to vector<8x64xf32>
    %39 = arith.addf %35, %38 : vector<8x64xf32>
    %40 = vector.shape_cast %39 : vector<8x64xf32> to vector<4x2x64xf32>
    %41 = arith.truncf %40 : vector<4x2x64xf32> to vector<4x2x64xbf16>
    %c0_35 = arith.constant 0 : index
    %c0_36 = arith.constant 0 : index
    %c0_37 = arith.constant 0 : index
    %42 = vector.load %arg12[%c0_35, %c0_36, %c0_37] : memref<4x2x64xbf16, #tpu.memory_space<vmem>>, vector<4x2x64xbf16>
    tpu.vector_store %arg12[%c0_35, %c0_36, %c0_37], %41 {strides = array<i32>} : memref<4x2x64xbf16, #tpu.memory_space<vmem>>, vector<4x2x64xbf16>,
    %c0_38 = arith.constant 0 : index
    %c0_39 = arith.constant 0 : index
    %c0_40 = arith.constant 0 : index
    %43 = vector.load %arg7[%c0_38, %c0_39, %c0_40] : memref<2x16x64xf32, #tpu.memory_space<vmem>>, vector<1x16x64xf32>
    %44 = vector.shape_cast %43 : vector<1x16x64xf32> to vector<16x64xf32>
    %45 = arith.truncf %44 : vector<16x64xf32> to vector<16x64xbf16>
    %c1_41 = arith.constant 1 : index
    %c0_42 = arith.constant 0 : index
    %c0_43 = arith.constant 0 : index
    %46 = vector.load %arg7[%c1_41, %c0_42, %c0_43] : memref<2x16x64xf32, #tpu.memory_space<vmem>>, vector<1x16x64xf32>
    %47 = vector.shape_cast %46 : vector<1x16x64xf32> to vector<16x64xf32>
    %48 = arith.truncf %47 : vector<16x64xf32> to vector<16x64xbf16>
    %c0_44 = arith.constant 0 : index
    %c0_45 = arith.constant 0 : index
    %c0_46 = arith.constant 0 : index
    %49 = vector.load %arg13[%c0_44, %c0_45, %c0_46] : memref<2x2x16xf32, #tpu.memory_space<vmem>>, vector<1x2x16xf32>
    %50 = vector.shape_cast %49 : vector<1x2x16xf32> to vector<2x16xf32>
    %c0_47 = arith.constant 0 : index
    %c0_48 = arith.constant 0 : index
    %c0_49 = arith.constant 0 : index
    %51 = vector.load %arg14[%c0_47, %c0_48, %c0_49] : memref<2x2x16xf32, #tpu.memory_space<vmem>>, vector<1x2x16xf32>
    %52 = vector.shape_cast %51 : vector<1x2x16xf32> to vector<2x16xf32>
    %c1_50 = arith.constant 1 : index
    %c0_51 = arith.constant 0 : index
    %c0_52 = arith.constant 0 : index
    %53 = vector.load %arg13[%c1_50, %c0_51, %c0_52] : memref<2x2x16xf32, #tpu.memory_space<vmem>>, vector<1x2x16xf32>
    %54 = vector.shape_cast %53 : vector<1x2x16xf32> to vector<2x16xf32>
    %c1_53 = arith.constant 1 : index
    %c0_54 = arith.constant 0 : index
    %c0_55 = arith.constant 0 : index
    %55 = vector.load %arg14[%c1_53, %c0_54, %c0_55] : memref<2x2x16xf32, #tpu.memory_space<vmem>>, vector<1x2x16xf32>
    %56 = vector.shape_cast %55 : vector<1x2x16xf32> to vector<2x16xf32>
    %c0_i32_56 = arith.constant 0 : i32
    %c4_i32 = arith.constant 4 : i32
    %57 = arith.addi %c0_i32_56, %c4_i32 : i32
    %c1_i32 = arith.constant 1 : i32
    %58:4 = scf.for %arg15 = %c0_i32_56 to %57 step %c1_i32 iter_args(%arg16 = %50, %arg17 = %52, %arg18 = %54, %arg19 = %56) -> (vector<2x16xf32>, vector<2x16xf32>, vector<2x16xf32>, vector<2x16xf32>)  : i32 {
      %c3_i32 = arith.constant 3 : i32
      %71 = arith.subi %c3_i32, %arg15 : i32
      %72 = arith.index_cast %arg15 : i32 to index
      %c0_70 = arith.constant 0 : index
      %c0_71 = arith.constant 0 : index
      %73 = vector.load %arg11[%72, %c0_70, %c0_71] : memref<4x2x64xbf16, #tpu.memory_space<vmem>>, vector<1x2x64xbf16>
      %74 = vector.shape_cast %73 : vector<1x2x64xbf16> to vector<2x64xbf16>
      %75 = arith.extf %74 : vector<2x64xbf16> to vector<2x64xf32>
      %76 = arith.truncf %arg16 : vector<2x16xf32> to vector<2x16xbf16>
      %cst_72 = arith.constant dense<0.000000e+00> : vector<2x64xf32>
      %77 = tpu.matmul %76, %45, %cst_72 {dimension_numbers = #tpu.dot_dimension_numbers<[1], [0], [0], [1], [0, 0, 1, 1], [], []>} : vector<2x16xbf16>, vector<16x64xbf16>, vector<2x64xf32> -> vector<2x64xf32>
      %78 = arith.addf %75, %77 : vector<2x64xf32>
      %79 = arith.index_cast %71 : i32 to index
      %c0_73 = arith.constant 0 : index
      %c0_74 = arith.constant 0 : index
      %80 = vector.load %arg12[%79, %c0_73, %c0_74] : memref<4x2x64xbf16, #tpu.memory_space<vmem>>, vector<1x2x64xbf16>
      %81 = vector.shape_cast %80 : vector<1x2x64xbf16> to vector<2x64xbf16>
      %82 = arith.extf %81 : vector<2x64xbf16> to vector<2x64xf32>
      %83 = arith.truncf %arg18 : vector<2x16xf32> to vector<2x16xbf16>
      %cst_75 = arith.constant dense<0.000000e+00> : vector<2x64xf32>
      %84 = tpu.matmul %83, %48, %cst_75 {dimension_numbers = #tpu.dot_dimension_numbers<[1], [0], [0], [1], [0, 0, 1, 1], [], []>} : vector<2x16xbf16>, vector<16x64xbf16>, vector<2x64xf32> -> vector<2x64xf32>
      %85 = arith.addf %82, %84 : vector<2x64xf32>
      %86 = vector.extract_strided_slice %78 {offsets = [0, 0], sizes = [2, 16], strides = [1, 1]} : vector<2x64xf32> to vector<2x16xf32>
      %87 = arith.negf %86 : vector<2x16xf32>
      %88 = math.exp %87 : vector<2x16xf32>
      %cst_76 = arith.constant 1.000000e+00 : f32
      %89 = vector.broadcast %cst_76 : f32 to vector<2x16xf32>
      %90 = arith.addf %89, %88 : vector<2x16xf32>
      %91 = arith.divf %89, %90 : vector<2x16xf32>
      %92 = vector.extract_strided_slice %78 {offsets = [0, 16], sizes = [2, 16], strides = [1, 1]} : vector<2x64xf32> to vector<2x16xf32>
      %93 = arith.negf %92 : vector<2x16xf32>
      %94 = math.exp %93 : vector<2x16xf32>
      %cst_77 = arith.constant 1.000000e+00 : f32
      %95 = vector.broadcast %cst_77 : f32 to vector<2x16xf32>
      %96 = arith.addf %95, %94 : vector<2x16xf32>
      %97 = arith.divf %95, %96 : vector<2x16xf32>
      %98 = vector.extract_strided_slice %78 {offsets = [0, 32], sizes = [2, 16], strides = [1, 1]} : vector<2x64xf32> to vector<2x16xf32>
      %99 = math.tanh %98 : vector<2x16xf32>
      %100 = vector.extract_strided_slice %78 {offsets = [0, 48], sizes = [2, 16], strides = [1, 1]} : vector<2x64xf32> to vector<2x16xf32>
      %101 = arith.negf %100 : vector<2x16xf32>
      %102 = math.exp %101 : vector<2x16xf32>
      %cst_78 = arith.constant 1.000000e+00 : f32
      %103 = vector.broadcast %cst_78 : f32 to vector<2x16xf32>
      %104 = arith.addf %103, %102 : vector<2x16xf32>
      %105 = arith.divf %103, %104 : vector<2x16xf32>
      %106 = arith.mulf %97, %arg17 : vector<2x16xf32>
      %107 = arith.mulf %91, %99 : vector<2x16xf32>
      %108 = arith.addf %106, %107 : vector<2x16xf32>
      %109 = math.tanh %108 : vector<2x16xf32>
      %110 = arith.mulf %105, %109 : vector<2x16xf32>
      %111 = vector.extract_strided_slice %85 {offsets = [0, 0], sizes = [2, 16], strides = [1, 1]} : vector<2x64xf32> to vector<2x16xf32>
      %112 = arith.negf %111 : vector<2x16xf32>
      %113 = math.exp %112 : vector<2x16xf32>
      %cst_79 = arith.constant 1.000000e+00 : f32
      %114 = vector.broadcast %cst_79 : f32 to vector<2x16xf32>
      %115 = arith.addf %114, %113 : vector<2x16xf32>
      %116 = arith.divf %114, %115 : vector<2x16xf32>
      %117 = vector.extract_strided_slice %85 {offsets = [0, 16], sizes = [2, 16], strides = [1, 1]} : vector<2x64xf32> to vector<2x16xf32>
      %118 = arith.negf %117 : vector<2x16xf32>
      %119 = math.exp %118 : vector<2x16xf32>
      %cst_80 = arith.constant 1.000000e+00 : f32
      %120 = vector.broadcast %cst_80 : f32 to vector<2x16xf32>
      %121 = arith.addf %120, %119 : vector<2x16xf32>
      %122 = arith.divf %120, %121 : vector<2x16xf32>
      %123 = vector.extract_strided_slice %85 {offsets = [0, 32], sizes = [2, 16], strides = [1, 1]} : vector<2x64xf32> to vector<2x16xf32>
      %124 = math.tanh %123 : vector<2x16xf32>
      %125 = vector.extract_strided_slice %85 {offsets = [0, 48], sizes = [2, 16], strides = [1, 1]} : vector<2x64xf32> to vector<2x16xf32>
      %126 = arith.negf %125 : vector<2x16xf32>
      %127 = math.exp %126 : vector<2x16xf32>
      %cst_81 = arith.constant 1.000000e+00 : f32
      %128 = vector.broadcast %cst_81 : f32 to vector<2x16xf32>
      %129 = arith.addf %128, %127 : vector<2x16xf32>
      %130 = arith.divf %128, %129 : vector<2x16xf32>
      %131 = arith.mulf %122, %arg19 : vector<2x16xf32>
      %132 = arith.mulf %116, %124 : vector<2x16xf32>
      %133 = arith.addf %131, %132 : vector<2x16xf32>
      %134 = math.tanh %133 : vector<2x16xf32>
      %135 = arith.mulf %130, %134 : vector<2x16xf32>
      %136 = arith.index_cast %arg15 : i32 to index
      %c0_82 = arith.constant 0 : index
      %c0_83 = arith.constant 0 : index
      %137 = vector.load %arg9[%136, %c0_82, %c0_83] : memref<4x2x16xf32, #tpu.memory_space<vmem>>, vector<1x2x16xf32>
      %138 = vector.shape_cast %137 : vector<1x2x16xf32> to vector<2x16xf32>
      %139 = vector.shape_cast %110 : vector<2x16xf32> to vector<1x2x16xf32>
      tpu.vector_store %arg9[%136, %c0_82, %c0_83], %139 {strides = array<i32>} : memref<4x2x16xf32, #tpu.memory_space<vmem>>, vector<1x2x16xf32>,
      %140 = arith.index_cast %71 : i32 to index
      %c0_84 = arith.constant 0 : index
      %c0_85 = arith.constant 0 : index
      %141 = vector.load %arg10[%140, %c0_84, %c0_85] : memref<4x2x16xf32, #tpu.memory_space<vmem>>, vector<1x2x16xf32>
      %142 = vector.shape_cast %141 : vector<1x2x16xf32> to vector<2x16xf32>
      %143 = vector.shape_cast %135 : vector<2x16xf32> to vector<1x2x16xf32>
      tpu.vector_store %arg10[%140, %c0_84, %c0_85], %143 {strides = array<i32>} : memref<4x2x16xf32, #tpu.memory_space<vmem>>, vector<1x2x16xf32>,
      scf.yield %110, %108, %135, %133 : vector<2x16xf32>, vector<2x16xf32>, vector<2x16xf32>, vector<2x16xf32>
    }
    %c4_i32_57 = arith.constant 4 : i32
    %c0_58 = arith.constant 0 : index
    %c0_59 = arith.constant 0 : index
    %c0_60 = arith.constant 0 : index
    %59 = vector.load %arg13[%c0_58, %c0_59, %c0_60] : memref<2x2x16xf32, #tpu.memory_space<vmem>>, vector<1x2x16xf32>
    %60 = vector.shape_cast %59 : vector<1x2x16xf32> to vector<2x16xf32>
    %61 = vector.shape_cast %58#0 : vector<2x16xf32> to vector<1x2x16xf32>
    tpu.vector_store %arg13[%c0_58, %c0_59, %c0_60], %61 {strides = array<i32>} : memref<2x2x16xf32, #tpu.memory_space<vmem>>, vector<1x2x16xf32>,
    %c0_61 = arith.constant 0 : index
    %c0_62 = arith.constant 0 : index
    %c0_63 = arith.constant 0 : index
    %62 = vector.load %arg14[%c0_61, %c0_62, %c0_63] : memref<2x2x16xf32, #tpu.memory_space<vmem>>, vector<1x2x16xf32>
    %63 = vector.shape_cast %62 : vector<1x2x16xf32> to vector<2x16xf32>
    %64 = vector.shape_cast %58#1 : vector<2x16xf32> to vector<1x2x16xf32>
    tpu.vector_store %arg14[%c0_61, %c0_62, %c0_63], %64 {strides = array<i32>} : memref<2x2x16xf32, #tpu.memory_space<vmem>>, vector<1x2x16xf32>,
    %c1_64 = arith.constant 1 : index
    %c0_65 = arith.constant 0 : index
    %c0_66 = arith.constant 0 : index
    %65 = vector.load %arg13[%c1_64, %c0_65, %c0_66] : memref<2x2x16xf32, #tpu.memory_space<vmem>>, vector<1x2x16xf32>
    %66 = vector.shape_cast %65 : vector<1x2x16xf32> to vector<2x16xf32>
    %67 = vector.shape_cast %58#2 : vector<2x16xf32> to vector<1x2x16xf32>
    tpu.vector_store %arg13[%c1_64, %c0_65, %c0_66], %67 {strides = array<i32>} : memref<2x2x16xf32, #tpu.memory_space<vmem>>, vector<1x2x16xf32>,
    %c1_67 = arith.constant 1 : index
    %c0_68 = arith.constant 0 : index
    %c0_69 = arith.constant 0 : index
    %68 = vector.load %arg14[%c1_67, %c0_68, %c0_69] : memref<2x2x16xf32, #tpu.memory_space<vmem>>, vector<1x2x16xf32>
    %69 = vector.shape_cast %68 : vector<1x2x16xf32> to vector<2x16xf32>
    %70 = vector.shape_cast %58#3 : vector<2x16xf32> to vector<1x2x16xf32>
    tpu.vector_store %arg14[%c1_67, %c0_68, %c0_69], %70 {strides = array<i32>} : memref<2x2x16xf32, #tpu.memory_space<vmem>>, vector<1x2x16xf32>,
    return
  }
  func.func @transform_0(%arg0: i32) -> (i32, i32, i32) {
    %c0_i32 = arith.constant 0 : i32
    %c0_i32_0 = arith.constant 0 : i32
    %c0_i32_1 = arith.constant 0 : i32
    return %arg0, %c0_i32, %c0_i32_0 : i32, i32, i32
  }
  func.func @transform_1(%arg0: i32) -> (i32, i32, i32) {
    %c0_i32 = arith.constant 0 : i32
    %c0_i32_0 = arith.constant 0 : i32
    %c0_i32_1 = arith.constant 0 : i32
    return %arg0, %c0_i32, %c0_i32_0 : i32, i32, i32
  }
  func.func @transform_2(%arg0: i32) -> (i32, i32, i32) {
    %c1_i32 = arith.constant 1 : i32
    %0 = arith.subi %c1_i32, %arg0 : i32
    %c0_i32 = arith.constant 0 : i32
    %c0_i32_0 = arith.constant 0 : i32
    %c0_i32_1 = arith.constant 0 : i32
    return %0, %c0_i32, %c0_i32_0 : i32, i32, i32
  }
  func.func @transform_3(%arg0: i32) -> (i32, i32, i32) {
    %c1_i32 = arith.constant 1 : i32
    %0 = arith.subi %c1_i32, %arg0 : i32
    %c0_i32 = arith.constant 0 : i32
    %c0_i32_0 = arith.constant 0 : i32
    %c0_i32_1 = arith.constant 0 : i32
    return %0, %c0_i32, %c0_i32_0 : i32, i32, i32
  }
  func.func @transform_4(%arg0: i32) -> (i32, i32, i32) {
    %c0_i32 = arith.constant 0 : i32
    %c0_i32_0 = arith.constant 0 : i32
    %c0_i32_1 = arith.constant 0 : i32
    %c0_i32_2 = arith.constant 0 : i32
    return %c0_i32, %c0_i32_0, %c0_i32_1 : i32, i32, i32
  }
  func.func @transform_5(%arg0: i32) -> (i32, i32, i32) {
    %c0_i32 = arith.constant 0 : i32
    %c0_i32_0 = arith.constant 0 : i32
    %c0_i32_1 = arith.constant 0 : i32
    %c0_i32_2 = arith.constant 0 : i32
    return %c0_i32, %c0_i32_0, %c0_i32_1 : i32, i32, i32
  }
  func.func @transform_6(%arg0: i32) -> (i32, i32, i32) {
    %c0_i32 = arith.constant 0 : i32
    %c0_i32_0 = arith.constant 0 : i32
    %c0_i32_1 = arith.constant 0 : i32
    %c0_i32_2 = arith.constant 0 : i32
    return %c0_i32, %c0_i32_0, %c0_i32_1 : i32, i32, i32
  }
  func.func @transform_7(%arg0: i32) -> (i32, i32, i32) {
    %c0_i32 = arith.constant 0 : i32
    %c0_i32_0 = arith.constant 0 : i32
    %c0_i32_1 = arith.constant 0 : i32
    %c0_i32_2 = arith.constant 0 : i32
    return %c0_i32, %c0_i32_0, %c0_i32_1 : i32, i32, i32
  }
  func.func @transform_8(%arg0: i32) -> (i32, i32, i32) {
    %c0_i32 = arith.constant 0 : i32
    %c0_i32_0 = arith.constant 0 : i32
    %c0_i32_1 = arith.constant 0 : i32
    return %arg0, %c0_i32, %c0_i32_0 : i32, i32, i32
  }
  func.func @transform_9(%arg0: i32) -> (i32, i32, i32) {
    %c1_i32 = arith.constant 1 : i32
    %0 = arith.subi %c1_i32, %arg0 : i32
    %c0_i32 = arith.constant 0 : i32
    %c0_i32_0 = arith.constant 0 : i32
    %c0_i32_1 = arith.constant 0 : i32
    return %0, %c0_i32, %c0_i32_0 : i32, i32, i32
  }
}

module attributes {stable_mosaic.version = 11 : i64} {
  func.func @_epilogue_kernel(%arg0: i32, %arg1: memref<2x8x32xf32, #tpu.memory_space<vmem>>, %arg2: memref<2x8x1xf32, #tpu.memory_space<vmem>>, %arg3: memref<32x96xf32, #tpu.memory_space<vmem>>, %arg4: memref<32x96xf32, #tpu.memory_space<vmem>>, %arg5: memref<1x32xf32, #tpu.memory_space<vmem>>, %arg6: memref<2x32xf32, #tpu.memory_space<vmem>>, %arg7: memref<2x1x1xf32, #tpu.memory_space<vmem>>, %arg8: memref<2x2x8xf32, #tpu.memory_space<vmem>>, %arg9: memref<2x1x32xf32, #tpu.memory_space<vmem>>) attributes {dimension_semantics = [#tpu.dimension_semantics<parallel>], iteration_bounds = array<i64: 1>, scalar_prefetch = 0 : i64, scratch_operands = 0 : i64, tpu.core_type = #tpu.core_type<tc>, window_params = [{transform_indices = @transform_0, window_bounds = array<i64: 2, 8, 32>}, {transform_indices = @transform_1, window_bounds = array<i64: 2, 8, 1>}, {pipeline_mode = #tpu.pipeline_mode<synchronous>, transform_indices = @transform_2, window_bounds = array<i64: 32, 96>}, {pipeline_mode = #tpu.pipeline_mode<synchronous>, transform_indices = @transform_3, window_bounds = array<i64: 32, 96>}, {pipeline_mode = #tpu.pipeline_mode<synchronous>, transform_indices = @transform_4, window_bounds = array<i64: 1, 32>}, {pipeline_mode = #tpu.pipeline_mode<synchronous>, transform_indices = @transform_5, window_bounds = array<i64: 2, 32>}, {pipeline_mode = #tpu.pipeline_mode<synchronous>, transform_indices = @transform_6, window_bounds = array<i64: 2, 1, 1>}, {transform_indices = @transform_7, window_bounds = array<i64: 2, 2, 8>}, {transform_indices = @transform_8, window_bounds = array<i64: 2, 1, 32>}]} {
    %c0 = arith.constant 0 : index
    %c0_0 = arith.constant 0 : index
    %c0_1 = arith.constant 0 : index
    %0 = vector.load %arg1[%c0, %c0_0, %c0_1] : memref<2x8x32xf32, #tpu.memory_space<vmem>>, vector<2x8x32xf32>
    %c0_2 = arith.constant 0 : index
    %c0_3 = arith.constant 0 : index
    %c0_4 = arith.constant 0 : index
    %1 = vector.load %arg2[%c0_2, %c0_3, %c0_4] : memref<2x8x1xf32, #tpu.memory_space<vmem>>, vector<2x8x1xf32>
    %cst = arith.constant 1.000000e+00 : f32
    %2 = vector.broadcast %cst : f32 to vector<2x8x1xf32>
    %3 = arith.subf %2, %1 : vector<2x8x1xf32>
    %cst_5 = arith.constant 1.000000e+10 : f32
    %4 = vector.broadcast %cst_5 : f32 to vector<2x8x1xf32>
    %5 = arith.mulf %3, %4 : vector<2x8x1xf32>
    %6 = vector.broadcast %5 : vector<2x8x1xf32> to vector<2x8x32xf32>
    %7 = arith.subf %0, %6 : vector<2x8x32xf32>
    %cst_6 = arith.constant dense<0xFF800000> : vector<2x32xf32>
    %8 = vector.multi_reduction <maximumf>, %7, %cst_6 [1] : vector<2x8x32xf32> to vector<2x32xf32>
    %9 = vector.shape_cast %8 : vector<2x32xf32> to vector<2x1x32xf32>
    %c0_7 = arith.constant 0 : index
    %c0_8 = arith.constant 0 : index
    %c0_9 = arith.constant 0 : index
    %10 = vector.load %arg9[%c0_7, %c0_8, %c0_9] : memref<2x1x32xf32, #tpu.memory_space<vmem>>, vector<2x1x32xf32>
    tpu.vector_store %arg9[%c0_7, %c0_8, %c0_9], %9 {strides = array<i32>} : memref<2x1x32xf32, #tpu.memory_space<vmem>>, vector<2x1x32xf32>,
    %11 = vector.shape_cast %0 : vector<2x8x32xf32> to vector<16x32xf32>
    %12 = arith.truncf %11 : vector<16x32xf32> to vector<16x32xbf16>
    %c0_10 = arith.constant 0 : index
    %c0_11 = arith.constant 0 : index
    %13 = vector.load %arg3[%c0_10, %c0_11] : memref<32x96xf32, #tpu.memory_space<vmem>>, vector<32x96xf32>
    %14 = arith.truncf %13 : vector<32x96xf32> to vector<32x96xbf16>
    %cst_12 = arith.constant dense<0.000000e+00> : vector<16x96xf32>
    %15 = tpu.matmul %12, %14, %cst_12 {dimension_numbers = #tpu.dot_dimension_numbers<[1], [0], [0], [1], [0, 0, 1, 1], [], []>} : vector<16x32xbf16>, vector<32x96xbf16>, vector<16x96xf32> -> vector<16x96xf32>
    %16 = vector.shape_cast %15 : vector<16x96xf32> to vector<2x8x96xf32>
    %17 = vector.extract_strided_slice %16 {offsets = [0, 0, 0], sizes = [2, 8, 32], strides = [1, 1, 1]} : vector<2x8x96xf32> to vector<2x8x32xf32>
    %18 = vector.extract_strided_slice %16 {offsets = [0, 0, 32], sizes = [2, 8, 32], strides = [1, 1, 1]} : vector<2x8x96xf32> to vector<2x8x32xf32>
    %19 = vector.extract_strided_slice %16 {offsets = [0, 0, 64], sizes = [2, 8, 32], strides = [1, 1, 1]} : vector<2x8x96xf32> to vector<2x8x32xf32>
    %20 = vector.shape_cast %9 : vector<2x1x32xf32> to vector<2x32xf32>
    %21 = arith.truncf %20 : vector<2x32xf32> to vector<2x32xbf16>
    %c0_13 = arith.constant 0 : index
    %c0_14 = arith.constant 0 : index
    %22 = vector.load %arg4[%c0_13, %c0_14] : memref<32x96xf32, #tpu.memory_space<vmem>>, vector<32x96xf32>
    %23 = arith.truncf %22 : vector<32x96xf32> to vector<32x96xbf16>
    %cst_15 = arith.constant dense<0.000000e+00> : vector<2x96xf32>
    %24 = tpu.matmul %21, %23, %cst_15 {dimension_numbers = #tpu.dot_dimension_numbers<[1], [0], [0], [1], [0, 0, 1, 1], [], []>} : vector<2x32xbf16>, vector<32x96xbf16>, vector<2x96xf32> -> vector<2x96xf32>
    %25 = vector.extract_strided_slice %24 {offsets = [0, 0], sizes = [2, 32], strides = [1, 1]} : vector<2x96xf32> to vector<2x32xf32>
    %26 = vector.shape_cast %25 : vector<2x32xf32> to vector<2x1x32xf32>
    %27 = vector.extract_strided_slice %24 {offsets = [0, 32], sizes = [2, 32], strides = [1, 1]} : vector<2x96xf32> to vector<2x32xf32>
    %28 = vector.shape_cast %27 : vector<2x32xf32> to vector<2x1x32xf32>
    %29 = vector.extract_strided_slice %24 {offsets = [0, 64], sizes = [2, 32], strides = [1, 1]} : vector<2x96xf32> to vector<2x32xf32>
    %30 = vector.shape_cast %29 : vector<2x32xf32> to vector<2x1x32xf32>
    %cst_16 = arith.constant 0.000000e+00 : f32
    %31 = vector.broadcast %cst_16 : f32 to vector<2x1x32xf32>
    %32 = vector.broadcast %26 : vector<2x1x32xf32> to vector<2x8x32xf32>
    %33 = arith.addf %17, %32 : vector<2x8x32xf32>
    %34 = vector.broadcast %30 : vector<2x1x32xf32> to vector<2x8x32xf32>
    %35 = arith.addf %19, %34 : vector<2x8x32xf32>
    %36 = vector.extract_strided_slice %33 {offsets = [0, 0, 0], sizes = [2, 7, 32], strides = [1, 1, 1]} : vector<2x8x32xf32> to vector<2x7x32xf32>
    %37 = tpu.concatenate %31, %36 in 1 : vector<2x1x32xf32>, vector<2x7x32xf32> -> vector<2x8x32xf32>
    %38 = vector.broadcast %28 : vector<2x1x32xf32> to vector<2x8x32xf32>
    %39 = arith.addf %18, %38 : vector<2x8x32xf32>
    %40 = arith.addf %37, %39 : vector<2x8x32xf32>
    %41 = vector.extract_strided_slice %35 {offsets = [0, 1, 0], sizes = [2, 7, 32], strides = [1, 1, 1]} : vector<2x8x32xf32> to vector<2x7x32xf32>
    %42 = tpu.concatenate %41, %31 in 1 : vector<2x7x32xf32>, vector<2x1x32xf32> -> vector<2x8x32xf32>
    %43 = arith.addf %40, %42 : vector<2x8x32xf32>
    %c0_17 = arith.constant 0 : index
    %c0_18 = arith.constant 0 : index
    %44 = vector.load %arg5[%c0_17, %c0_18] : memref<1x32xf32, #tpu.memory_space<vmem>>, vector<1x32xf32>
    %45 = vector.shape_cast %44 : vector<1x32xf32> to vector<1x1x32xf32>
    %46 = vector.broadcast %45 : vector<1x1x32xf32> to vector<2x8x32xf32>
    %47 = arith.addf %43, %46 : vector<2x8x32xf32>
    %cst_19 = arith.constant 0.000000e+00 : f32
    %48 = vector.broadcast %cst_19 : f32 to vector<2x8x32xf32>
    %49 = arith.maximumf %47, %48 : vector<2x8x32xf32>
    %c0_20 = arith.constant 0 : index
    %c0_21 = arith.constant 0 : index
    %50 = vector.load %arg6[%c0_20, %c0_21] : memref<2x32xf32, #tpu.memory_space<vmem>>, vector<2x32xf32>
    %51 = vector.extract_strided_slice %50 {offsets = [0, 0], sizes = [1, 32], strides = [1, 1]} : vector<2x32xf32> to vector<1x32xf32>
    %52 = vector.shape_cast %51 : vector<1x32xf32> to vector<1x1x32xf32>
    %53 = vector.broadcast %52 : vector<1x1x32xf32> to vector<2x8x32xf32>
    %54 = arith.mulf %49, %53 : vector<2x8x32xf32>
    %cst_22 = arith.constant dense<0.000000e+00> : vector<2x8xf32>
    %55 = vector.multi_reduction <add>, %54, %cst_22 [2] : vector<2x8x32xf32> to vector<2x8xf32>
    %56 = vector.extract_strided_slice %50 {offsets = [1, 0], sizes = [1, 32], strides = [1, 1]} : vector<2x32xf32> to vector<1x32xf32>
    %57 = vector.shape_cast %56 : vector<1x32xf32> to vector<1x1x32xf32>
    %58 = vector.broadcast %57 : vector<1x1x32xf32> to vector<2x8x32xf32>
    %59 = arith.mulf %49, %58 : vector<2x8x32xf32>
    %cst_23 = arith.constant dense<0.000000e+00> : vector<2x8xf32>
    %60 = vector.multi_reduction <add>, %59, %cst_23 [2] : vector<2x8x32xf32> to vector<2x8xf32>
    %c0_24 = arith.constant 0 : index
    %c0_25 = arith.constant 0 : index
    %c0_26 = arith.constant 0 : index
    %61 = vector.load %arg7[%c0_24, %c0_25, %c0_26] : memref<2x1x1xf32, #tpu.memory_space<vmem>>, vector<1x1x1xf32>
    %62 = vector.shape_cast %61 : vector<1x1x1xf32> to vector<1x1xf32>
    %63 = vector.broadcast %62 : vector<1x1xf32> to vector<2x8xf32>
    %64 = arith.addf %55, %63 : vector<2x8xf32>
    %65 = vector.shape_cast %64 : vector<2x8xf32> to vector<2x1x8xf32>
    %c0_27 = arith.constant 0 : index
    %c0_28 = arith.constant 0 : index
    %c0_29 = arith.constant 0 : index
    %66 = vector.load %arg8[%c0_27, %c0_28, %c0_29] : memref<2x2x8xf32, #tpu.memory_space<vmem>>, vector<2x1x8xf32>
    tpu.vector_store %arg8[%c0_27, %c0_28, %c0_29], %65 {strides = array<i32>} : memref<2x2x8xf32, #tpu.memory_space<vmem>>, vector<2x1x8xf32>,
    %c1 = arith.constant 1 : index
    %c0_30 = arith.constant 0 : index
    %c0_31 = arith.constant 0 : index
    %67 = vector.load %arg7[%c1, %c0_30, %c0_31] : memref<2x1x1xf32, #tpu.memory_space<vmem>>, vector<1x1x1xf32>
    %68 = vector.shape_cast %67 : vector<1x1x1xf32> to vector<1x1xf32>
    %69 = vector.broadcast %68 : vector<1x1xf32> to vector<2x8xf32>
    %70 = arith.addf %60, %69 : vector<2x8xf32>
    %71 = vector.shape_cast %70 : vector<2x8xf32> to vector<2x1x8xf32>
    %c0_32 = arith.constant 0 : index
    %c1_33 = arith.constant 1 : index
    %c0_34 = arith.constant 0 : index
    %72 = vector.load %arg8[%c0_32, %c1_33, %c0_34] : memref<2x2x8xf32, #tpu.memory_space<vmem>>, vector<2x1x8xf32>
    tpu.vector_store %arg8[%c0_32, %c1_33, %c0_34], %71 {strides = array<i32>} : memref<2x2x8xf32, #tpu.memory_space<vmem>>, vector<2x1x8xf32>,
    return
  }
  func.func @transform_0(%arg0: i32) -> (i32, i32, i32) {
    %c0_i32 = arith.constant 0 : i32
    %c0_i32_0 = arith.constant 0 : i32
    %c0_i32_1 = arith.constant 0 : i32
    return %arg0, %c0_i32, %c0_i32_0 : i32, i32, i32
  }
  func.func @transform_1(%arg0: i32) -> (i32, i32, i32) {
    %c0_i32 = arith.constant 0 : i32
    %c0_i32_0 = arith.constant 0 : i32
    %c0_i32_1 = arith.constant 0 : i32
    return %arg0, %c0_i32, %c0_i32_0 : i32, i32, i32
  }
  func.func @transform_2(%arg0: i32) -> (i32, i32) {
    %c0_i32 = arith.constant 0 : i32
    %c0_i32_0 = arith.constant 0 : i32
    %c0_i32_1 = arith.constant 0 : i32
    return %c0_i32, %c0_i32_0 : i32, i32
  }
  func.func @transform_3(%arg0: i32) -> (i32, i32) {
    %c0_i32 = arith.constant 0 : i32
    %c0_i32_0 = arith.constant 0 : i32
    %c0_i32_1 = arith.constant 0 : i32
    return %c0_i32, %c0_i32_0 : i32, i32
  }
  func.func @transform_4(%arg0: i32) -> (i32, i32) {
    %c0_i32 = arith.constant 0 : i32
    %c0_i32_0 = arith.constant 0 : i32
    %c0_i32_1 = arith.constant 0 : i32
    return %c0_i32, %c0_i32_0 : i32, i32
  }
  func.func @transform_5(%arg0: i32) -> (i32, i32) {
    %c0_i32 = arith.constant 0 : i32
    %c0_i32_0 = arith.constant 0 : i32
    %c0_i32_1 = arith.constant 0 : i32
    return %c0_i32, %c0_i32_0 : i32, i32
  }
  func.func @transform_6(%arg0: i32) -> (i32, i32, i32) {
    %c0_i32 = arith.constant 0 : i32
    %c0_i32_0 = arith.constant 0 : i32
    %c0_i32_1 = arith.constant 0 : i32
    %c0_i32_2 = arith.constant 0 : i32
    return %c0_i32, %c0_i32_0, %c0_i32_1 : i32, i32, i32
  }
  func.func @transform_7(%arg0: i32) -> (i32, i32, i32) {
    %c0_i32 = arith.constant 0 : i32
    %c0_i32_0 = arith.constant 0 : i32
    %c0_i32_1 = arith.constant 0 : i32
    return %arg0, %c0_i32, %c0_i32_0 : i32, i32, i32
  }
  func.func @transform_8(%arg0: i32) -> (i32, i32, i32) {
    %c0_i32 = arith.constant 0 : i32
    %c0_i32_0 = arith.constant 0 : i32
    %c0_i32_1 = arith.constant 0 : i32
    return %arg0, %c0_i32, %c0_i32_0 : i32, i32, i32
  }
}

</mosaic_0001>

<llo_original>
// kernel: _lambda_.5
$region0: #{_lambda_.5}
  #allocation0 [shape = 'u32[]', space=smem, size = 0x4, offset = 0x4, fixed_abs, tag = 'smem constant byte address 0x4 - core index']
  #allocation1 [shape = 'u32[144,128]{1,0:T(1,128)}', space=vmem, size = 0x12000, scoped, tag = 'internal scratch']
  %s0 = inlined_call_operand.vmem [shape: f32[2,8,32], index: 0, kind: input, shape index: {}]
  %s1 = inlined_call_operand.vmem [shape: f32[2,8,1], index: 1, kind: input, shape index: {}]
  %s2 = inlined_call_operand.vmem [shape: f32[32,96], index: 2, kind: input, shape index: {}]
  %s3 = inlined_call_operand.vmem [shape: f32[32,96], index: 3, kind: input, shape index: {}]
  %s4 = inlined_call_operand.vmem [shape: f32[1,32], index: 4, kind: input, shape index: {}]
  %s5 = inlined_call_operand.vmem [shape: f32[2,32], index: 5, kind: input, shape index: {}]
  %s6 = inlined_call_operand.vmem [shape: f32[2,1,1], index: 6, kind: input, shape index: {}]
  %s7 = inlined_call_operand.vmem [shape: f32[2,2,8], index: 7, kind: output, shape index: {0}]
  %s8 = inlined_call_operand.hbm [shape: f32[2,1,32], index: 8, kind: output, shape index: {1}]
  %9 = xla_tuple %s7, %s8
  %s10 = sld [smem:[#allocation0]]
  $region46: #{_lambda_.5} parent=0
    _
  %s12 = ssub.s32 1, %s10
  %s13 = scalar_select 0, %s12, %s10
  $region1: #{_lambda_.5} parent=0
    #allocation2 [shape = 'u8[1024]{0}', space=vmem, size = 0x400, scoped, tag = 'output window, operand 1, single buffered']
    #allocation3 [shape = 's32[1]{0}', space=sflag, size = 0x4, scoped, tag = 'scoped memory for _lambda_.5']
    %14 = vsyncpa [#allocation3], 0
    // Predicated region
    $region2: #{_lambda_.5} parent=1 // pred_check
      _
    $region3: #{_lambda_.5} parent=1 // pred_check_branch
      %16 = sbr.rel (0) target = $region5
    $region4: #{_lambda_.5} parent=1 // pred_region
      _
    $region5: #{_lambda_.5} parent=1 // pred_fallthru
      _
    // Predicated region
    $region6: #{_lambda_.5} parent=1 // pred_check
      _
    $region7: #{_lambda_.5} parent=1 // pred_check_branch
      %18 = sbr.rel (0) target = $region9
    $region8: #{_lambda_.5} parent=1 // pred_region
      _
    $region9: #{_lambda_.5} parent=1 // pred_fallthru
      _
    // Predicated region
    $region10: #{_lambda_.5} parent=1 // pred_check
      _
    $region11: #{_lambda_.5} parent=1 // pred_check_branch
      %20 = sbr.rel (0) target = $region13
    $region12: #{_lambda_.5} parent=1 // pred_region
      _
    $region13: #{_lambda_.5} parent=1 // pred_fallthru
      _
    // Predicated region
    $region14: #{_lambda_.5} parent=1 // pred_check
      _
    $region15: #{_lambda_.5} parent=1 // pred_check_branch
      %22 = sbr.rel (0) target = $region17
    $region16: #{_lambda_.5} parent=1 // pred_region
      _
    $region17: #{_lambda_.5} parent=1 // pred_fallthru
      _
    // Predicated region
    $region18: #{_lambda_.5} parent=1 // pred_check
      _
    $region19: #{_lambda_.5} parent=1 // pred_check_branch
      %24 = sbr.rel (0) target = $region21
    $region20: #{_lambda_.5} parent=1 // pred_region
      _
    $region21: #{_lambda_.5} parent=1 // pred_fallthru
      _
    // Predicated region
    $region22: #{_lambda_.5} parent=1 // pred_check
      _
    $region23: #{_lambda_.5} parent=1 // pred_check_branch
      %26 = sbr.rel (0) target = $region25
    $region24: #{_lambda_.5} parent=1 // pred_region
      _
    $region25: #{_lambda_.5} parent=1 // pred_fallthru
      _
    // Predicated region
    $region26: #{_lambda_.5} parent=1 // pred_check
      _
    $region27: #{_lambda_.5} parent=1 // pred_check_branch
      %28 = sbr.rel (0) target = $region29
    $region28: #{_lambda_.5} parent=1 // pred_region
      _
    $region29: #{_lambda_.5} parent=1 // pred_fallthru
      _
    %v30 = vld [vmem:[%s0] sm:$0xff]
    %v31 = vld [vmem:[%s0 + $0x8] sm:$0xff]
    %v32 = vld [vmem:[%s1] sm:$0xff]
    %v33 = vld [vmem:[%s1 + $0x8] sm:$0xff]
    %v34 = vsub.f32 1.0, %v32
    %v35 = vsub.f32 1.0, %v33
    %v36 = vmul.f32 %v34, 1e+10
    %v37 = vmul.f32 %v35, 1e+10
    %39 = vset.pattern.permute.xlu0 0
    %40 = vperm.xlu0 %39, %v36
    %v41 = vpop.permute.xlu0 %40
    %44 = vset.pattern.permute.xlu0 0
    %45 = vperm.xlu0 %44, %v37
    %v46 = vpop.permute.xlu0 %45
    %v48 = vsub.f32 %v30, %v41
    %v49 = vsub.f32 %v31, %v46
    %vm50 = vcmask 261120
    %v51 = vsel %vm50, %v48, -inf
    %v52 = vrot.slane %v51, 4
    %v53 = vmax.f32 %v51, %v52
    %v54 = vrot.slane %v53, 2
    %v55 = vmax.f32 %v53, %v54
    %v56 = vrot.slane %v55, 1
    %v57 = vmax.f32 %v55, %v56
    %v58 = vsel %vm50, %v49, -inf
    %v59 = vrot.slane %v58, 4
    %v60 = vmax.f32 %v58, %v59
    %v61 = vrot.slane %v60, 2
    %v62 = vmax.f32 %v60, %v61
    %v63 = vrot.slane %v62, 1
    %v64 = vmax.f32 %v62, %v63
    %vm65 = vcmask 253952
    %66 = vst.msk [vmem:[#allocation2] sm:$0x1] %vm65, %v57
    %67 = vst.msk [vmem:[#allocation2 + $0x1] sm:$0x1] %vm65, %v64
    %v68 = vpack.c.bf16 %v31, %v30
    %v69 = vld [vmem:[%s2] sm:$0xff]
    %v70 = vld [vmem:[%s2 + $0x8] sm:$0xff]
    %v71 = vld [vmem:[%s2 + $0x10] sm:$0xff]
    %v72 = vld [vmem:[%s2 + $0x18] sm:$0xff]
    %v73 = vpack.c.bf16 %v70, %v69
    %v74 = vpack.c.bf16 %v72, %v71
    %v76 = vsel %vm50, %v68, 0
    %78 = vmatprep.subr.bf16.mxu0 0
    %79 = vmatpush1.bf16.msra.mxu0 0
    %80 = vmatprep.subr.bf16.mxu0 0
    %81 = vmatpush1.bf16.msra.mxu0 0
    %82 = vmatprep.subr.bf16.mxu0 0
    %83 = vmatpush1.bf16.msra.mxu0 0
    %84 = vmatprep.subr.bf16.mxu0 0
    %85 = vmatpush1.bf16.msra.mxu0 0
    %86 = vmatprep.subr.bf16.mxu0 0
    %87 = vmatpush1.bf16.msra.mxu0 0
    %88 = vmatprep.subr.bf16.mxu0 0
    %89 = vmatpush1.bf16.msra.mxu0 0
    %90 = vmatprep.subr.bf16.mxu0 0
    %91 = vmatpush1.bf16.msra.mxu0 %v74
    %92 = vmatprep.subr.bf16.mxu0 0
    %93 = vmatpush1.bf16.msra.mxu0 %v73
    %94 = vmatprep.subr.bf16.mxu0 0
    %95 = vmatpush2.bf16.msra.mxu0 0
    %96 = vmatprep.subr.bf16.mxu0 0
    %97 = vmatpush2.bf16.msra.mxu0 0
    %98 = vmatprep.subr.bf16.mxu0 0
    %99 = vmatpush2.bf16.msra.mxu0 0
    %100 = vmatprep.subr.bf16.mxu0 0
    %101 = vmatpush2.bf16.msra.mxu0 0
    %102 = vmatprep.subr.bf16.mxu0 0
    %103 = vmatpush2.bf16.msra.mxu0 0
    %104 = vmatprep.subr.bf16.mxu0 0
    %105 = vmatpush2.bf16.msra.mxu0 0
    %106 = vmatprep.subr.bf16.mxu0 0
    %107 = vmatpush2.bf16.msra.mxu0 0
    %108 = vmatprep.subr.bf16.mxu0 0
    %109 = vmatpush2.bf16.msra.mxu0 0
    %110 = vmatprep.mubr.bf16.mxu0 0
    %111 = vmatmul.mubr.bf16.gmra.mxu0 %v76
    %v112 = vpop.f32.mrf.mxu0
    %v113 = vadd.f32 0.0, %v112
    %v114 = vpop.f32.mrf.mxu0
    %v115 = vpop.f32.mrf.mxu0
    %v116 = vadd.f32 0.0, %v115
    %v117 = vpop.f32.mrf.mxu0
    %118 = vdwg.mxu0
    %v119 = vpack.c.bf16 %v57, %v57
    %v120 = vpack.c.bf16 %v64, %v64
    %v121 = vld [vmem:[%s3] sm:$0xff]
    %v122 = vld [vmem:[%s3 + $0x8] sm:$0xff]
    %v123 = vld [vmem:[%s3 + $0x10] sm:$0xff]
    %v124 = vld [vmem:[%s3 + $0x18] sm:$0xff]
    %v125 = vpack.c.bf16 %v122, %v121
    %v126 = vpack.c.bf16 %v124, %v123
    %v129 = vunpack.c.l.b16 %v119
    %v130 = vunpack.c.l.b16 %v120
    %vm131 = vcmask 1041409
    %v132 = vsel %vm131, %v130, %v129
    %v133 = vpack.c.b16 %v132, %v132
    %v135 = vsel %vm50, %v133, 0
    %137 = vmatprep.subr.bf16.mxu0 0
    %138 = vmatpush1.bf16.msra.mxu0 0
    %139 = vmatprep.subr.bf16.mxu0 0
    %140 = vmatpush1.bf16.msra.mxu0 0
    %141 = vmatprep.subr.bf16.mxu0 0
    %142 = vmatpush1.bf16.msra.mxu0 0
    %143 = vmatprep.subr.bf16.mxu0 0
    %144 = vmatpush1.bf16.msra.mxu0 0
    %145 = vmatprep.subr.bf16.mxu0 0
    %146 = vmatpush1.bf16.msra.mxu0 0
    %147 = vmatprep.subr.bf16.mxu0 0
    %148 = vmatpush1.bf16.msra.mxu0 0
    %149 = vmatprep.subr.bf16.mxu0 0
    %150 = vmatpush1.bf16.msra.mxu0 %v126
    %151 = vmatprep.subr.bf16.mxu0 0
    %152 = vmatpush1.bf16.msra.mxu0 %v125
    %153 = vmatprep.subr.bf16.mxu0 0
    %154 = vmatpush2.bf16.msra.mxu0 0
    %155 = vmatprep.subr.bf16.mxu0 0
    %156 = vmatpush2.bf16.msra.mxu0 0
    %157 = vmatprep.subr.bf16.mxu0 0
    %158 = vmatpush2.bf16.msra.mxu0 0
    %159 = vmatprep.subr.bf16.mxu0 0
    %160 = vmatpush2.bf16.msra.mxu0 0
    %161 = vmatprep.subr.bf16.mxu0 0
    %162 = vmatpush2.bf16.msra.mxu0 0
    %163 = vmatprep.subr.bf16.mxu0 0
    %164 = vmatpush2.bf16.msra.mxu0 0
    %165 = vmatprep.subr.bf16.mxu0 0
    %166 = vmatpush2.bf16.msra.mxu0 0
    %167 = vmatprep.subr.bf16.mxu0 0
    %168 = vmatpush2.bf16.msra.mxu0 0
    %169 = vmatprep.mubr.bf16.mxu0 0
    %170 = vmatmul.mubr.bf16.gmra.mxu0 %v135
    %v171 = vpop.f32.mrf.mxu0
    %v172 = vadd.f32 0.0, %v171
    %v173 = vpop.f32.mrf.mxu0
    %v174 = vpop.f32.mrf.mxu0
    %v175 = vpop.f32.mrf.mxu0
    %176 = vdwg.mxu0
    %v179 = vunpack.c.l.s4 1966171168
    %v180 = vunpack.c.0.s8 %v179
    %v181 = vlaneseq
    %v182 = vshrl.u32 %v181, 7
    %v183 = vsub.s32 %v180, %v182
    %v184 = vrot.slane %v172, %v183
    %v185 = vcombine.high %v184, %v184
    %v187 = vunpack.c.l.s4 1966171168
    %v188 = vunpack.c.0.s8 %v187
    %v189 = vlaneseq
    %v190 = vshrl.u32 %v189, 7
    %v191 = vsub.s32 %v188, %v190
    %v192 = vrot.slane %v184, %v191
    %v194 = vunpack.c.l.s4 1966171168
    %v195 = vunpack.c.0.s8 %v194
    %v196 = vlaneseq
    %v197 = vshrl.u32 %v196, 7
    %v198 = vsub.s32 %v195, %v197
    %v199 = vrot.slane %v185, %v198
    %v200 = vlaneseq
    %v201 = vshrl.u32 %v200, 7
    %v202 = vsub.s32 0, %v201
    %v203 = vrot.slane %v192, %v202
    %v204 = vlaneseq
    %v205 = vshrl.u32 %v204, 7
    %v206 = vsub.s32 0, %v205
    %v207 = vrot.slane %v199, %v206
    %v210 = vadd.f32 %v113, %v203
    %v211 = vadd.f32 %v116, %v207
    %v214 = vrot.slane %v210, 7
    %v215 = vrot.slane %v211, 7
    %vm218 = vcmask 1040384
    %v219 = vsel %vm218, 0.0, %v214
    %v220 = vsel %vm218, 0.0, %v215
    %221 = vrot.lane.b32.xlu0 %v210, 96
    %v222 = vpop.permute.xlu0 %221
    %223 = vrot.lane.b32.xlu0 %v211, 96
    %v224 = vpop.permute.xlu0 %223
    %v227 = vadd.f32 %v219, %v222
    %v228 = vadd.f32 %v220, %v224
    %v229 = vrot.slane %v210, 1
    %v230 = vrot.slane %v211, 1
    %vm233 = vcmask 1046528
    %v234 = vsel %vm233, %v229, 0.0
    %v235 = vsel %vm233, %v230, 0.0
    %238 = vrot.lane.b32.xlu0 %v234, 64
    %v239 = vpop.permute.xlu0 %238
    %240 = vrot.lane.b32.xlu0 %v235, 64
    %v241 = vpop.permute.xlu0 %240
    %v244 = vadd.f32 %v227, %v239
    %v245 = vadd.f32 %v228, %v241
    %v246 = vld [vmem:[%s4] sm:$0x1]
    %v248 = vlaneseq
    %v249 = vshrl.u32 %v248, 7
    %v250 = vsub.s32 0, %v249
    %v251 = vrot.slane %v246, %v250
    %v253 = vadd.f32 %v244, %v251
    %v254 = vadd.f32 %v245, %v251
    %v255 = vmax.f32 %v253, 0.0
    %v256 = vmax.f32 %v254, 0.0
    %v257 = vld [vmem:[%s5] sm:$0x3]
    %v258 = vlaneseq
    %v259 = vshrl.u32 %v258, 7
    %v260 = vsub.s32 0, %v259
    %v261 = vrot.slane %v257, %v260
    %v262 = vmul.f32 %v255, %v261
    %v263 = vmul.f32 %v256, %v261
    %v264 = vsel %vm50, %v262, 0.0
    %265 = vadd.xlane.f32.xlu0 %v264
    %v266 = vpop.xlane.xlu0 %265
    %v267 = vsel %vm50, %v263, 0.0
    %268 = vadd.xlane.f32.xlu0 %v267
    %v269 = vpop.xlane.xlu0 %268
    %v270 = vlaneseq
    %v271 = vshrl.u32 %v270, 7
    %v272 = vsub.s32 1, %v271
    %v273 = vrot.slane %v257, %v272
    %v274 = vmul.f32 %v255, %v273
    %v275 = vmul.f32 %v256, %v273
    %v276 = vsel %vm50, %v274, 0.0
    %277 = vadd.xlane.f32.xlu0 %v276
    %v278 = vpop.xlane.xlu0 %277
    %v279 = vsel %vm50, %v275, 0.0
    %280 = vadd.xlane.f32.xlu0 %v279
    %v281 = vpop.xlane.xlu0 %280
    %v282 = vld [vmem:[%s6] sm:$0x1]
    %v284 = vlaneseq
    %v285 = vshrl.u32 %v284, 7
    %v286 = vsub.s32 0, %v285
    %v287 = vrot.slane %v282, %v286
    %288 = vset.pattern.permute.xlu0 0
    %289 = vperm.xlu0 %288, %v287
    %v290 = vpop.permute.xlu0 %289
    %v292 = vadd.f32 %v266, %v290
    %v293 = vadd.f32 %v269, %v290
    %v296 = vlaneseq
    %v297 = vand.u32 %v296, 127
    %v298 = vlaneseq
    %v299 = vshrl.u32 %v298, 7
    %v300 = vsub.s32 %v297, %v299
    %v301 = vrot.slane %v292, %v300
    %v302 = vlaneseq
    %v303 = vshrl.u32 %v302, 7
    %v304 = vsub.s32 %v297, %v303
    %v305 = vrot.slane %v293, %v304
    %vm308 = vcmask 57344
    %309 = vst.msk [vmem:[%s7] sm:$0x1] %vm308, %v301
    %310 = vst.msk [vmem:[%s7 + $0x2] sm:$0x1] %vm308, %v305
    %s311 = scalar_lea.vmem %s6, 1
    %v312 = vld [vmem:[%s311] sm:$0x1]
    %v314 = vlaneseq
    %v315 = vshrl.u32 %v314, 7
    %v316 = vsub.s32 0, %v315
    %v317 = vrot.slane %v312, %v316
    %318 = vset.pattern.permute.xlu0 0
    %319 = vperm.xlu0 %318, %v317
    %v320 = vpop.permute.xlu0 %319
    %v322 = vadd.f32 %v278, %v320
    %v323 = vadd.f32 %v281, %v320
    %v326 = vlaneseq
    %v327 = vshrl.u32 %v326, 7
    %v328 = vsub.s32 %v297, %v327
    %v329 = vrot.slane %v322, %v328
    %v330 = vlaneseq
    %v331 = vshrl.u32 %v330, 7
    %v332 = vsub.s32 %v297, %v331
    %v333 = vrot.slane %v323, %v332
    %336 = vst.msk [vmem:[%s7 + $0x1] sm:$0x1] %vm308, %v329
    %337 = vst.msk [vmem:[%s7 + $0x3] sm:$0x1] %vm308, %v333
    // Predicated region
    $region30: #{_lambda_.5} parent=1 // pred_check
      _
    $region31: #{_lambda_.5} parent=1 // pred_check_branch
      %339 = sbr.rel (0) target = $region33
    $region32: #{_lambda_.5} parent=1 // pred_region
      _
    $region33: #{_lambda_.5} parent=1 // pred_fallthru
      _
    // Predicated region
    $region34: #{_lambda_.5} parent=1 // pred_check
      _
    $region35: #{_lambda_.5} parent=1 // pred_check_branch
      %341 = sbr.rel (0) target = $region37
    $region36: #{_lambda_.5} parent=1 // pred_region
      %s343 = ssub.s32 32, 32
      %344 = vsyncadd [#allocation3], %s343
      %s345 = sshll.u32 [#allocation2], 4
      %s346 = int_to_ptr.vmem [resolvable:$true] %s345
      %351 = dma.vmem_to_hbm [thread:$0]  %s346, 32, %s8, [#allocation3], 16, 16, 1
    $region37: #{_lambda_.5} parent=1 // pred_fallthru
      _
    // Predicated region
    $region38: #{_lambda_.5} parent=1 // pred_check
      _
    $region39: #{_lambda_.5} parent=1 // pred_check_branch
      %353 = sbr.rel (0) target = $region41
    $region40: #{_lambda_.5} parent=1 // pred_region
      _
    $region41: #{_lambda_.5} parent=1 // pred_fallthru
      _
    // Predicated region
    $region42: #{_lambda_.5} parent=1 // pred_check
      _
    $region43: #{_lambda_.5} parent=1 // pred_check_branch
      %355 = sbr.rel (0) target = $region45
    $region44: #{_lambda_.5} parent=1 // pred_region
      %356 = dma.done [#allocation3], 32
    $region45: #{_lambda_.5} parent=1 // pred_fallthru
      _
    %357 = vsyncpa [#allocation3], 1

// kernel: _lambda_.3
$region0: #{_lambda_.3}
  #allocation0 [shape = 'u32[]', space=smem, size = 0x4, offset = 0x4, fixed_abs, tag = 'smem constant byte address 0x4 - core index']
  #allocation1 [shape = 'u32[144,128]{1,0:T(1,128)}', space=vmem, size = 0x12000, scoped, tag = 'internal scratch']
  #allocation2 [shape = 'bf16[4,2,64]{2,1,0:T(2,128)(2,1)}', space=vmem, size = 0x800, scoped, tag = 'scratch operand']
  #allocation3 [shape = 'bf16[4,2,64]{2,1,0:T(2,128)(2,1)}', space=vmem, size = 0x800, scoped, tag = 'scratch operand']
  #allocation4 [shape = 'f32[2,2,16]{2,1,0:T(2,128)}', space=vmem, size = 0x800, scoped, tag = 'scratch operand']
  #allocation5 [shape = 'f32[2,2,16]{2,1,0:T(2,128)}', space=vmem, size = 0x800, scoped, tag = 'scratch operand']
  %s0 = inlined_call_operand.vmem [shape: f32[8,2,16], index: 0, kind: input, shape index: {}, may-alias: {0,2}]
  %s1 = inlined_call_operand.vmem [shape: f32[8,2,16], index: 1, kind: input, shape index: {}, may-alias: {1,3}]
  %s2 = inlined_call_operand.vmem [shape: f32[8,2,16], index: 2, kind: input, shape index: {}, may-alias: {0,2}]
  %s3 = inlined_call_operand.vmem [shape: f32[8,2,16], index: 3, kind: input, shape index: {}, may-alias: {1,3}]
  %s4 = inlined_call_operand.vmem [shape: f32[2,16,64], index: 4, kind: input, shape index: {}]
  %s5 = inlined_call_operand.vmem [shape: f32[2,16,64], index: 5, kind: input, shape index: {}]
  %s6 = inlined_call_operand.vmem [shape: f32[2,16,64], index: 6, kind: input, shape index: {}]
  %s7 = inlined_call_operand.vmem [shape: f32[2,1,64], index: 7, kind: input, shape index: {}]
  %s8 = inlined_call_operand.vmem [shape: bf16[8,2,16], index: 8, kind: output, shape index: {0}]
  %s9 = inlined_call_operand.vmem [shape: bf16[8,2,16], index: 9, kind: output, shape index: {1}]
  %10 = xla_tuple %s8, %s9
  %s11 = sld [smem:[#allocation0]]
  $region84: #{_lambda_.3} parent=0
    _
  %s13 = ssub.s32 1, %s11
  %s14 = scalar_select 0, %s13, %s11
  loop: start=0, step=1, limit=4
  $region2: #{_lambda_.3} parent=0 // loop_pre_header
    _
  $region3: #{_lambda_.3} parent=0 // loop_header
    %s16 = sphi 0, %s20
    %p17 = scmp.ge.s32.totalorder %s16, 4
    %s26 = sphi 0, %s28
    %s29 = sphi 0, %s26
    %s30 = sphi 0, %s29
    %s46 = sphi 0, %s30
    %s52 = sphi 0, %s54
    %s55 = sphi 0, %s52
    %s56 = sphi 0, %s55
    %s72 = sphi 0, %s56
    %s80 = sphi 0, %s82
    %s83 = sphi 0, %s80
    %s84 = sphi 0, %s83
    %s100 = sphi 0, %s84
    %s108 = sphi 0, %s110
    %s111 = sphi 0, %s108
    %s112 = sphi 0, %s111
    %s128 = sphi 0, %s112
    %s132 = sphi 0, %s132
    %s134 = sphi 0, %s132
    %s135 = sphi 0, %s134
    %s149 = sphi 0, %s135
    %s153 = sphi 0, %s153
    %s155 = sphi 0, %s153
    %s156 = sphi 0, %s155
    %s170 = sphi 0, %s156
    %s174 = sphi 0, %s174
    %s176 = sphi 0, %s174
    %s177 = sphi 0, %s176
    %s191 = sphi 0, %s177
    %s195 = sphi 0, %s195
    %s197 = sphi 0, %s195
    %s198 = sphi 0, %s197
    %s212 = sphi 0, %s198
    %s218 = sphi 0, %s220
    %s221 = sphi 0, %s218
    %s222 = sphi 0, %s221
    %s238 = sphi 0, %s222
    %s246 = sphi 0, %s248
    %s249 = sphi 0, %s246
    %s250 = sphi 0, %s249
    %s266 = sphi 0, %s250
  $region4: #{_lambda_.3} parent=0 // loop_header_branch
    %19 = sbr.rel (%p17) target = $region8
  $region5: #{_lambda_.3} parent=0 // loop_body
    %s21 = ssub.s32 %s16, 1
    %s22 = ssub.s32 %s16, 2
    %s23 = sadd.s32 %s16, 1
    %s24 = ssub.s32 %s16, %s23
    %p25 = scmp.eq.s32.totalorder %s24, 0
    %s27 = sadd.s32 %s26, 1
    %s28 = scalar_select %p25, %s26, %s27
    %p31 = pneg %p25
    %p32 = scmp.eq.s32.totalorder %s16, 1
    %p33 = por %p31, %p32
    %p34 = scmp.ne.s32.totalorder %s26, %s29
    %p35 = scmp.eq.s32.totalorder %s16, 0
    %p36 = por %p34, %p35
    %p37 = scmp.ne.s32.totalorder %s26, %s29
    %p38 = scmp.eq.s32.totalorder %s21, 1
    %p39 = por %p37, %p38
    %p40 = scmp.ne.s32.totalorder %s29, %s30
    %p41 = scmp.eq.s32.totalorder %s21, 0
    %p42 = por %p40, %p41
    %p43 = scmp.ne.s32.totalorder %s29, %s30
    %p44 = scmp.eq.s32.totalorder %s22, 1
    %p45 = por %p43, %p44
    %p47 = scmp.ne.s32.totalorder %s30, %s46
    %p48 = scmp.eq.s32.totalorder %s22, 0
    %p49 = por %p47, %p48
    %s50 = ssub.s32 %s16, %s23
    %p51 = scmp.eq.s32.totalorder %s50, 0
    %s53 = sadd.s32 %s52, 1
    %s54 = scalar_select %p51, %s52, %s53
    %p57 = pneg %p51
    %p58 = scmp.eq.s32.totalorder %s16, 1
    %p59 = por %p57, %p58
    %p60 = scmp.ne.s32.totalorder %s52, %s55
    %p61 = scmp.eq.s32.totalorder %s16, 0
    %p62 = por %p60, %p61
    %p63 = scmp.ne.s32.totalorder %s52, %s55
    %p64 = scmp.eq.s32.totalorder %s21, 1
    %p65 = por %p63, %p64
    %p66 = scmp.ne.s32.totalorder %s55, %s56
    %p67 = scmp.eq.s32.totalorder %s21, 0
    %p68 = por %p66, %p67
    %p69 = scmp.ne.s32.totalorder %s55, %s56
    %p70 = scmp.eq.s32.totalorder %s22, 1
    %p71 = por %p69, %p70
    %p73 = scmp.ne.s32.totalorder %s56, %s72
    %p74 = scmp.eq.s32.totalorder %s22, 0
    %p75 = por %p73, %p74
    %s76 = ssub.s32 1, %s16
    %s77 = ssub.s32 1, %s23
    %s78 = ssub.s32 %s76, %s77
    %p79 = scmp.eq.s32.totalorder %s78, 0
    %s81 = sadd.s32 %s80, 1
    %s82 = scalar_select %p79, %s80, %s81
    %p85 = pneg %p79
    %p86 = scmp.eq.s32.totalorder %s16, 1
    %p87 = por %p85, %p86
    %p88 = scmp.ne.s32.totalorder %s80, %s83
    %p89 = scmp.eq.s32.totalorder %s16, 0
    %p90 = por %p88, %p89
    %p91 = scmp.ne.s32.totalorder %s80, %s83
    %p92 = scmp.eq.s32.totalorder %s21, 1
    %p93 = por %p91, %p92
    %p94 = scmp.ne.s32.totalorder %s83, %s84
    %p95 = scmp.eq.s32.totalorder %s21, 0
    %p96 = por %p94, %p95
    %p97 = scmp.ne.s32.totalorder %s83, %s84
    %p98 = scmp.eq.s32.totalorder %s22, 1
    %p99 = por %p97, %p98
    %p101 = scmp.ne.s32.totalorder %s84, %s100
    %p102 = scmp.eq.s32.totalorder %s22, 0
    %p103 = por %p101, %p102
    %s104 = ssub.s32 1, %s16
    %s105 = ssub.s32 1, %s23
    %s106 = ssub.s32 %s104, %s105
    %p107 = scmp.eq.s32.totalorder %s106, 0
    %s109 = sadd.s32 %s108, 1
    %s110 = scalar_select %p107, %s108, %s109
    %p113 = pneg %p107
    %p114 = scmp.eq.s32.totalorder %s16, 1
    %p115 = por %p113, %p114
    %p116 = scmp.ne.s32.totalorder %s108, %s111
    %p117 = scmp.eq.s32.totalorder %s16, 0
    %p118 = por %p116, %p117
    %p119 = scmp.ne.s32.totalorder %s108, %s111
    %p120 = scmp.eq.s32.totalorder %s21, 1
    %p121 = por %p119, %p120
    %p122 = scmp.ne.s32.totalorder %s111, %s112
    %p123 = scmp.eq.s32.totalorder %s21, 0
    %p124 = por %p122, %p123
    %p125 = scmp.ne.s32.totalorder %s111, %s112
    %p126 = scmp.eq.s32.totalorder %s22, 1
    %p127 = por %p125, %p126
    %p129 = scmp.ne.s32.totalorder %s112, %s128
    %p130 = scmp.eq.s32.totalorder %s22, 0
    %p131 = por %p129, %p130
    %s133 = sadd.s32 %s132, 1
    %p136 = scmp.eq.s32.totalorder %s16, 1
    %p137 = scmp.ne.s32.totalorder %s132, %s134
    %p138 = scmp.eq.s32.totalorder %s16, 0
    %p139 = por %p137, %p138
    %p140 = scmp.ne.s32.totalorder %s132, %s134
    %p141 = scmp.eq.s32.totalorder %s21, 1
    %p142 = por %p140, %p141
    %p143 = scmp.ne.s32.totalorder %s134, %s135
    %p144 = scmp.eq.s32.totalorder %s21, 0
    %p145 = por %p143, %p144
    %p146 = scmp.ne.s32.totalorder %s134, %s135
    %p147 = scmp.eq.s32.totalorder %s22, 1
    %p148 = por %p146, %p147
    %p150 = scmp.ne.s32.totalorder %s135, %s149
    %p151 = scmp.eq.s32.totalorder %s22, 0
    %p152 = por %p150, %p151
    %s154 = sadd.s32 %s153, 1
    %p157 = scmp.eq.s32.totalorder %s16, 1
    %p158 = scmp.ne.s32.totalorder %s153, %s155
    %p159 = scmp.eq.s32.totalorder %s16, 0
    %p160 = por %p158, %p159
    %p161 = scmp.ne.s32.totalorder %s153, %s155
    %p162 = scmp.eq.s32.totalorder %s21, 1
    %p163 = por %p161, %p162
    %p164 = scmp.ne.s32.totalorder %s155, %s156
    %p165 = scmp.eq.s32.totalorder %s21, 0
    %p166 = por %p164, %p165
    %p167 = scmp.ne.s32.totalorder %s155, %s156
    %p168 = scmp.eq.s32.totalorder %s22, 1
    %p169 = por %p167, %p168
    %p171 = scmp.ne.s32.totalorder %s156, %s170
    %p172 = scmp.eq.s32.totalorder %s22, 0
    %p173 = por %p171, %p172
    %s175 = sadd.s32 %s174, 1
    %p178 = scmp.eq.s32.totalorder %s16, 1
    %p179 = scmp.ne.s32.totalorder %s174, %s176
    %p180 = scmp.eq.s32.totalorder %s16, 0
    %p181 = por %p179, %p180
    %p182 = scmp.ne.s32.totalorder %s174, %s176
    %p183 = scmp.eq.s32.totalorder %s21, 1
    %p184 = por %p182, %p183
    %p185 = scmp.ne.s32.totalorder %s176, %s177
    %p186 = scmp.eq.s32.totalorder %s21, 0
    %p187 = por %p185, %p186
    %p188 = scmp.ne.s32.totalorder %s176, %s177
    %p189 = scmp.eq.s32.totalorder %s22, 1
    %p190 = por %p188, %p189
    %p192 = scmp.ne.s32.totalorder %s177, %s191
    %p193 = scmp.eq.s32.totalorder %s22, 0
    %p194 = por %p192, %p193
    %s196 = sadd.s32 %s195, 1
    %p199 = scmp.eq.s32.totalorder %s16, 1
    %p200 = scmp.ne.s32.totalorder %s195, %s197
    %p201 = scmp.eq.s32.totalorder %s16, 0
    %p202 = por %p200, %p201
    %p203 = scmp.ne.s32.totalorder %s195, %s197
    %p204 = scmp.eq.s32.totalorder %s21, 1
    %p205 = por %p203, %p204
    %p206 = scmp.ne.s32.totalorder %s197, %s198
    %p207 = scmp.eq.s32.totalorder %s21, 0
    %p208 = por %p206, %p207
    %p209 = scmp.ne.s32.totalorder %s197, %s198
    %p210 = scmp.eq.s32.totalorder %s22, 1
    %p211 = por %p209, %p210
    %p213 = scmp.ne.s32.totalorder %s198, %s212
    %p214 = scmp.eq.s32.totalorder %s22, 0
    %p215 = por %p213, %p214
    %s216 = ssub.s32 %s16, %s23
    %p217 = scmp.eq.s32.totalorder %s216, 0
    %s219 = sadd.s32 %s218, 1
    %s220 = scalar_select %p217, %s218, %s219
    %p223 = pneg %p217
    %p224 = scmp.eq.s32.totalorder %s16, 1
    %p225 = por %p223, %p224
    %p226 = scmp.ne.s32.totalorder %s218, %s221
    %p227 = scmp.eq.s32.totalorder %s16, 0
    %p228 = por %p226, %p227
    %p229 = scmp.ne.s32.totalorder %s218, %s221
    %p230 = scmp.eq.s32.totalorder %s21, 1
    %p231 = por %p229, %p230
    %p232 = scmp.ne.s32.totalorder %s221, %s222
    %p233 = scmp.eq.s32.totalorder %s21, 0
    %p234 = por %p232, %p233
    %p235 = scmp.ne.s32.totalorder %s221, %s222
    %p236 = scmp.eq.s32.totalorder %s22, 1
    %p237 = por %p235, %p236
    %p239 = scmp.ne.s32.totalorder %s222, %s238
    %p240 = scmp.eq.s32.totalorder %s22, 0
    %p241 = por %p239, %p240
    %s242 = ssub.s32 1, %s16
    %s243 = ssub.s32 1, %s23
    %s244 = ssub.s32 %s242, %s243
    %p245 = scmp.eq.s32.totalorder %s244, 0
    %s247 = sadd.s32 %s246, 1
    %s248 = scalar_select %p245, %s246, %s247
    %p251 = pneg %p245
    %p252 = scmp.eq.s32.totalorder %s16, 1
    %p253 = por %p251, %p252
    %p254 = scmp.ne.s32.totalorder %s246, %s249
    %p255 = scmp.eq.s32.totalorder %s16, 0
    %p256 = por %p254, %p255
    %p257 = scmp.ne.s32.totalorder %s246, %s249
    %p258 = scmp.eq.s32.totalorder %s21, 1
    %p259 = por %p257, %p258
    %p260 = scmp.ne.s32.totalorder %s249, %s250
    %p261 = scmp.eq.s32.totalorder %s21, 0
    %p262 = por %p260, %p261
    %p263 = scmp.ne.s32.totalorder %s249, %s250
    %p264 = scmp.eq.s32.totalorder %s22, 1
    %p265 = por %p263, %p264
    %p267 = scmp.ne.s32.totalorder %s250, %s266
    %p268 = scmp.eq.s32.totalorder %s22, 0
    %p269 = por %p267, %p268
    %p270 = scmp.le.s32.totalorder 1, %s16
    %p271 = scmp.lt.s32.totalorder %s16, 3
    %p272 = pnand %p270, %p271
    %p273 = pneg %p272
    // Predicated region
    $region9: #{_lambda_.3} parent=5 // pred_check
      _
    $region10: #{_lambda_.3} parent=5 // pred_check_branch
      %275 = sbr.rel (%p272) target = $region12
    $region11: #{_lambda_.3} parent=5 // pred_region
      %s276 = ssub.s32 %s16, 1
      // Predicated region
      $region13: #{_lambda_.3} parent=11 // pred_check
        %p277 = pneg %p145
      $region14: #{_lambda_.3} parent=11 // pred_check_branch
        %279 = sbr.rel (%p277) target = $region16
      $region15: #{_lambda_.3} parent=11 // pred_region
        _
      $region16: #{_lambda_.3} parent=11 // pred_fallthru
        _
      // Predicated region
      $region17: #{_lambda_.3} parent=11 // pred_check
        %p280 = pneg %p166
      $region18: #{_lambda_.3} parent=11 // pred_check_branch
        %282 = sbr.rel (%p280) target = $region20
      $region19: #{_lambda_.3} parent=11 // pred_region
        _
      $region20: #{_lambda_.3} parent=11 // pred_fallthru
        _
      // Predicated region
      $region21: #{_lambda_.3} parent=11 // pred_check
        %p283 = pneg %p187
      $region22: #{_lambda_.3} parent=11 // pred_check_branch
        %285 = sbr.rel (%p283) target = $region24
      $region23: #{_lambda_.3} parent=11 // pred_region
        _
      $region24: #{_lambda_.3} parent=11 // pred_fallthru
        _
      // Predicated region
      $region25: #{_lambda_.3} parent=11 // pred_check
        %p286 = pneg %p208
      $region26: #{_lambda_.3} parent=11 // pred_check_branch
        %288 = sbr.rel (%p286) target = $region28
      $region27: #{_lambda_.3} parent=11 // pred_region
        _
      $region28: #{_lambda_.3} parent=11 // pred_fallthru
        _
    $region12: #{_lambda_.3} parent=5 // pred_fallthru
      _
    %p289 = scmp.lt.s32.totalorder %s16, 2
    // Predicated region
    $region29: #{_lambda_.3} parent=5 // pred_check
      %p290 = pneg %p289
    $region30: #{_lambda_.3} parent=5 // pred_check_branch
      %292 = sbr.rel (%p290) target = $region32
    $region31: #{_lambda_.3} parent=5 // pred_region
      // Predicated region
      $region33: #{_lambda_.3} parent=31 // pred_check
        %p293 = pneg %p36
      $region34: #{_lambda_.3} parent=31 // pred_check_branch
        %295 = sbr.rel (%p293) target = $region36
      $region35: #{_lambda_.3} parent=31 // pred_region
        %s296 = smul.u32 4, %s16
        %p297 = scmp.lt.s32.totalorder %s296, 7
        %s298 = scalar_select %p297, %s296, 7
        %s299 = smul.addr %s298, 2
        %s300 = scalar_lea.vmem %s0, %s299
        %s301 = smul.u32 4, %s16
      $region36: #{_lambda_.3} parent=31 // pred_fallthru
        _
      // Predicated region
      $region37: #{_lambda_.3} parent=31 // pred_check
        %p302 = pneg %p62
      $region38: #{_lambda_.3} parent=31 // pred_check_branch
        %304 = sbr.rel (%p302) target = $region40
      $region39: #{_lambda_.3} parent=31 // pred_region
        %s305 = smul.u32 4, %s16
        %p306 = scmp.lt.s32.totalorder %s305, 7
        %s307 = scalar_select %p306, %s305, 7
        %s308 = smul.addr %s307, 2
        %s309 = scalar_lea.vmem %s1, %s308
        %s310 = smul.u32 4, %s16
      $region40: #{_lambda_.3} parent=31 // pred_fallthru
        _
      // Predicated region
      $region41: #{_lambda_.3} parent=31 // pred_check
        %p311 = pneg %p90
      $region42: #{_lambda_.3} parent=31 // pred_check_branch
        %313 = sbr.rel (%p311) target = $region44
      $region43: #{_lambda_.3} parent=31 // pred_region
        %s314 = ssub.s32 1, %s16
        %s315 = smul.u32 4, %s314
        %p316 = scmp.lt.s32.totalorder %s315, 7
        %s317 = scalar_select %p316, %s315, 7
        %s318 = smul.addr %s317, 2
        %s319 = scalar_lea.vmem %s2, %s318
        %s320 = ssub.s32 1, %s16
        %s321 = smul.u32 4, %s320
      $region44: #{_lambda_.3} parent=31 // pred_fallthru
        _
      // Predicated region
      $region45: #{_lambda_.3} parent=31 // pred_check
        %p322 = pneg %p118
      $region46: #{_lambda_.3} parent=31 // pred_check_branch
        %324 = sbr.rel (%p322) target = $region48
      $region47: #{_lambda_.3} parent=31 // pred_region
        %s325 = ssub.s32 1, %s16
        %s326 = smul.u32 4, %s325
        %p327 = scmp.lt.s32.totalorder %s326, 7
        %s328 = scalar_select %p327, %s326, 7
        %s329 = smul.addr %s328, 2
        %s330 = scalar_lea.vmem %s3, %s329
        %s331 = ssub.s32 1, %s16
        %s332 = smul.u32 4, %s331
      $region48: #{_lambda_.3} parent=31 // pred_fallthru
        _
    $region32: #{_lambda_.3} parent=5 // pred_fallthru
      _
    %p333 = scmp.le.s32.totalorder 1, %s16
    %p334 = scmp.lt.s32.totalorder %s16, 3
    %p335 = pnand %p333, %p334
    %p336 = pneg %p335
    // Predicated region
    $region49: #{_lambda_.3} parent=5 // pred_check
      _
    $region50: #{_lambda_.3} parent=5 // pred_check_branch
      %338 = sbr.rel (%p335) target = $region52
    $region51: #{_lambda_.3} parent=5 // pred_region
      %s339 = ssub.s32 %s16, 1
      %s340 = smul.u32 4, %s21
      %p341 = scmp.lt.s32.totalorder %s340, 7
      %s342 = scalar_select %p341, %s340, 7
      %s343 = smul.addr %s342, 2
      %s344 = scalar_lea.vmem %s0, %s343
      %p345 = pneg %p42
      %p346 = pneg %p39
      %s347 = smul.u32 4, %s21
      %p348 = scmp.lt.s32.totalorder %s347, 7
      %s349 = scalar_select %p348, %s347, 7
      %s350 = smul.addr %s349, 2
      %s351 = scalar_lea.vmem %s1, %s350
      %p352 = pneg %p68
      %p353 = pneg %p65
      %s354 = ssub.s32 1, %s21
      %s355 = smul.u32 4, %s354
      %p356 = scmp.lt.s32.totalorder %s355, 7
      %s357 = scalar_select %p356, %s355, 7
      %s358 = smul.addr %s357, 2
      %s359 = scalar_lea.vmem %s2, %s358
      %p360 = pneg %p96
      %p361 = pneg %p93
      %s362 = ssub.s32 1, %s21
      %s363 = smul.u32 4, %s362
      %p364 = scmp.lt.s32.totalorder %s363, 7
      %s365 = scalar_select %p364, %s363, 7
      %s366 = smul.addr %s365, 2
      %s367 = scalar_lea.vmem %s3, %s366
      %p368 = pneg %p124
      %p369 = pneg %p121
      %p370 = pneg %p145
      %p371 = pneg %p142
      %p372 = pneg %p166
      %p373 = pneg %p163
      %p374 = pneg %p187
      %p375 = pneg %p184
      %p376 = pneg %p208
      %p377 = pneg %p205
      %p378 = pneg %p234
      %p379 = pneg %p231
      %s380 = smul.u32 4, %s21
      %p381 = scmp.lt.s32.totalorder %s380, 7
      %s382 = scalar_select %p381, %s380, 7
      %s383 = scalar_lea.vmem %s8, %s382
      %p384 = pneg %p262
      %p385 = pneg %p259
      %s386 = ssub.s32 1, %s21
      %s387 = smul.u32 4, %s386
      %p388 = scmp.lt.s32.totalorder %s387, 7
      %s389 = scalar_select %p388, %s387, 7
      %s390 = scalar_lea.vmem %s9, %s389
      %s391 = smul.u32 4, %s21
      %p392 = scmp.lt.s32.totalorder %s391, 7
      %s393 = scalar_select %p392, %s391, 7
      %s394 = smul.addr %s393, 2
      %s395 = scalar_lea.vmem %s0, %s394
      %s396 = smul.u32 4, %s21
      %s397 = smul.u32 4, %s21
      %p398 = scmp.lt.s32.totalorder %s397, 7
      %s399 = scalar_select %p398, %s397, 7
      %s400 = smul.addr %s399, 2
      %s401 = scalar_lea.vmem %s1, %s400
      %s402 = smul.u32 4, %s21
      %s403 = ssub.s32 1, %s21
      %s404 = smul.u32 4, %s403
      %p405 = scmp.lt.s32.totalorder %s404, 7
      %s406 = scalar_select %p405, %s404, 7
      %s407 = smul.addr %s406, 2
      %s408 = scalar_lea.vmem %s2, %s407
      %s409 = ssub.s32 1, %s21
      %s410 = smul.u32 4, %s409
      %s411 = ssub.s32 1, %s21
      %s412 = smul.u32 4, %s411
      %p413 = scmp.lt.s32.totalorder %s412, 7
      %s414 = scalar_select %p413, %s412, 7
      %s415 = smul.addr %s414, 2
      %s416 = scalar_lea.vmem %s3, %s415
      %s417 = ssub.s32 1, %s21
      %s418 = smul.u32 4, %s417
      %s419 = smul.u32 4, %s21
      %p420 = scmp.lt.s32.totalorder %s419, 7
      %s421 = scalar_select %p420, %s419, 7
      %s422 = scalar_lea.vmem %s8, %s421
      %s423 = smul.u32 4, %s21
      %s424 = ssub.s32 1, %s21
      %s425 = smul.u32 4, %s424
      %p426 = scmp.lt.s32.totalorder %s425, 7
      %s427 = scalar_select %p426, %s425, 7
      %s428 = scalar_lea.vmem %s9, %s427
      %s429 = ssub.s32 1, %s21
      %s430 = smul.u32 4, %s429
      %p432 = scmp.eq.s32.totalorder %s21, 0
      // Predicated region
      $region53: #{_lambda_.3} parent=51 // pred_check
        %p433 = pneg %p432
      $region54: #{_lambda_.3} parent=51 // pred_check_branch
        %435 = sbr.rel (%p433) target = $region56
      $region55: #{_lambda_.3} parent=51 // pred_region
        %vm436 = vcmask 123904
        %437 = vst.msk [vmem:[#allocation4] sm:$0x3] %vm436, 0.0
        %438 = vst.msk [vmem:[#allocation4 + $0x2] sm:$0x3] %vm436, 0.0
        %439 = vst.msk [vmem:[#allocation5] sm:$0x3] %vm436, 0.0
        %440 = vst.msk [vmem:[#allocation5 + $0x2] sm:$0x3] %vm436, 0.0
      $region56: #{_lambda_.3} parent=51 // pred_fallthru
        _
      %v441 = vld [vmem:[%s395] sm:$0x3]
      %v442 = vld [vmem:[%s395 + $0x2] sm:$0x3]
      %v443 = vld [vmem:[%s395 + $0x4] sm:$0x3]
      %v444 = vld [vmem:[%s395 + $0x6] sm:$0x3]
      %v449 = vcombine.low %v441, %v442
      %v450 = vcombine.low %v443, %v444
      %v452 = vunpack.c.l.s4 1983009808
      %v453 = vunpack.c.0.s8 %v452
      %v454 = vlaneseq
      %v455 = vshrl.u32 %v454, 7
      %v456 = vsub.s32 %v453, %v455
      %v457 = vrot.slane %v449, %v456
      %v459 = vunpack.c.l.s4 1983009808
      %v460 = vunpack.c.0.s8 %v459
      %v461 = vlaneseq
      %v462 = vshrl.u32 %v461, 7
      %v463 = vsub.s32 %v460, %v462
      %v464 = vrot.slane %v450, %v463
      %v465 = vcombine.low %v457, %v464
      %v467 = vpack.c.bf16 %v465, %v465
      %v468 = vld [vmem:[%s401] sm:$0x3]
      %v469 = vld [vmem:[%s401 + $0x2] sm:$0x3]
      %v470 = vld [vmem:[%s401 + $0x4] sm:$0x3]
      %v471 = vld [vmem:[%s401 + $0x6] sm:$0x3]
      %v476 = vcombine.low %v468, %v469
      %v477 = vcombine.low %v470, %v471
      %v479 = vunpack.c.l.s4 1983009808
      %v480 = vunpack.c.0.s8 %v479
      %v481 = vlaneseq
      %v482 = vshrl.u32 %v481, 7
      %v483 = vsub.s32 %v480, %v482
      %v484 = vrot.slane %v476, %v483
      %v486 = vunpack.c.l.s4 1983009808
      %v487 = vunpack.c.0.s8 %v486
      %v488 = vlaneseq
      %v489 = vshrl.u32 %v488, 7
      %v490 = vsub.s32 %v487, %v489
      %v491 = vrot.slane %v477, %v490
      %v492 = vcombine.low %v484, %v491
      %v494 = vpack.c.bf16 %v492, %v492
      %v495 = vld [vmem:[%s4] sm:$0xff]
      %v496 = vld [vmem:[%s4 + $0x8] sm:$0xff]
      %v497 = vpack.c.bf16 %v496, %v495
      %v498 = vld [vmem:[%s5] sm:$0xff]
      %v499 = vld [vmem:[%s5 + $0x8] sm:$0xff]
      %v500 = vpack.c.bf16 %v499, %v498
      %vm501 = vcmask 130048
      %v503 = vsel %vm501, %v494, 0
      %505 = vmatprep.subr.bf16.mxu0 0
      %506 = vmatpush1.bf16.msra.mxu0 0
      %507 = vmatprep.subr.bf16.mxu0 0
      %508 = vmatpush1.bf16.msra.mxu0 0
      %509 = vmatprep.subr.bf16.mxu0 0
      %510 = vmatpush1.bf16.msra.mxu0 0
      %511 = vmatprep.subr.bf16.mxu0 0
      %512 = vmatpush1.bf16.msra.mxu0 0
      %513 = vmatprep.subr.bf16.mxu0 0
      %514 = vmatpush1.bf16.msra.mxu0 0
      %515 = vmatprep.subr.bf16.mxu0 0
      %516 = vmatpush1.bf16.msra.mxu0 0
      %517 = vmatprep.subr.bf16.mxu0 0
      %518 = vmatpush1.bf16.msra.mxu0 0
      %519 = vmatprep.subr.bf16.mxu0 0
      %520 = vmatpush1.bf16.msra.mxu0 %v500
      %521 = vmatprep.subr.bf16.mxu0 0
      %522 = vmatpush2.bf16.msra.mxu0 0
      %523 = vmatprep.subr.bf16.mxu0 0
      %524 = vmatpush2.bf16.msra.mxu0 0
      %525 = vmatprep.subr.bf16.mxu0 0
      %526 = vmatpush2.bf16.msra.mxu0 0
      %527 = vmatprep.subr.bf16.mxu0 0
      %528 = vmatpush2.bf16.msra.mxu0 0
      %529 = vmatprep.subr.bf16.mxu0 0
      %530 = vmatpush2.bf16.msra.mxu0 0
      %531 = vmatprep.subr.bf16.mxu0 0
      %532 = vmatpush2.bf16.msra.mxu0 0
      %533 = vmatprep.subr.bf16.mxu0 0
      %534 = vmatpush2.bf16.msra.mxu0 0
      %535 = vmatprep.subr.bf16.mxu0 0
      %536 = vmatpush2.bf16.msra.mxu0 0
      %537 = vmatprep.mubr.bf16.mxu0 0
      %538 = vmatmul.mubr.bf16.gmra.mxu0 %v503
      %v539 = vpop.f32.mrf.mxu0
      %v540 = vadd.f32 0.0, %v539
      %v541 = vpop.f32.mrf.mxu0
      %v542 = vpop.f32.mrf.mxu0
      %v543 = vpop.f32.mrf.mxu0
      %544 = vdwg.mxu0
      %v546 = vsel %vm501, %v467, 0
      %548 = vmatprep.subr.bf16.mxu0 0
      %549 = vmatpush1.bf16.msra.mxu0 0
      %550 = vmatprep.subr.bf16.mxu0 0
      %551 = vmatpush1.bf16.msra.mxu0 0
      %552 = vmatprep.subr.bf16.mxu0 0
      %553 = vmatpush1.bf16.msra.mxu0 0
      %554 = vmatprep.subr.bf16.mxu0 0
      %555 = vmatpush1.bf16.msra.mxu0 0
      %556 = vmatprep.subr.bf16.mxu0 0
      %557 = vmatpush1.bf16.msra.mxu0 0
      %558 = vmatprep.subr.bf16.mxu0 0
      %559 = vmatpush1.bf16.msra.mxu0 0
      %560 = vmatprep.subr.bf16.mxu0 0
      %561 = vmatpush1.bf16.msra.mxu0 0
      %562 = vmatprep.subr.bf16.mxu0 0
      %563 = vmatpush1.bf16.msra.mxu0 %v497
      %564 = vmatprep.subr.bf16.mxu0 0
      %565 = vmatpush2.bf16.msra.mxu0 0
      %566 = vmatprep.subr.bf16.mxu0 0
      %567 = vmatpush2.bf16.msra.mxu0 0
      %568 = vmatprep.subr.bf16.mxu0 0
      %569 = vmatpush2.bf16.msra.mxu0 0
      %570 = vmatprep.subr.bf16.mxu0 0
      %571 = vmatpush2.bf16.msra.mxu0 0
      %572 = vmatprep.subr.bf16.mxu0 0
      %573 = vmatpush2.bf16.msra.mxu0 0
      %574 = vmatprep.subr.bf16.mxu0 0
      %575 = vmatpush2.bf16.msra.mxu0 0
      %576 = vmatprep.subr.bf16.mxu0 0
      %577 = vmatpush2.bf16.msra.mxu0 0
      %578 = vmatprep.subr.bf16.mxu0 0
      %579 = vmatpush2.bf16.msra.mxu0 0
      %580 = vmatprep.mubr.bf16.mxu0 0
      %581 = vmatmul.mubr.bf16.gmra.mxu0 %v546
      %v582 = vpop.f32.mrf.mxu0
      %v583 = vadd.f32 %v540, %v582
      %v584 = vpop.f32.mrf.mxu0
      %v585 = vpop.f32.mrf.mxu0
      %v586 = vpop.f32.mrf.mxu0
      %587 = vdwg.mxu0
      %v588 = vld [vmem:[%s7] sm:$0x1]
      %v590 = vlaneseq
      %v591 = vshrl.u32 %v590, 7
      %v592 = vsub.s32 0, %v591
      %v593 = vrot.slane %v588, %v592
      %v595 = vadd.f32 %v583, %v593
      %v597 = vcombine.high %v595, %v595
      %v599 = vunpack.c.l.s4 1983009808
      %v600 = vunpack.c.0.s8 %v599
      %v601 = vlaneseq
      %v602 = vshrl.u32 %v601, 7
      %v603 = vsub.s32 %v600, %v602
      %v604 = vrot.slane %v595, %v603
      %v606 = vunpack.c.l.s4 1983009808
      %v607 = vunpack.c.0.s8 %v606
      %v608 = vlaneseq
      %v609 = vshrl.u32 %v608, 7
      %v610 = vsub.s32 %v607, %v609
      %v611 = vrot.slane %v597, %v610
      %v612 = vcombine.high %v604, %v604
      %v613 = vcombine.high %v611, %v611
      %v618 = vpack.c.bf16 %v604, %v604
      %v619 = vpack.c.bf16 %v612, %v612
      %v620 = vpack.c.bf16 %v611, %v611
      %v621 = vpack.c.bf16 %v613, %v613
      %vm622 = vcmask 516096
      %623 = vst.msk [vmem:[#allocation2] sm:$0x1] %vm622, %v618
      %624 = vst.msk [vmem:[#allocation2 + $0x1] sm:$0x1] %vm622, %v619
      %625 = vst.msk [vmem:[#allocation2 + $0x2] sm:$0x1] %vm622, %v620
      %626 = vst.msk [vmem:[#allocation2 + $0x3] sm:$0x1] %vm622, %v621
      %v627 = vld [vmem:[%s408] sm:$0x3]
      %v628 = vld [vmem:[%s408 + $0x2] sm:$0x3]
      %v629 = vld [vmem:[%s408 + $0x4] sm:$0x3]
      %v630 = vld [vmem:[%s408 + $0x6] sm:$0x3]
      %v635 = vcombine.low %v627, %v628
      %v636 = vcombine.low %v629, %v630
      %v638 = vunpack.c.l.s4 1983009808
      %v639 = vunpack.c.0.s8 %v638
      %v640 = vlaneseq
      %v641 = vshrl.u32 %v640, 7
      %v642 = vsub.s32 %v639, %v641
      %v643 = vrot.slane %v635, %v642
      %v645 = vunpack.c.l.s4 1983009808
      %v646 = vunpack.c.0.s8 %v645
      %v647 = vlaneseq
      %v648 = vshrl.u32 %v647, 7
      %v649 = vsub.s32 %v646, %v648
      %v650 = vrot.slane %v636, %v649
      %v651 = vcombine.low %v643, %v650
      %v653 = vpack.c.bf16 %v651, %v651
      %v654 = vld [vmem:[%s416] sm:$0x3]
      %v655 = vld [vmem:[%s416 + $0x2] sm:$0x3]
      %v656 = vld [vmem:[%s416 + $0x4] sm:$0x3]
      %v657 = vld [vmem:[%s416 + $0x6] sm:$0x3]
      %v662 = vcombine.low %v654, %v655
      %v663 = vcombine.low %v656, %v657
      %v665 = vunpack.c.l.s4 1983009808
      %v666 = vunpack.c.0.s8 %v665
      %v667 = vlaneseq
      %v668 = vshrl.u32 %v667, 7
      %v669 = vsub.s32 %v666, %v668
      %v670 = vrot.slane %v662, %v669
      %v672 = vunpack.c.l.s4 1983009808
      %v673 = vunpack.c.0.s8 %v672
      %v674 = vlaneseq
      %v675 = vshrl.u32 %v674, 7
      %v676 = vsub.s32 %v673, %v675
      %v677 = vrot.slane %v663, %v676
      %v678 = vcombine.low %v670, %v677
      %v680 = vpack.c.bf16 %v678, %v678
      %s681 = scalar_lea.vmem %s4, 16
      %v682 = vld [vmem:[%s681] sm:$0xff]
      %v683 = vld [vmem:[%s681 + $0x8] sm:$0xff]
      %v684 = vpack.c.bf16 %v683, %v682
      %s685 = scalar_lea.vmem %s5, 16
      %v686 = vld [vmem:[%s685] sm:$0xff]
      %v687 = vld [vmem:[%s685 + $0x8] sm:$0xff]
      %v688 = vpack.c.bf16 %v687, %v686
      %v690 = vsel %vm501, %v680, 0
      %692 = vmatprep.subr.bf16.mxu0 0
      %693 = vmatpush1.bf16.msra.mxu0 0
      %694 = vmatprep.subr.bf16.mxu0 0
      %695 = vmatpush1.bf16.msra.mxu0 0
      %696 = vmatprep.subr.bf16.mxu0 0
      %697 = vmatpush1.bf16.msra.mxu0 0
      %698 = vmatprep.subr.bf16.mxu0 0
      %699 = vmatpush1.bf16.msra.mxu0 0
      %700 = vmatprep.subr.bf16.mxu0 0
      %701 = vmatpush1.bf16.msra.mxu0 0
      %702 = vmatprep.subr.bf16.mxu0 0
      %703 = vmatpush1.bf16.msra.mxu0 0
      %704 = vmatprep.subr.bf16.mxu0 0
      %705 = vmatpush1.bf16.msra.mxu0 0
      %706 = vmatprep.subr.bf16.mxu0 0
      %707 = vmatpush1.bf16.msra.mxu0 %v688
      %708 = vmatprep.subr.bf16.mxu0 0
      %709 = vmatpush2.bf16.msra.mxu0 0
      %710 = vmatprep.subr.bf16.mxu0 0
      %711 = vmatpush2.bf16.msra.mxu0 0
      %712 = vmatprep.subr.bf16.mxu0 0
      %713 = vmatpush2.bf16.msra.mxu0 0
      %714 = vmatprep.subr.bf16.mxu0 0
      %715 = vmatpush2.bf16.msra.mxu0 0
      %716 = vmatprep.subr.bf16.mxu0 0
      %717 = vmatpush2.bf16.msra.mxu0 0
      %718 = vmatprep.subr.bf16.mxu0 0
      %719 = vmatpush2.bf16.msra.mxu0 0
      %720 = vmatprep.subr.bf16.mxu0 0
      %721 = vmatpush2.bf16.msra.mxu0 0
      %722 = vmatprep.subr.bf16.mxu0 0
      %723 = vmatpush2.bf16.msra.mxu0 0
      %724 = vmatprep.mubr.bf16.mxu0 0
      %725 = vmatmul.mubr.bf16.gmra.mxu0 %v690
      %v726 = vpop.f32.mrf.mxu0
      %v727 = vadd.f32 0.0, %v726
      %v728 = vpop.f32.mrf.mxu0
      %v729 = vpop.f32.mrf.mxu0
      %v730 = vpop.f32.mrf.mxu0
      %731 = vdwg.mxu0
      %v733 = vsel %vm501, %v653, 0
      %735 = vmatprep.subr.bf16.mxu0 0
      %736 = vmatpush1.bf16.msra.mxu0 0
      %737 = vmatprep.subr.bf16.mxu0 0
      %738 = vmatpush1.bf16.msra.mxu0 0
      %739 = vmatprep.subr.bf16.mxu0 0
      %740 = vmatpush1.bf16.msra.mxu0 0
      %741 = vmatprep.subr.bf16.mxu0 0
      %742 = vmatpush1.bf16.msra.mxu0 0
      %743 = vmatprep.subr.bf16.mxu0 0
      %744 = vmatpush1.bf16.msra.mxu0 0
      %745 = vmatprep.subr.bf16.mxu0 0
      %746 = vmatpush1.bf16.msra.mxu0 0
      %747 = vmatprep.subr.bf16.mxu0 0
      %748 = vmatpush1.bf16.msra.mxu0 0
      %749 = vmatprep.subr.bf16.mxu0 0
      %750 = vmatpush1.bf16.msra.mxu0 %v684
      %751 = vmatprep.subr.bf16.mxu0 0
      %752 = vmatpush2.bf16.msra.mxu0 0
      %753 = vmatprep.subr.bf16.mxu0 0
      %754 = vmatpush2.bf16.msra.mxu0 0
      %755 = vmatprep.subr.bf16.mxu0 0
      %756 = vmatpush2.bf16.msra.mxu0 0
      %757 = vmatprep.subr.bf16.mxu0 0
      %758 = vmatpush2.bf16.msra.mxu0 0
      %759 = vmatprep.subr.bf16.mxu0 0
      %760 = vmatpush2.bf16.msra.mxu0 0
      %761 = vmatprep.subr.bf16.mxu0 0
      %762 = vmatpush2.bf16.msra.mxu0 0
      %763 = vmatprep.subr.bf16.mxu0 0
      %764 = vmatpush2.bf16.msra.mxu0 0
      %765 = vmatprep.subr.bf16.mxu0 0
      %766 = vmatpush2.bf16.msra.mxu0 0
      %767 = vmatprep.mubr.bf16.mxu0 0
      %768 = vmatmul.mubr.bf16.gmra.mxu0 %v733
      %v769 = vpop.f32.mrf.mxu0
      %v770 = vadd.f32 %v727, %v769
      %v771 = vpop.f32.mrf.mxu0
      %v772 = vpop.f32.mrf.mxu0
      %v773 = vpop.f32.mrf.mxu0
      %774 = vdwg.mxu0
      %s775 = scalar_lea.vmem %s7, 1
      %v776 = vld [vmem:[%s775] sm:$0x1]
      %v778 = vlaneseq
      %v779 = vshrl.u32 %v778, 7
      %v780 = vsub.s32 0, %v779
      %v781 = vrot.slane %v776, %v780
      %v783 = vadd.f32 %v770, %v781
      %v785 = vcombine.high %v783, %v783
      %v787 = vunpack.c.l.s4 1983009808
      %v788 = vunpack.c.0.s8 %v787
      %v789 = vlaneseq
      %v790 = vshrl.u32 %v789, 7
      %v791 = vsub.s32 %v788, %v790
      %v792 = vrot.slane %v783, %v791
      %v794 = vunpack.c.l.s4 1983009808
      %v795 = vunpack.c.0.s8 %v794
      %v796 = vlaneseq
      %v797 = vshrl.u32 %v796, 7
      %v798 = vsub.s32 %v795, %v797
      %v799 = vrot.slane %v785, %v798
      %v800 = vcombine.high %v792, %v792
      %v801 = vcombine.high %v799, %v799
      %v806 = vpack.c.bf16 %v792, %v792
      %v807 = vpack.c.bf16 %v800, %v800
      %v808 = vpack.c.bf16 %v799, %v799
      %v809 = vpack.c.bf16 %v801, %v801
      %810 = vst.msk [vmem:[#allocation3] sm:$0x1] %vm622, %v806
      %811 = vst.msk [vmem:[#allocation3 + $0x1] sm:$0x1] %vm622, %v807
      %812 = vst.msk [vmem:[#allocation3 + $0x2] sm:$0x1] %vm622, %v808
      %813 = vst.msk [vmem:[#allocation3 + $0x3] sm:$0x1] %vm622, %v809
      %v814 = vld [vmem:[%s6] sm:$0xff]
      %v815 = vld [vmem:[%s6 + $0x8] sm:$0xff]
      %v816 = vpack.c.bf16 %v815, %v814
      %s817 = scalar_lea.vmem %s6, 16
      %v818 = vld [vmem:[%s817] sm:$0xff]
      %v819 = vld [vmem:[%s817 + $0x8] sm:$0xff]
      %v820 = vpack.c.bf16 %v819, %v818
      %v821 = vld [vmem:[#allocation4] sm:$0x3]
      %v822 = vld [vmem:[#allocation5] sm:$0x3]
      %s823 = scalar_lea.vmem [#allocation4], 2
      %v824 = vld [vmem:[%s823] sm:$0x3]
      %s825 = scalar_lea.vmem [#allocation5], 2
      %v826 = vld [vmem:[%s825] sm:$0x3]
      loop: start=0, step=1, limit=4
      $region57: #{_lambda_.3} parent=51 // loop_pre_header
        _
      $region58: #{_lambda_.3} parent=51 // loop_header
        %s828 = sphi 0, %s832
        %p829 = scmp.ge.s32.totalorder %s828, 4
        %v833 = vphi %v821, %v1056
        %v834 = vphi %v822, %v1067
        %v835 = vphi %v824, %v1078
        %v836 = vphi %v826, %v1089
      $region59: #{_lambda_.3} parent=51 // loop_header_branch
        %831 = sbr.rel (%p829) target = $region63
      $region60: #{_lambda_.3} parent=51 // loop_body
        %s837 = ssub.s32 3, %s828
        %s838 = scalar_lea.vmem [#allocation2], %s828
        %v839 = vld [vmem:[%s838] sm:$0x1]
        %v840 = vunpack.c.l.bf16 %v839
        %v841 = vpack.c.bf16 %v833, %v833
        %v843 = vsel %vm501, %v841, 0
        %845 = vmatprep.subr.bf16.mxu0 0
        %846 = vmatpush1.bf16.msra.mxu0 0
        %847 = vmatprep.subr.bf16.mxu0 0
        %848 = vmatpush1.bf16.msra.mxu0 0
        %849 = vmatprep.subr.bf16.mxu0 0
        %850 = vmatpush1.bf16.msra.mxu0 0
        %851 = vmatprep.subr.bf16.mxu0 0
        %852 = vmatpush1.bf16.msra.mxu0 0
        %853 = vmatprep.subr.bf16.mxu0 0
        %854 = vmatpush1.bf16.msra.mxu0 0
        %855 = vmatprep.subr.bf16.mxu0 0
        %856 = vmatpush1.bf16.msra.mxu0 0
        %857 = vmatprep.subr.bf16.mxu0 0
        %858 = vmatpush1.bf16.msra.mxu0 0
        %859 = vmatprep.subr.bf16.mxu0 0
        %860 = vmatpush1.bf16.msra.mxu0 %v816
        %861 = vmatprep.subr.bf16.mxu0 0
        %862 = vmatpush2.bf16.msra.mxu0 0
        %863 = vmatprep.subr.bf16.mxu0 0
        %864 = vmatpush2.bf16.msra.mxu0 0
        %865 = vmatprep.subr.bf16.mxu0 0
        %866 = vmatpush2.bf16.msra.mxu0 0
        %867 = vmatprep.subr.bf16.mxu0 0
        %868 = vmatpush2.bf16.msra.mxu0 0
        %869 = vmatprep.subr.bf16.mxu0 0
        %870 = vmatpush2.bf16.msra.mxu0 0
        %871 = vmatprep.subr.bf16.mxu0 0
        %872 = vmatpush2.bf16.msra.mxu0 0
        %873 = vmatprep.subr.bf16.mxu0 0
        %874 = vmatpush2.bf16.msra.mxu0 0
        %875 = vmatprep.subr.bf16.mxu0 0
        %876 = vmatpush2.bf16.msra.mxu0 0
        %877 = vmatprep.mubr.bf16.mxu0 0
        %878 = vmatmul.mubr.bf16.gmra.mxu0 %v843
        %v879 = vpop.f32.mrf.mxu0
        %v880 = vadd.f32 0.0, %v879
        %v881 = vpop.f32.mrf.mxu0
        %v882 = vpop.f32.mrf.mxu0
        %v883 = vpop.f32.mrf.mxu0
        %884 = vdwg.mxu0
        %v885 = vadd.f32 %v840, %v880
        %s886 = scalar_lea.vmem [#allocation3], %s837
        %v887 = vld [vmem:[%s886] sm:$0x1]
        %v888 = vunpack.c.l.bf16 %v887
        %v889 = vpack.c.bf16 %v835, %v835
        %v891 = vsel %vm501, %v889, 0
        %893 = vmatprep.subr.bf16.mxu0 0
        %894 = vmatpush1.bf16.msra.mxu0 0
        %895 = vmatprep.subr.bf16.mxu0 0
        %896 = vmatpush1.bf16.msra.mxu0 0
        %897 = vmatprep.subr.bf16.mxu0 0
        %898 = vmatpush1.bf16.msra.mxu0 0
        %899 = vmatprep.subr.bf16.mxu0 0
        %900 = vmatpush1.bf16.msra.mxu0 0
        %901 = vmatprep.subr.bf16.mxu0 0
        %902 = vmatpush1.bf16.msra.mxu0 0
        %903 = vmatprep.subr.bf16.mxu0 0
        %904 = vmatpush1.bf16.msra.mxu0 0
        %905 = vmatprep.subr.bf16.mxu0 0
        %906 = vmatpush1.bf16.msra.mxu0 0
        %907 = vmatprep.subr.bf16.mxu0 0
        %908 = vmatpush1.bf16.msra.mxu0 %v820
        %909 = vmatprep.subr.bf16.mxu0 0
        %910 = vmatpush2.bf16.msra.mxu0 0
        %911 = vmatprep.subr.bf16.mxu0 0
        %912 = vmatpush2.bf16.msra.mxu0 0
        %913 = vmatprep.subr.bf16.mxu0 0
        %914 = vmatpush2.bf16.msra.mxu0 0
        %915 = vmatprep.subr.bf16.mxu0 0
        %916 = vmatpush2.bf16.msra.mxu0 0
        %917 = vmatprep.subr.bf16.mxu0 0
        %918 = vmatpush2.bf16.msra.mxu0 0
        %919 = vmatprep.subr.bf16.mxu0 0
        %920 = vmatpush2.bf16.msra.mxu0 0
        %921 = vmatprep.subr.bf16.mxu0 0
        %922 = vmatpush2.bf16.msra.mxu0 0
        %923 = vmatprep.subr.bf16.mxu0 0
        %924 = vmatpush2.bf16.msra.mxu0 0
        %925 = vmatprep.mubr.bf16.mxu0 0
        %926 = vmatmul.mubr.bf16.gmra.mxu0 %v891
        %v927 = vpop.f32.mrf.mxu0
        %v928 = vadd.f32 0.0, %v927
        %v929 = vpop.f32.mrf.mxu0
        %v930 = vpop.f32.mrf.mxu0
        %v931 = vpop.f32.mrf.mxu0
        %932 = vdwg.mxu0
        %v933 = vadd.f32 %v888, %v928
        %v934 = vxor.u32 %v885, 2147483648
        %v935 = vmul.f32 %v934, 1.442695
        %v936 = vpow.pop %v935
        %v937 = vadd.f32 %v936, 1.0
        %v938 = vrcp.pop %v937
        %v939 = vmul.f32 1.0, %v938
        %v940 = vtanh.pop %v885
        %v943 = vunpack.c.l.s4 1983009808
        %v944 = vunpack.c.0.s8 %v943
        %v945 = vlaneseq
        %v946 = vshrl.u32 %v945, 7
        %v947 = vsub.s32 %v944, %v946
        %v948 = vrot.slane %v834, %v947
        %949 = vrot.lane.b32.xlu0 %v948, 16
        %v950 = vpop.permute.xlu0 %949
        %v952 = vmul.f32 %v939, %v950
        %954 = vrot.lane.b32.xlu0 %v940, 96
        %v955 = vpop.permute.xlu0 %954
        %v957 = vmul.f32 %v939, %v955
        %959 = vrot.lane.b32.xlu0 %v957, 16
        %v960 = vpop.permute.xlu0 %959
        %v962 = vadd.f32 %v952, %v960
        %v963 = vtanh.pop %v962
        %965 = vrot.lane.b32.xlu0 %v963, 32
        %v966 = vpop.permute.xlu0 %965
        %v968 = vmul.f32 %v939, %v966
        %v969 = vxor.u32 %v933, 2147483648
        %v970 = vmul.f32 %v969, 1.442695
        %v971 = vpow.pop %v970
        %v972 = vadd.f32 %v971, 1.0
        %v973 = vrcp.pop %v972
        %v974 = vmul.f32 1.0, %v973
        %v975 = vtanh.pop %v933
        %v978 = vunpack.c.l.s4 1983009808
        %v979 = vunpack.c.0.s8 %v978
        %v980 = vlaneseq
        %v981 = vshrl.u32 %v980, 7
        %v982 = vsub.s32 %v979, %v981
        %v983 = vrot.slane %v836, %v982
        %984 = vrot.lane.b32.xlu0 %v983, 16
        %v985 = vpop.permute.xlu0 %984
        %v987 = vmul.f32 %v974, %v985
        %989 = vrot.lane.b32.xlu0 %v975, 96
        %v990 = vpop.permute.xlu0 %989
        %v992 = vmul.f32 %v974, %v990
        %994 = vrot.lane.b32.xlu0 %v992, 16
        %v995 = vpop.permute.xlu0 %994
        %v997 = vadd.f32 %v987, %v995
        %v998 = vtanh.pop %v997
        %1000 = vrot.lane.b32.xlu0 %v998, 32
        %v1001 = vpop.permute.xlu0 %1000
        %v1003 = vmul.f32 %v974, %v1001
        %v1004 = vpack.c.bf16 %v968, %v968
        %v1007 = vunpack.c.l.s4 1966171168
        %v1008 = vunpack.c.0.s8 %v1007
        %v1009 = vlaneseq
        %v1010 = vshrl.u32 %v1009, 7
        %v1011 = vsub.s32 %v1008, %v1010
        %v1012 = vrot.slane %v1004, %v1011
        %v1014 = vunpack.c.l.s4 1966171168
        %v1015 = vunpack.c.0.s8 %v1014
        %v1016 = vlaneseq
        %v1017 = vshrl.u32 %v1016, 7
        %v1018 = vsub.s32 %v1015, %v1017
        %v1019 = vrot.slane %v1012, %v1018
        %1020 = vrot.lane.b32.xlu0 %v1019, 80
        %v1021 = vpop.permute.xlu0 %1020
        %s1023 = scalar_lea.vmem %s422, %s828
        %vm1024 = vcmask 122880
        %1025 = vst.msk [vmem:[%s1023] sm:$0x1] %vm1024, %v1021
        %v1026 = vpack.c.bf16 %v1003, %v1003
        %v1029 = vunpack.c.l.s4 1966171168
        %v1030 = vunpack.c.0.s8 %v1029
        %v1031 = vlaneseq
        %v1032 = vshrl.u32 %v1031, 7
        %v1033 = vsub.s32 %v1030, %v1032
        %v1034 = vrot.slane %v1026, %v1033
        %v1036 = vunpack.c.l.s4 1966171168
        %v1037 = vunpack.c.0.s8 %v1036
        %v1038 = vlaneseq
        %v1039 = vshrl.u32 %v1038, 7
        %v1040 = vsub.s32 %v1037, %v1039
        %v1041 = vrot.slane %v1034, %v1040
        %1042 = vrot.lane.b32.xlu0 %v1041, 80
        %v1043 = vpop.permute.xlu0 %1042
        %s1045 = scalar_lea.vmem %s428, %s837
        %1046 = vst.msk [vmem:[%s1045] sm:$0x1] %vm1024, %v1043
        %v1049 = vunpack.c.l.s4 1983009808
        %v1050 = vunpack.c.0.s8 %v1049
        %v1051 = vlaneseq
        %v1052 = vshrl.u32 %v1051, 7
        %v1053 = vsub.s32 %v1050, %v1052
        %v1054 = vrot.slane %v968, %v1053
        %1055 = vrot.lane.b32.xlu0 %v1054, 80
        %v1056 = vpop.permute.xlu0 %1055
        %v1060 = vunpack.c.l.s4 1983009808
        %v1061 = vunpack.c.0.s8 %v1060
        %v1062 = vlaneseq
        %v1063 = vshrl.u32 %v1062, 7
        %v1064 = vsub.s32 %v1061, %v1063
        %v1065 = vrot.slane %v962, %v1064
        %1066 = vrot.lane.b32.xlu0 %v1065, 112
        %v1067 = vpop.permute.xlu0 %1066
        %v1071 = vunpack.c.l.s4 1983009808
        %v1072 = vunpack.c.0.s8 %v1071
        %v1073 = vlaneseq
        %v1074 = vshrl.u32 %v1073, 7
        %v1075 = vsub.s32 %v1072, %v1074
        %v1076 = vrot.slane %v1003, %v1075
        %1077 = vrot.lane.b32.xlu0 %v1076, 80
        %v1078 = vpop.permute.xlu0 %1077
        %v1082 = vunpack.c.l.s4 1983009808
        %v1083 = vunpack.c.0.s8 %v1082
        %v1084 = vlaneseq
        %v1085 = vshrl.u32 %v1084, 7
        %v1086 = vsub.s32 %v1083, %v1085
        %v1087 = vrot.slane %v997, %v1086
        %1088 = vrot.lane.b32.xlu0 %v1087, 112
        %v1089 = vpop.permute.xlu0 %1088
      $region61: #{_lambda_.3} parent=51 // loop_footer
        %s832 = sadd.s32 1, %s828
      $region62: #{_lambda_.3} parent=51 // loop_footer_branch
        %827 = sbr.rel target = $region58
      $region63: #{_lambda_.3} parent=51 // loop_exit
        _
      %vm1091 = vcmask 123904
      %1092 = vst.msk [vmem:[#allocation4] sm:$0x3] %vm1091, %v833
      %1093 = vst.msk [vmem:[#allocation5] sm:$0x3] %vm1091, %v834
      %1094 = vst.msk [vmem:[%s823] sm:$0x3] %vm1091, %v835
      %1095 = vst.msk [vmem:[%s825] sm:$0x3] %vm1091, %v836
      %s1096 = smul.u32 4, %s21
      %p1097 = scmp.lt.s32.totalorder %s1096, 7
      %s1098 = scalar_select %p1097, %s1096, 7
      %s1099 = scalar_lea.vmem %s8, %s1098
      %s1100 = ssub.s32 1, %s21
      %s1101 = smul.u32 4, %s1100
      %p1102 = scmp.lt.s32.totalorder %s1101, 7
      %s1103 = scalar_select %p1102, %s1101, 7
      %s1104 = scalar_lea.vmem %s9, %s1103
      // Predicated region
      $region64: #{_lambda_.3} parent=51 // pred_check
        %p1105 = pneg %p231
      $region65: #{_lambda_.3} parent=51 // pred_check_branch
        %1107 = sbr.rel (%p1105) target = $region67
      $region66: #{_lambda_.3} parent=51 // pred_region
        %s1108 = smul.u32 4, %s21
      $region67: #{_lambda_.3} parent=51 // pred_fallthru
        _
      // Predicated region
      $region68: #{_lambda_.3} parent=51 // pred_check
        %p1109 = pneg %p259
      $region69: #{_lambda_.3} parent=51 // pred_check_branch
        %1111 = sbr.rel (%p1109) target = $region71
      $region70: #{_lambda_.3} parent=51 // pred_region
        %s1112 = ssub.s32 1, %s21
        %s1113 = smul.u32 4, %s1112
      $region71: #{_lambda_.3} parent=51 // pred_fallthru
        _
    $region52: #{_lambda_.3} parent=5 // pred_fallthru
      _
    %p1114 = scmp.le.s32.totalorder 2, %s16
    // Predicated region
    $region72: #{_lambda_.3} parent=5 // pred_check
      %p1115 = pneg %p1114
    $region73: #{_lambda_.3} parent=5 // pred_check_branch
      %1117 = sbr.rel (%p1115) target = $region75
    $region74: #{_lambda_.3} parent=5 // pred_region
      %s1118 = ssub.s32 %s16, 2
      // Predicated region
      $region76: #{_lambda_.3} parent=74 // pred_check
        %p1119 = pneg %p237
      $region77: #{_lambda_.3} parent=74 // pred_check_branch
        %1121 = sbr.rel (%p1119) target = $region79
      $region78: #{_lambda_.3} parent=74 // pred_region
        %s1122 = smul.u32 4, %s22
        %p1123 = scmp.lt.s32.totalorder %s1122, 7
        %s1124 = scalar_select %p1123, %s1122, 7
        %s1125 = scalar_lea.vmem %s8, %s1124
      $region79: #{_lambda_.3} parent=74 // pred_fallthru
        _
      // Predicated region
      $region80: #{_lambda_.3} parent=74 // pred_check
        %p1126 = pneg %p265
      $region81: #{_lambda_.3} parent=74 // pred_check_branch
        %1128 = sbr.rel (%p1126) target = $region83
      $region82: #{_lambda_.3} parent=74 // pred_region
        %s1129 = ssub.s32 1, %s22
        %s1130 = smul.u32 4, %s1129
        %p1131 = scmp.lt.s32.totalorder %s1130, 7
        %s1132 = scalar_select %p1131, %s1130, 7
        %s1133 = scalar_lea.vmem %s9, %s1132
      $region83: #{_lambda_.3} parent=74 // pred_fallthru
        _
    $region75: #{_lambda_.3} parent=5 // pred_fallthru
      _
  $region6: #{_lambda_.3} parent=0 // loop_footer
    %s20 = sadd.s32 1, %s16
  $region7: #{_lambda_.3} parent=0 // loop_footer_branch
    %15 = sbr.rel target = $region3
  $region8: #{_lambda_.3} parent=0 // loop_exit
    _

// kernel: _lambda_.4
$region0: #{_lambda_.4}
  #allocation0 [shape = 'u32[]', space=smem, size = 0x4, offset = 0x4, fixed_abs, tag = 'smem constant byte address 0x4 - core index']
  #allocation1 [shape = 'u32[144,128]{1,0:T(1,128)}', space=vmem, size = 0x12000, scoped, tag = 'internal scratch']
  #allocation2 [shape = 'bf16[4,2,64]{2,1,0:T(2,128)(2,1)}', space=vmem, size = 0x800, scoped, tag = 'scratch operand']
  #allocation3 [shape = 'bf16[4,2,64]{2,1,0:T(2,128)(2,1)}', space=vmem, size = 0x800, scoped, tag = 'scratch operand']
  #allocation4 [shape = 'f32[2,2,16]{2,1,0:T(2,128)}', space=vmem, size = 0x800, scoped, tag = 'scratch operand']
  #allocation5 [shape = 'f32[2,2,16]{2,1,0:T(2,128)}', space=vmem, size = 0x800, scoped, tag = 'scratch operand']
  %s0 = inlined_call_operand.vmem [shape: bf16[8,2,16], index: 0, kind: input, shape index: {}, may-alias: {0,2}]
  %s1 = inlined_call_operand.vmem [shape: bf16[8,2,16], index: 1, kind: input, shape index: {}, may-alias: {1,3}]
  %s2 = inlined_call_operand.vmem [shape: bf16[8,2,16], index: 2, kind: input, shape index: {}, may-alias: {0,2}]
  %s3 = inlined_call_operand.vmem [shape: bf16[8,2,16], index: 3, kind: input, shape index: {}, may-alias: {1,3}]
  %s4 = inlined_call_operand.vmem [shape: f32[2,16,64], index: 4, kind: input, shape index: {}]
  %s5 = inlined_call_operand.vmem [shape: f32[2,16,64], index: 5, kind: input, shape index: {}]
  %s6 = inlined_call_operand.vmem [shape: f32[2,16,64], index: 6, kind: input, shape index: {}]
  %s7 = inlined_call_operand.vmem [shape: f32[2,1,64], index: 7, kind: input, shape index: {}]
  %s8 = inlined_call_operand.vmem [shape: f32[8,2,16], index: 8, kind: output, shape index: {0}]
  %s9 = inlined_call_operand.vmem [shape: f32[8,2,16], index: 9, kind: output, shape index: {1}]
  %10 = xla_tuple %s8, %s9
  %s11 = sld [smem:[#allocation0]]
  $region84: #{_lambda_.4} parent=0
    _
  %s13 = ssub.s32 1, %s11
  %s14 = scalar_select 0, %s13, %s11
  loop: start=0, step=1, limit=4
  $region2: #{_lambda_.4} parent=0 // loop_pre_header
    _
  $region3: #{_lambda_.4} parent=0 // loop_header
    %s16 = sphi 0, %s20
    %p17 = scmp.ge.s32.totalorder %s16, 4
    %s26 = sphi 0, %s28
    %s29 = sphi 0, %s26
    %s30 = sphi 0, %s29
    %s46 = sphi 0, %s30
    %s52 = sphi 0, %s54
    %s55 = sphi 0, %s52
    %s56 = sphi 0, %s55
    %s72 = sphi 0, %s56
    %s80 = sphi 0, %s82
    %s83 = sphi 0, %s80
    %s84 = sphi 0, %s83
    %s100 = sphi 0, %s84
    %s108 = sphi 0, %s110
    %s111 = sphi 0, %s108
    %s112 = sphi 0, %s111
    %s128 = sphi 0, %s112
    %s132 = sphi 0, %s132
    %s134 = sphi 0, %s132
    %s135 = sphi 0, %s134
    %s149 = sphi 0, %s135
    %s153 = sphi 0, %s153
    %s155 = sphi 0, %s153
    %s156 = sphi 0, %s155
    %s170 = sphi 0, %s156
    %s174 = sphi 0, %s174
    %s176 = sphi 0, %s174
    %s177 = sphi 0, %s176
    %s191 = sphi 0, %s177
    %s195 = sphi 0, %s195
    %s197 = sphi 0, %s195
    %s198 = sphi 0, %s197
    %s212 = sphi 0, %s198
    %s218 = sphi 0, %s220
    %s221 = sphi 0, %s218
    %s222 = sphi 0, %s221
    %s238 = sphi 0, %s222
    %s246 = sphi 0, %s248
    %s249 = sphi 0, %s246
    %s250 = sphi 0, %s249
    %s266 = sphi 0, %s250
  $region4: #{_lambda_.4} parent=0 // loop_header_branch
    %19 = sbr.rel (%p17) target = $region8
  $region5: #{_lambda_.4} parent=0 // loop_body
    %s21 = ssub.s32 %s16, 1
    %s22 = ssub.s32 %s16, 2
    %s23 = sadd.s32 %s16, 1
    %s24 = ssub.s32 %s16, %s23
    %p25 = scmp.eq.s32.totalorder %s24, 0
    %s27 = sadd.s32 %s26, 1
    %s28 = scalar_select %p25, %s26, %s27
    %p31 = pneg %p25
    %p32 = scmp.eq.s32.totalorder %s16, 1
    %p33 = por %p31, %p32
    %p34 = scmp.ne.s32.totalorder %s26, %s29
    %p35 = scmp.eq.s32.totalorder %s16, 0
    %p36 = por %p34, %p35
    %p37 = scmp.ne.s32.totalorder %s26, %s29
    %p38 = scmp.eq.s32.totalorder %s21, 1
    %p39 = por %p37, %p38
    %p40 = scmp.ne.s32.totalorder %s29, %s30
    %p41 = scmp.eq.s32.totalorder %s21, 0
    %p42 = por %p40, %p41
    %p43 = scmp.ne.s32.totalorder %s29, %s30
    %p44 = scmp.eq.s32.totalorder %s22, 1
    %p45 = por %p43, %p44
    %p47 = scmp.ne.s32.totalorder %s30, %s46
    %p48 = scmp.eq.s32.totalorder %s22, 0
    %p49 = por %p47, %p48
    %s50 = ssub.s32 %s16, %s23
    %p51 = scmp.eq.s32.totalorder %s50, 0
    %s53 = sadd.s32 %s52, 1
    %s54 = scalar_select %p51, %s52, %s53
    %p57 = pneg %p51
    %p58 = scmp.eq.s32.totalorder %s16, 1
    %p59 = por %p57, %p58
    %p60 = scmp.ne.s32.totalorder %s52, %s55
    %p61 = scmp.eq.s32.totalorder %s16, 0
    %p62 = por %p60, %p61
    %p63 = scmp.ne.s32.totalorder %s52, %s55
    %p64 = scmp.eq.s32.totalorder %s21, 1
    %p65 = por %p63, %p64
    %p66 = scmp.ne.s32.totalorder %s55, %s56
    %p67 = scmp.eq.s32.totalorder %s21, 0
    %p68 = por %p66, %p67
    %p69 = scmp.ne.s32.totalorder %s55, %s56
    %p70 = scmp.eq.s32.totalorder %s22, 1
    %p71 = por %p69, %p70
    %p73 = scmp.ne.s32.totalorder %s56, %s72
    %p74 = scmp.eq.s32.totalorder %s22, 0
    %p75 = por %p73, %p74
    %s76 = ssub.s32 1, %s16
    %s77 = ssub.s32 1, %s23
    %s78 = ssub.s32 %s76, %s77
    %p79 = scmp.eq.s32.totalorder %s78, 0
    %s81 = sadd.s32 %s80, 1
    %s82 = scalar_select %p79, %s80, %s81
    %p85 = pneg %p79
    %p86 = scmp.eq.s32.totalorder %s16, 1
    %p87 = por %p85, %p86
    %p88 = scmp.ne.s32.totalorder %s80, %s83
    %p89 = scmp.eq.s32.totalorder %s16, 0
    %p90 = por %p88, %p89
    %p91 = scmp.ne.s32.totalorder %s80, %s83
    %p92 = scmp.eq.s32.totalorder %s21, 1
    %p93 = por %p91, %p92
    %p94 = scmp.ne.s32.totalorder %s83, %s84
    %p95 = scmp.eq.s32.totalorder %s21, 0
    %p96 = por %p94, %p95
    %p97 = scmp.ne.s32.totalorder %s83, %s84
    %p98 = scmp.eq.s32.totalorder %s22, 1
    %p99 = por %p97, %p98
    %p101 = scmp.ne.s32.totalorder %s84, %s100
    %p102 = scmp.eq.s32.totalorder %s22, 0
    %p103 = por %p101, %p102
    %s104 = ssub.s32 1, %s16
    %s105 = ssub.s32 1, %s23
    %s106 = ssub.s32 %s104, %s105
    %p107 = scmp.eq.s32.totalorder %s106, 0
    %s109 = sadd.s32 %s108, 1
    %s110 = scalar_select %p107, %s108, %s109
    %p113 = pneg %p107
    %p114 = scmp.eq.s32.totalorder %s16, 1
    %p115 = por %p113, %p114
    %p116 = scmp.ne.s32.totalorder %s108, %s111
    %p117 = scmp.eq.s32.totalorder %s16, 0
    %p118 = por %p116, %p117
    %p119 = scmp.ne.s32.totalorder %s108, %s111
    %p120 = scmp.eq.s32.totalorder %s21, 1
    %p121 = por %p119, %p120
    %p122 = scmp.ne.s32.totalorder %s111, %s112
    %p123 = scmp.eq.s32.totalorder %s21, 0
    %p124 = por %p122, %p123
    %p125 = scmp.ne.s32.totalorder %s111, %s112
    %p126 = scmp.eq.s32.totalorder %s22, 1
    %p127 = por %p125, %p126
    %p129 = scmp.ne.s32.totalorder %s112, %s128
    %p130 = scmp.eq.s32.totalorder %s22, 0
    %p131 = por %p129, %p130
    %s133 = sadd.s32 %s132, 1
    %p136 = scmp.eq.s32.totalorder %s16, 1
    %p137 = scmp.ne.s32.totalorder %s132, %s134
    %p138 = scmp.eq.s32.totalorder %s16, 0
    %p139 = por %p137, %p138
    %p140 = scmp.ne.s32.totalorder %s132, %s134
    %p141 = scmp.eq.s32.totalorder %s21, 1
    %p142 = por %p140, %p141
    %p143 = scmp.ne.s32.totalorder %s134, %s135
    %p144 = scmp.eq.s32.totalorder %s21, 0
    %p145 = por %p143, %p144
    %p146 = scmp.ne.s32.totalorder %s134, %s135
    %p147 = scmp.eq.s32.totalorder %s22, 1
    %p148 = por %p146, %p147
    %p150 = scmp.ne.s32.totalorder %s135, %s149
    %p151 = scmp.eq.s32.totalorder %s22, 0
    %p152 = por %p150, %p151
    %s154 = sadd.s32 %s153, 1
    %p157 = scmp.eq.s32.totalorder %s16, 1
    %p158 = scmp.ne.s32.totalorder %s153, %s155
    %p159 = scmp.eq.s32.totalorder %s16, 0
    %p160 = por %p158, %p159
    %p161 = scmp.ne.s32.totalorder %s153, %s155
    %p162 = scmp.eq.s32.totalorder %s21, 1
    %p163 = por %p161, %p162
    %p164 = scmp.ne.s32.totalorder %s155, %s156
    %p165 = scmp.eq.s32.totalorder %s21, 0
    %p166 = por %p164, %p165
    %p167 = scmp.ne.s32.totalorder %s155, %s156
    %p168 = scmp.eq.s32.totalorder %s22, 1
    %p169 = por %p167, %p168
    %p171 = scmp.ne.s32.totalorder %s156, %s170
    %p172 = scmp.eq.s32.totalorder %s22, 0
    %p173 = por %p171, %p172
    %s175 = sadd.s32 %s174, 1
    %p178 = scmp.eq.s32.totalorder %s16, 1
    %p179 = scmp.ne.s32.totalorder %s174, %s176
    %p180 = scmp.eq.s32.totalorder %s16, 0
    %p181 = por %p179, %p180
    %p182 = scmp.ne.s32.totalorder %s174, %s176
    %p183 = scmp.eq.s32.totalorder %s21, 1
    %p184 = por %p182, %p183
    %p185 = scmp.ne.s32.totalorder %s176, %s177
    %p186 = scmp.eq.s32.totalorder %s21, 0
    %p187 = por %p185, %p186
    %p188 = scmp.ne.s32.totalorder %s176, %s177
    %p189 = scmp.eq.s32.totalorder %s22, 1
    %p190 = por %p188, %p189
    %p192 = scmp.ne.s32.totalorder %s177, %s191
    %p193 = scmp.eq.s32.totalorder %s22, 0
    %p194 = por %p192, %p193
    %s196 = sadd.s32 %s195, 1
    %p199 = scmp.eq.s32.totalorder %s16, 1
    %p200 = scmp.ne.s32.totalorder %s195, %s197
    %p201 = scmp.eq.s32.totalorder %s16, 0
    %p202 = por %p200, %p201
    %p203 = scmp.ne.s32.totalorder %s195, %s197
    %p204 = scmp.eq.s32.totalorder %s21, 1
    %p205 = por %p203, %p204
    %p206 = scmp.ne.s32.totalorder %s197, %s198
    %p207 = scmp.eq.s32.totalorder %s21, 0
    %p208 = por %p206, %p207
    %p209 = scmp.ne.s32.totalorder %s197, %s198
    %p210 = scmp.eq.s32.totalorder %s22, 1
    %p211 = por %p209, %p210
    %p213 = scmp.ne.s32.totalorder %s198, %s212
    %p214 = scmp.eq.s32.totalorder %s22, 0
    %p215 = por %p213, %p214
    %s216 = ssub.s32 %s16, %s23
    %p217 = scmp.eq.s32.totalorder %s216, 0
    %s219 = sadd.s32 %s218, 1
    %s220 = scalar_select %p217, %s218, %s219
    %p223 = pneg %p217
    %p224 = scmp.eq.s32.totalorder %s16, 1
    %p225 = por %p223, %p224
    %p226 = scmp.ne.s32.totalorder %s218, %s221
    %p227 = scmp.eq.s32.totalorder %s16, 0
    %p228 = por %p226, %p227
    %p229 = scmp.ne.s32.totalorder %s218, %s221
    %p230 = scmp.eq.s32.totalorder %s21, 1
    %p231 = por %p229, %p230
    %p232 = scmp.ne.s32.totalorder %s221, %s222
    %p233 = scmp.eq.s32.totalorder %s21, 0
    %p234 = por %p232, %p233
    %p235 = scmp.ne.s32.totalorder %s221, %s222
    %p236 = scmp.eq.s32.totalorder %s22, 1
    %p237 = por %p235, %p236
    %p239 = scmp.ne.s32.totalorder %s222, %s238
    %p240 = scmp.eq.s32.totalorder %s22, 0
    %p241 = por %p239, %p240
    %s242 = ssub.s32 1, %s16
    %s243 = ssub.s32 1, %s23
    %s244 = ssub.s32 %s242, %s243
    %p245 = scmp.eq.s32.totalorder %s244, 0
    %s247 = sadd.s32 %s246, 1
    %s248 = scalar_select %p245, %s246, %s247
    %p251 = pneg %p245
    %p252 = scmp.eq.s32.totalorder %s16, 1
    %p253 = por %p251, %p252
    %p254 = scmp.ne.s32.totalorder %s246, %s249
    %p255 = scmp.eq.s32.totalorder %s16, 0
    %p256 = por %p254, %p255
    %p257 = scmp.ne.s32.totalorder %s246, %s249
    %p258 = scmp.eq.s32.totalorder %s21, 1
    %p259 = por %p257, %p258
    %p260 = scmp.ne.s32.totalorder %s249, %s250
    %p261 = scmp.eq.s32.totalorder %s21, 0
    %p262 = por %p260, %p261
    %p263 = scmp.ne.s32.totalorder %s249, %s250
    %p264 = scmp.eq.s32.totalorder %s22, 1
    %p265 = por %p263, %p264
    %p267 = scmp.ne.s32.totalorder %s250, %s266
    %p268 = scmp.eq.s32.totalorder %s22, 0
    %p269 = por %p267, %p268
    %p270 = scmp.le.s32.totalorder 1, %s16
    %p271 = scmp.lt.s32.totalorder %s16, 3
    %p272 = pnand %p270, %p271
    %p273 = pneg %p272
    // Predicated region
    $region9: #{_lambda_.4} parent=5 // pred_check
      _
    $region10: #{_lambda_.4} parent=5 // pred_check_branch
      %275 = sbr.rel (%p272) target = $region12
    $region11: #{_lambda_.4} parent=5 // pred_region
      %s276 = ssub.s32 %s16, 1
      // Predicated region
      $region13: #{_lambda_.4} parent=11 // pred_check
        %p277 = pneg %p145
      $region14: #{_lambda_.4} parent=11 // pred_check_branch
        %279 = sbr.rel (%p277) target = $region16
      $region15: #{_lambda_.4} parent=11 // pred_region
        _
      $region16: #{_lambda_.4} parent=11 // pred_fallthru
        _
      // Predicated region
      $region17: #{_lambda_.4} parent=11 // pred_check
        %p280 = pneg %p166
      $region18: #{_lambda_.4} parent=11 // pred_check_branch
        %282 = sbr.rel (%p280) target = $region20
      $region19: #{_lambda_.4} parent=11 // pred_region
        _
      $region20: #{_lambda_.4} parent=11 // pred_fallthru
        _
      // Predicated region
      $region21: #{_lambda_.4} parent=11 // pred_check
        %p283 = pneg %p187
      $region22: #{_lambda_.4} parent=11 // pred_check_branch
        %285 = sbr.rel (%p283) target = $region24
      $region23: #{_lambda_.4} parent=11 // pred_region
        _
      $region24: #{_lambda_.4} parent=11 // pred_fallthru
        _
      // Predicated region
      $region25: #{_lambda_.4} parent=11 // pred_check
        %p286 = pneg %p208
      $region26: #{_lambda_.4} parent=11 // pred_check_branch
        %288 = sbr.rel (%p286) target = $region28
      $region27: #{_lambda_.4} parent=11 // pred_region
        _
      $region28: #{_lambda_.4} parent=11 // pred_fallthru
        _
    $region12: #{_lambda_.4} parent=5 // pred_fallthru
      _
    %p289 = scmp.lt.s32.totalorder %s16, 2
    // Predicated region
    $region29: #{_lambda_.4} parent=5 // pred_check
      %p290 = pneg %p289
    $region30: #{_lambda_.4} parent=5 // pred_check_branch
      %292 = sbr.rel (%p290) target = $region32
    $region31: #{_lambda_.4} parent=5 // pred_region
      // Predicated region
      $region33: #{_lambda_.4} parent=31 // pred_check
        %p293 = pneg %p36
      $region34: #{_lambda_.4} parent=31 // pred_check_branch
        %295 = sbr.rel (%p293) target = $region36
      $region35: #{_lambda_.4} parent=31 // pred_region
        %s296 = smul.u32 4, %s16
        %p297 = scmp.lt.s32.totalorder %s296, 7
        %s298 = scalar_select %p297, %s296, 7
        %s299 = scalar_lea.vmem %s0, %s298
        %s300 = smul.u32 4, %s16
      $region36: #{_lambda_.4} parent=31 // pred_fallthru
        _
      // Predicated region
      $region37: #{_lambda_.4} parent=31 // pred_check
        %p301 = pneg %p62
      $region38: #{_lambda_.4} parent=31 // pred_check_branch
        %303 = sbr.rel (%p301) target = $region40
      $region39: #{_lambda_.4} parent=31 // pred_region
        %s304 = smul.u32 4, %s16
        %p305 = scmp.lt.s32.totalorder %s304, 7
        %s306 = scalar_select %p305, %s304, 7
        %s307 = scalar_lea.vmem %s1, %s306
        %s308 = smul.u32 4, %s16
      $region40: #{_lambda_.4} parent=31 // pred_fallthru
        _
      // Predicated region
      $region41: #{_lambda_.4} parent=31 // pred_check
        %p309 = pneg %p90
      $region42: #{_lambda_.4} parent=31 // pred_check_branch
        %311 = sbr.rel (%p309) target = $region44
      $region43: #{_lambda_.4} parent=31 // pred_region
        %s312 = ssub.s32 1, %s16
        %s313 = smul.u32 4, %s312
        %p314 = scmp.lt.s32.totalorder %s313, 7
        %s315 = scalar_select %p314, %s313, 7
        %s316 = scalar_lea.vmem %s2, %s315
        %s317 = ssub.s32 1, %s16
        %s318 = smul.u32 4, %s317
      $region44: #{_lambda_.4} parent=31 // pred_fallthru
        _
      // Predicated region
      $region45: #{_lambda_.4} parent=31 // pred_check
        %p319 = pneg %p118
      $region46: #{_lambda_.4} parent=31 // pred_check_branch
        %321 = sbr.rel (%p319) target = $region48
      $region47: #{_lambda_.4} parent=31 // pred_region
        %s322 = ssub.s32 1, %s16
        %s323 = smul.u32 4, %s322
        %p324 = scmp.lt.s32.totalorder %s323, 7
        %s325 = scalar_select %p324, %s323, 7
        %s326 = scalar_lea.vmem %s3, %s325
        %s327 = ssub.s32 1, %s16
        %s328 = smul.u32 4, %s327
      $region48: #{_lambda_.4} parent=31 // pred_fallthru
        _
    $region32: #{_lambda_.4} parent=5 // pred_fallthru
      _
    %p329 = scmp.le.s32.totalorder 1, %s16
    %p330 = scmp.lt.s32.totalorder %s16, 3
    %p331 = pnand %p329, %p330
    %p332 = pneg %p331
    // Predicated region
    $region49: #{_lambda_.4} parent=5 // pred_check
      _
    $region50: #{_lambda_.4} parent=5 // pred_check_branch
      %334 = sbr.rel (%p331) target = $region52
    $region51: #{_lambda_.4} parent=5 // pred_region
      %s335 = ssub.s32 %s16, 1
      %s336 = smul.u32 4, %s21
      %p337 = scmp.lt.s32.totalorder %s336, 7
      %s338 = scalar_select %p337, %s336, 7
      %s339 = scalar_lea.vmem %s0, %s338
      %p340 = pneg %p42
      %p341 = pneg %p39
      %s342 = smul.u32 4, %s21
      %p343 = scmp.lt.s32.totalorder %s342, 7
      %s344 = scalar_select %p343, %s342, 7
      %s345 = scalar_lea.vmem %s1, %s344
      %p346 = pneg %p68
      %p347 = pneg %p65
      %s348 = ssub.s32 1, %s21
      %s349 = smul.u32 4, %s348
      %p350 = scmp.lt.s32.totalorder %s349, 7
      %s351 = scalar_select %p350, %s349, 7
      %s352 = scalar_lea.vmem %s2, %s351
      %p353 = pneg %p96
      %p354 = pneg %p93
      %s355 = ssub.s32 1, %s21
      %s356 = smul.u32 4, %s355
      %p357 = scmp.lt.s32.totalorder %s356, 7
      %s358 = scalar_select %p357, %s356, 7
      %s359 = scalar_lea.vmem %s3, %s358
      %p360 = pneg %p124
      %p361 = pneg %p121
      %p362 = pneg %p145
      %p363 = pneg %p142
      %p364 = pneg %p166
      %p365 = pneg %p163
      %p366 = pneg %p187
      %p367 = pneg %p184
      %p368 = pneg %p208
      %p369 = pneg %p205
      %p370 = pneg %p234
      %p371 = pneg %p231
      %s372 = smul.u32 4, %s21
      %p373 = scmp.lt.s32.totalorder %s372, 7
      %s374 = scalar_select %p373, %s372, 7
      %s375 = smul.addr %s374, 2
      %s376 = scalar_lea.vmem %s8, %s375
      %p377 = pneg %p262
      %p378 = pneg %p259
      %s379 = ssub.s32 1, %s21
      %s380 = smul.u32 4, %s379
      %p381 = scmp.lt.s32.totalorder %s380, 7
      %s382 = scalar_select %p381, %s380, 7
      %s383 = smul.addr %s382, 2
      %s384 = scalar_lea.vmem %s9, %s383
      %s385 = smul.u32 4, %s21
      %p386 = scmp.lt.s32.totalorder %s385, 7
      %s387 = scalar_select %p386, %s385, 7
      %s388 = scalar_lea.vmem %s0, %s387
      %s389 = smul.u32 4, %s21
      %s390 = smul.u32 4, %s21
      %p391 = scmp.lt.s32.totalorder %s390, 7
      %s392 = scalar_select %p391, %s390, 7
      %s393 = scalar_lea.vmem %s1, %s392
      %s394 = smul.u32 4, %s21
      %s395 = ssub.s32 1, %s21
      %s396 = smul.u32 4, %s395
      %p397 = scmp.lt.s32.totalorder %s396, 7
      %s398 = scalar_select %p397, %s396, 7
      %s399 = scalar_lea.vmem %s2, %s398
      %s400 = ssub.s32 1, %s21
      %s401 = smul.u32 4, %s400
      %s402 = ssub.s32 1, %s21
      %s403 = smul.u32 4, %s402
      %p404 = scmp.lt.s32.totalorder %s403, 7
      %s405 = scalar_select %p404, %s403, 7
      %s406 = scalar_lea.vmem %s3, %s405
      %s407 = ssub.s32 1, %s21
      %s408 = smul.u32 4, %s407
      %s409 = smul.u32 4, %s21
      %p410 = scmp.lt.s32.totalorder %s409, 7
      %s411 = scalar_select %p410, %s409, 7
      %s412 = smul.addr %s411, 2
      %s413 = scalar_lea.vmem %s8, %s412
      %s414 = smul.u32 4, %s21
      %s415 = ssub.s32 1, %s21
      %s416 = smul.u32 4, %s415
      %p417 = scmp.lt.s32.totalorder %s416, 7
      %s418 = scalar_select %p417, %s416, 7
      %s419 = smul.addr %s418, 2
      %s420 = scalar_lea.vmem %s9, %s419
      %s421 = ssub.s32 1, %s21
      %s422 = smul.u32 4, %s421
      %p424 = scmp.eq.s32.totalorder %s21, 0
      // Predicated region
      $region53: #{_lambda_.4} parent=51 // pred_check
        %p425 = pneg %p424
      $region54: #{_lambda_.4} parent=51 // pred_check_branch
        %427 = sbr.rel (%p425) target = $region56
      $region55: #{_lambda_.4} parent=51 // pred_region
        %vm428 = vcmask 123904
        %429 = vst.msk [vmem:[#allocation4] sm:$0x3] %vm428, 0.0
        %430 = vst.msk [vmem:[#allocation4 + $0x2] sm:$0x3] %vm428, 0.0
        %431 = vst.msk [vmem:[#allocation5] sm:$0x3] %vm428, 0.0
        %432 = vst.msk [vmem:[#allocation5 + $0x2] sm:$0x3] %vm428, 0.0
      $region56: #{_lambda_.4} parent=51 // pred_fallthru
        _
      %v433 = vld [vmem:[%s388] sm:$0x1]
      %v434 = vld [vmem:[%s388 + $0x1] sm:$0x1]
      %v435 = vld [vmem:[%s388 + $0x2] sm:$0x1]
      %v436 = vld [vmem:[%s388 + $0x3] sm:$0x1]
      %v437 = vld [vmem:[%s393] sm:$0x1]
      %v438 = vld [vmem:[%s393 + $0x1] sm:$0x1]
      %v439 = vld [vmem:[%s393 + $0x2] sm:$0x1]
      %v440 = vld [vmem:[%s393 + $0x3] sm:$0x1]
      %v441 = vld [vmem:[%s4] sm:$0xff]
      %v442 = vld [vmem:[%s4 + $0x8] sm:$0xff]
      %v443 = vpack.c.bf16 %v442, %v441
      %v444 = vld [vmem:[%s5] sm:$0xff]
      %v445 = vld [vmem:[%s5 + $0x8] sm:$0xff]
      %v446 = vpack.c.bf16 %v445, %v444
      %v451 = vcombine.low %v437, %v438
      %v452 = vcombine.low %v439, %v440
      %v454 = vunpack.c.l.s4 1966171168
      %v455 = vunpack.c.0.s8 %v454
      %v456 = vlaneseq
      %v457 = vshrl.u32 %v456, 7
      %v458 = vsub.s32 %v455, %v457
      %v459 = vrot.slane %v451, %v458
      %v461 = vunpack.c.l.s4 1966171168
      %v462 = vunpack.c.0.s8 %v461
      %v463 = vlaneseq
      %v464 = vshrl.u32 %v463, 7
      %v465 = vsub.s32 %v462, %v464
      %v466 = vrot.slane %v452, %v465
      %v467 = vcombine.low %v459, %v466
      %v469 = vunpack.c.l.s4 1966171168
      %v470 = vunpack.c.0.s8 %v469
      %v471 = vlaneseq
      %v472 = vshrl.u32 %v471, 7
      %v473 = vsub.s32 %v470, %v472
      %v474 = vrot.slane %v467, %v473
      %vm475 = vcmask 130048
      %v477 = vsel %vm475, %v474, 0
      %479 = vmatprep.subr.bf16.mxu0 0
      %480 = vmatpush1.bf16.msra.mxu0 0
      %481 = vmatprep.subr.bf16.mxu0 0
      %482 = vmatpush1.bf16.msra.mxu0 0
      %483 = vmatprep.subr.bf16.mxu0 0
      %484 = vmatpush1.bf16.msra.mxu0 0
      %485 = vmatprep.subr.bf16.mxu0 0
      %486 = vmatpush1.bf16.msra.mxu0 0
      %487 = vmatprep.subr.bf16.mxu0 0
      %488 = vmatpush1.bf16.msra.mxu0 0
      %489 = vmatprep.subr.bf16.mxu0 0
      %490 = vmatpush1.bf16.msra.mxu0 0
      %491 = vmatprep.subr.bf16.mxu0 0
      %492 = vmatpush1.bf16.msra.mxu0 0
      %493 = vmatprep.subr.bf16.mxu0 0
      %494 = vmatpush1.bf16.msra.mxu0 %v446
      %495 = vmatprep.subr.bf16.mxu0 0
      %496 = vmatpush2.bf16.msra.mxu0 0
      %497 = vmatprep.subr.bf16.mxu0 0
      %498 = vmatpush2.bf16.msra.mxu0 0
      %499 = vmatprep.subr.bf16.mxu0 0
      %500 = vmatpush2.bf16.msra.mxu0 0
      %501 = vmatprep.subr.bf16.mxu0 0
      %502 = vmatpush2.bf16.msra.mxu0 0
      %503 = vmatprep.subr.bf16.mxu0 0
      %504 = vmatpush2.bf16.msra.mxu0 0
      %505 = vmatprep.subr.bf16.mxu0 0
      %506 = vmatpush2.bf16.msra.mxu0 0
      %507 = vmatprep.subr.bf16.mxu0 0
      %508 = vmatpush2.bf16.msra.mxu0 0
      %509 = vmatprep.subr.bf16.mxu0 0
      %510 = vmatpush2.bf16.msra.mxu0 0
      %511 = vmatprep.mubr.bf16.mxu0 0
      %512 = vmatmul.mubr.bf16.gmra.mxu0 %v477
      %v513 = vpop.f32.mrf.mxu0
      %v514 = vadd.f32 0.0, %v513
      %v515 = vpop.f32.mrf.mxu0
      %v516 = vpop.f32.mrf.mxu0
      %v517 = vpop.f32.mrf.mxu0
      %518 = vdwg.mxu0
      %v523 = vcombine.low %v433, %v434
      %v524 = vcombine.low %v435, %v436
      %v526 = vunpack.c.l.s4 1966171168
      %v527 = vunpack.c.0.s8 %v526
      %v528 = vlaneseq
      %v529 = vshrl.u32 %v528, 7
      %v530 = vsub.s32 %v527, %v529
      %v531 = vrot.slane %v523, %v530
      %v533 = vunpack.c.l.s4 1966171168
      %v534 = vunpack.c.0.s8 %v533
      %v535 = vlaneseq
      %v536 = vshrl.u32 %v535, 7
      %v537 = vsub.s32 %v534, %v536
      %v538 = vrot.slane %v524, %v537
      %v539 = vcombine.low %v531, %v538
      %v541 = vunpack.c.l.s4 1966171168
      %v542 = vunpack.c.0.s8 %v541
      %v543 = vlaneseq
      %v544 = vshrl.u32 %v543, 7
      %v545 = vsub.s32 %v542, %v544
      %v546 = vrot.slane %v539, %v545
      %v548 = vsel %vm475, %v546, 0
      %550 = vmatprep.subr.bf16.mxu0 0
      %551 = vmatpush1.bf16.msra.mxu0 0
      %552 = vmatprep.subr.bf16.mxu0 0
      %553 = vmatpush1.bf16.msra.mxu0 0
      %554 = vmatprep.subr.bf16.mxu0 0
      %555 = vmatpush1.bf16.msra.mxu0 0
      %556 = vmatprep.subr.bf16.mxu0 0
      %557 = vmatpush1.bf16.msra.mxu0 0
      %558 = vmatprep.subr.bf16.mxu0 0
      %559 = vmatpush1.bf16.msra.mxu0 0
      %560 = vmatprep.subr.bf16.mxu0 0
      %561 = vmatpush1.bf16.msra.mxu0 0
      %562 = vmatprep.subr.bf16.mxu0 0
      %563 = vmatpush1.bf16.msra.mxu0 0
      %564 = vmatprep.subr.bf16.mxu0 0
      %565 = vmatpush1.bf16.msra.mxu0 %v443
      %566 = vmatprep.subr.bf16.mxu0 0
      %567 = vmatpush2.bf16.msra.mxu0 0
      %568 = vmatprep.subr.bf16.mxu0 0
      %569 = vmatpush2.bf16.msra.mxu0 0
      %570 = vmatprep.subr.bf16.mxu0 0
      %571 = vmatpush2.bf16.msra.mxu0 0
      %572 = vmatprep.subr.bf16.mxu0 0
      %573 = vmatpush2.bf16.msra.mxu0 0
      %574 = vmatprep.subr.bf16.mxu0 0
      %575 = vmatpush2.bf16.msra.mxu0 0
      %576 = vmatprep.subr.bf16.mxu0 0
      %577 = vmatpush2.bf16.msra.mxu0 0
      %578 = vmatprep.subr.bf16.mxu0 0
      %579 = vmatpush2.bf16.msra.mxu0 0
      %580 = vmatprep.subr.bf16.mxu0 0
      %581 = vmatpush2.bf16.msra.mxu0 0
      %582 = vmatprep.mubr.bf16.mxu0 0
      %583 = vmatmul.mubr.bf16.gmra.mxu0 %v548
      %v584 = vpop.f32.mrf.mxu0
      %v585 = vadd.f32 %v514, %v584
      %v586 = vpop.f32.mrf.mxu0
      %v587 = vpop.f32.mrf.mxu0
      %v588 = vpop.f32.mrf.mxu0
      %589 = vdwg.mxu0
      %v590 = vld [vmem:[%s7] sm:$0x1]
      %v592 = vlaneseq
      %v593 = vshrl.u32 %v592, 7
      %v594 = vsub.s32 0, %v593
      %v595 = vrot.slane %v590, %v594
      %v597 = vadd.f32 %v585, %v595
      %v599 = vcombine.high %v597, %v597
      %v601 = vunpack.c.l.s4 1983009808
      %v602 = vunpack.c.0.s8 %v601
      %v603 = vlaneseq
      %v604 = vshrl.u32 %v603, 7
      %v605 = vsub.s32 %v602, %v604
      %v606 = vrot.slane %v597, %v605
      %v608 = vunpack.c.l.s4 1983009808
      %v609 = vunpack.c.0.s8 %v608
      %v610 = vlaneseq
      %v611 = vshrl.u32 %v610, 7
      %v612 = vsub.s32 %v609, %v611
      %v613 = vrot.slane %v599, %v612
      %v614 = vcombine.high %v606, %v606
      %v615 = vcombine.high %v613, %v613
      %v620 = vpack.c.bf16 %v606, %v606
      %v621 = vpack.c.bf16 %v614, %v614
      %v622 = vpack.c.bf16 %v613, %v613
      %v623 = vpack.c.bf16 %v615, %v615
      %vm624 = vcmask 516096
      %625 = vst.msk [vmem:[#allocation2] sm:$0x1] %vm624, %v620
      %626 = vst.msk [vmem:[#allocation2 + $0x1] sm:$0x1] %vm624, %v621
      %627 = vst.msk [vmem:[#allocation2 + $0x2] sm:$0x1] %vm624, %v622
      %628 = vst.msk [vmem:[#allocation2 + $0x3] sm:$0x1] %vm624, %v623
      %v629 = vld [vmem:[%s399] sm:$0x1]
      %v630 = vld [vmem:[%s399 + $0x1] sm:$0x1]
      %v631 = vld [vmem:[%s399 + $0x2] sm:$0x1]
      %v632 = vld [vmem:[%s399 + $0x3] sm:$0x1]
      %v633 = vld [vmem:[%s406] sm:$0x1]
      %v634 = vld [vmem:[%s406 + $0x1] sm:$0x1]
      %v635 = vld [vmem:[%s406 + $0x2] sm:$0x1]
      %v636 = vld [vmem:[%s406 + $0x3] sm:$0x1]
      %s637 = scalar_lea.vmem %s4, 16
      %v638 = vld [vmem:[%s637] sm:$0xff]
      %v639 = vld [vmem:[%s637 + $0x8] sm:$0xff]
      %v640 = vpack.c.bf16 %v639, %v638
      %s641 = scalar_lea.vmem %s5, 16
      %v642 = vld [vmem:[%s641] sm:$0xff]
      %v643 = vld [vmem:[%s641 + $0x8] sm:$0xff]
      %v644 = vpack.c.bf16 %v643, %v642
      %v649 = vcombine.low %v633, %v634
      %v650 = vcombine.low %v635, %v636
      %v652 = vunpack.c.l.s4 1966171168
      %v653 = vunpack.c.0.s8 %v652
      %v654 = vlaneseq
      %v655 = vshrl.u32 %v654, 7
      %v656 = vsub.s32 %v653, %v655
      %v657 = vrot.slane %v649, %v656
      %v659 = vunpack.c.l.s4 1966171168
      %v660 = vunpack.c.0.s8 %v659
      %v661 = vlaneseq
      %v662 = vshrl.u32 %v661, 7
      %v663 = vsub.s32 %v660, %v662
      %v664 = vrot.slane %v650, %v663
      %v665 = vcombine.low %v657, %v664
      %v667 = vunpack.c.l.s4 1966171168
      %v668 = vunpack.c.0.s8 %v667
      %v669 = vlaneseq
      %v670 = vshrl.u32 %v669, 7
      %v671 = vsub.s32 %v668, %v670
      %v672 = vrot.slane %v665, %v671
      %v674 = vsel %vm475, %v672, 0
      %676 = vmatprep.subr.bf16.mxu0 0
      %677 = vmatpush1.bf16.msra.mxu0 0
      %678 = vmatprep.subr.bf16.mxu0 0
      %679 = vmatpush1.bf16.msra.mxu0 0
      %680 = vmatprep.subr.bf16.mxu0 0
      %681 = vmatpush1.bf16.msra.mxu0 0
      %682 = vmatprep.subr.bf16.mxu0 0
      %683 = vmatpush1.bf16.msra.mxu0 0
      %684 = vmatprep.subr.bf16.mxu0 0
      %685 = vmatpush1.bf16.msra.mxu0 0
      %686 = vmatprep.subr.bf16.mxu0 0
      %687 = vmatpush1.bf16.msra.mxu0 0
      %688 = vmatprep.subr.bf16.mxu0 0
      %689 = vmatpush1.bf16.msra.mxu0 0
      %690 = vmatprep.subr.bf16.mxu0 0
      %691 = vmatpush1.bf16.msra.mxu0 %v644
      %692 = vmatprep.subr.bf16.mxu0 0
      %693 = vmatpush2.bf16.msra.mxu0 0
      %694 = vmatprep.subr.bf16.mxu0 0
      %695 = vmatpush2.bf16.msra.mxu0 0
      %696 = vmatprep.subr.bf16.mxu0 0
      %697 = vmatpush2.bf16.msra.mxu0 0
      %698 = vmatprep.subr.bf16.mxu0 0
      %699 = vmatpush2.bf16.msra.mxu0 0
      %700 = vmatprep.subr.bf16.mxu0 0
      %701 = vmatpush2.bf16.msra.mxu0 0
      %702 = vmatprep.subr.bf16.mxu0 0
      %703 = vmatpush2.bf16.msra.mxu0 0
      %704 = vmatprep.subr.bf16.mxu0 0
      %705 = vmatpush2.bf16.msra.mxu0 0
      %706 = vmatprep.subr.bf16.mxu0 0
      %707 = vmatpush2.bf16.msra.mxu0 0
      %708 = vmatprep.mubr.bf16.mxu0 0
      %709 = vmatmul.mubr.bf16.gmra.mxu0 %v674
      %v710 = vpop.f32.mrf.mxu0
      %v711 = vadd.f32 0.0, %v710
      %v712 = vpop.f32.mrf.mxu0
      %v713 = vpop.f32.mrf.mxu0
      %v714 = vpop.f32.mrf.mxu0
      %715 = vdwg.mxu0
      %v720 = vcombine.low %v629, %v630
      %v721 = vcombine.low %v631, %v632
      %v723 = vunpack.c.l.s4 1966171168
      %v724 = vunpack.c.0.s8 %v723
      %v725 = vlaneseq
      %v726 = vshrl.u32 %v725, 7
      %v727 = vsub.s32 %v724, %v726
      %v728 = vrot.slane %v720, %v727
      %v730 = vunpack.c.l.s4 1966171168
      %v731 = vunpack.c.0.s8 %v730
      %v732 = vlaneseq
      %v733 = vshrl.u32 %v732, 7
      %v734 = vsub.s32 %v731, %v733
      %v735 = vrot.slane %v721, %v734
      %v736 = vcombine.low %v728, %v735
      %v738 = vunpack.c.l.s4 1966171168
      %v739 = vunpack.c.0.s8 %v738
      %v740 = vlaneseq
      %v741 = vshrl.u32 %v740, 7
      %v742 = vsub.s32 %v739, %v741
      %v743 = vrot.slane %v736, %v742
      %v745 = vsel %vm475, %v743, 0
      %747 = vmatprep.subr.bf16.mxu0 0
      %748 = vmatpush1.bf16.msra.mxu0 0
      %749 = vmatprep.subr.bf16.mxu0 0
      %750 = vmatpush1.bf16.msra.mxu0 0
      %751 = vmatprep.subr.bf16.mxu0 0
      %752 = vmatpush1.bf16.msra.mxu0 0
      %753 = vmatprep.subr.bf16.mxu0 0
      %754 = vmatpush1.bf16.msra.mxu0 0
      %755 = vmatprep.subr.bf16.mxu0 0
      %756 = vmatpush1.bf16.msra.mxu0 0
      %757 = vmatprep.subr.bf16.mxu0 0
      %758 = vmatpush1.bf16.msra.mxu0 0
      %759 = vmatprep.subr.bf16.mxu0 0
      %760 = vmatpush1.bf16.msra.mxu0 0
      %761 = vmatprep.subr.bf16.mxu0 0
      %762 = vmatpush1.bf16.msra.mxu0 %v640
      %763 = vmatprep.subr.bf16.mxu0 0
      %764 = vmatpush2.bf16.msra.mxu0 0
      %765 = vmatprep.subr.bf16.mxu0 0
      %766 = vmatpush2.bf16.msra.mxu0 0
      %767 = vmatprep.subr.bf16.mxu0 0
      %768 = vmatpush2.bf16.msra.mxu0 0
      %769 = vmatprep.subr.bf16.mxu0 0
      %770 = vmatpush2.bf16.msra.mxu0 0
      %771 = vmatprep.subr.bf16.mxu0 0
      %772 = vmatpush2.bf16.msra.mxu0 0
      %773 = vmatprep.subr.bf16.mxu0 0
      %774 = vmatpush2.bf16.msra.mxu0 0
      %775 = vmatprep.subr.bf16.mxu0 0
      %776 = vmatpush2.bf16.msra.mxu0 0
      %777 = vmatprep.subr.bf16.mxu0 0
      %778 = vmatpush2.bf16.msra.mxu0 0
      %779 = vmatprep.mubr.bf16.mxu0 0
      %780 = vmatmul.mubr.bf16.gmra.mxu0 %v745
      %v781 = vpop.f32.mrf.mxu0
      %v782 = vadd.f32 %v711, %v781
      %v783 = vpop.f32.mrf.mxu0
      %v784 = vpop.f32.mrf.mxu0
      %v785 = vpop.f32.mrf.mxu0
      %786 = vdwg.mxu0
      %s787 = scalar_lea.vmem %s7, 1
      %v788 = vld [vmem:[%s787] sm:$0x1]
      %v790 = vlaneseq
      %v791 = vshrl.u32 %v790, 7
      %v792 = vsub.s32 0, %v791
      %v793 = vrot.slane %v788, %v792
      %v795 = vadd.f32 %v782, %v793
      %v797 = vcombine.high %v795, %v795
      %v799 = vunpack.c.l.s4 1983009808
      %v800 = vunpack.c.0.s8 %v799
      %v801 = vlaneseq
      %v802 = vshrl.u32 %v801, 7
      %v803 = vsub.s32 %v800, %v802
      %v804 = vrot.slane %v795, %v803
      %v806 = vunpack.c.l.s4 1983009808
      %v807 = vunpack.c.0.s8 %v806
      %v808 = vlaneseq
      %v809 = vshrl.u32 %v808, 7
      %v810 = vsub.s32 %v807, %v809
      %v811 = vrot.slane %v797, %v810
      %v812 = vcombine.high %v804, %v804
      %v813 = vcombine.high %v811, %v811
      %v818 = vpack.c.bf16 %v804, %v804
      %v819 = vpack.c.bf16 %v812, %v812
      %v820 = vpack.c.bf16 %v811, %v811
      %v821 = vpack.c.bf16 %v813, %v813
      %822 = vst.msk [vmem:[#allocation3] sm:$0x1] %vm624, %v818
      %823 = vst.msk [vmem:[#allocation3 + $0x1] sm:$0x1] %vm624, %v819
      %824 = vst.msk [vmem:[#allocation3 + $0x2] sm:$0x1] %vm624, %v820
      %825 = vst.msk [vmem:[#allocation3 + $0x3] sm:$0x1] %vm624, %v821
      %v826 = vld [vmem:[%s6] sm:$0xff]
      %v827 = vld [vmem:[%s6 + $0x8] sm:$0xff]
      %v828 = vpack.c.bf16 %v827, %v826
      %s829 = scalar_lea.vmem %s6, 16
      %v830 = vld [vmem:[%s829] sm:$0xff]
      %v831 = vld [vmem:[%s829 + $0x8] sm:$0xff]
      %v832 = vpack.c.bf16 %v831, %v830
      %v833 = vld [vmem:[#allocation4] sm:$0x3]
      %v834 = vld [vmem:[#allocation5] sm:$0x3]
      %s835 = scalar_lea.vmem [#allocation4], 2
      %v836 = vld [vmem:[%s835] sm:$0x3]
      %s837 = scalar_lea.vmem [#allocation5], 2
      %v838 = vld [vmem:[%s837] sm:$0x3]
      loop: start=0, step=1, limit=4
      $region57: #{_lambda_.4} parent=51 // loop_pre_header
        _
      $region58: #{_lambda_.4} parent=51 // loop_header
        %s840 = sphi 0, %s844
        %p841 = scmp.ge.s32.totalorder %s840, 4
        %v845 = vphi %v833, %v1025
        %v846 = vphi %v834, %v1054
        %v847 = vphi %v836, %v1040
        %v848 = vphi %v838, %v1065
      $region59: #{_lambda_.4} parent=51 // loop_header_branch
        %843 = sbr.rel (%p841) target = $region63
      $region60: #{_lambda_.4} parent=51 // loop_body
        %s849 = ssub.s32 3, %s840
        %s850 = scalar_lea.vmem [#allocation2], %s840
        %v851 = vld [vmem:[%s850] sm:$0x1]
        %v852 = vunpack.c.l.bf16 %v851
        %v853 = vpack.c.bf16 %v845, %v845
        %v855 = vsel %vm475, %v853, 0
        %857 = vmatprep.subr.bf16.mxu0 0
        %858 = vmatpush1.bf16.msra.mxu0 0
        %859 = vmatprep.subr.bf16.mxu0 0
        %860 = vmatpush1.bf16.msra.mxu0 0
        %861 = vmatprep.subr.bf16.mxu0 0
        %862 = vmatpush1.bf16.msra.mxu0 0
        %863 = vmatprep.subr.bf16.mxu0 0
        %864 = vmatpush1.bf16.msra.mxu0 0
        %865 = vmatprep.subr.bf16.mxu0 0
        %866 = vmatpush1.bf16.msra.mxu0 0
        %867 = vmatprep.subr.bf16.mxu0 0
        %868 = vmatpush1.bf16.msra.mxu0 0
        %869 = vmatprep.subr.bf16.mxu0 0
        %870 = vmatpush1.bf16.msra.mxu0 0
        %871 = vmatprep.subr.bf16.mxu0 0
        %872 = vmatpush1.bf16.msra.mxu0 %v828
        %873 = vmatprep.subr.bf16.mxu0 0
        %874 = vmatpush2.bf16.msra.mxu0 0
        %875 = vmatprep.subr.bf16.mxu0 0
        %876 = vmatpush2.bf16.msra.mxu0 0
        %877 = vmatprep.subr.bf16.mxu0 0
        %878 = vmatpush2.bf16.msra.mxu0 0
        %879 = vmatprep.subr.bf16.mxu0 0
        %880 = vmatpush2.bf16.msra.mxu0 0
        %881 = vmatprep.subr.bf16.mxu0 0
        %882 = vmatpush2.bf16.msra.mxu0 0
        %883 = vmatprep.subr.bf16.mxu0 0
        %884 = vmatpush2.bf16.msra.mxu0 0
        %885 = vmatprep.subr.bf16.mxu0 0
        %886 = vmatpush2.bf16.msra.mxu0 0
        %887 = vmatprep.subr.bf16.mxu0 0
        %888 = vmatpush2.bf16.msra.mxu0 0
        %889 = vmatprep.mubr.bf16.mxu0 0
        %890 = vmatmul.mubr.bf16.gmra.mxu0 %v855
        %v891 = vpop.f32.mrf.mxu0
        %v892 = vadd.f32 0.0, %v891
        %v893 = vpop.f32.mrf.mxu0
        %v894 = vpop.f32.mrf.mxu0
        %v895 = vpop.f32.mrf.mxu0
        %896 = vdwg.mxu0
        %v897 = vadd.f32 %v852, %v892
        %s898 = scalar_lea.vmem [#allocation3], %s849
        %v899 = vld [vmem:[%s898] sm:$0x1]
        %v900 = vunpack.c.l.bf16 %v899
        %v901 = vpack.c.bf16 %v847, %v847
        %v903 = vsel %vm475, %v901, 0
        %905 = vmatprep.subr.bf16.mxu0 0
        %906 = vmatpush1.bf16.msra.mxu0 0
        %907 = vmatprep.subr.bf16.mxu0 0
        %908 = vmatpush1.bf16.msra.mxu0 0
        %909 = vmatprep.subr.bf16.mxu0 0
        %910 = vmatpush1.bf16.msra.mxu0 0
        %911 = vmatprep.subr.bf16.mxu0 0
        %912 = vmatpush1.bf16.msra.mxu0 0
        %913 = vmatprep.subr.bf16.mxu0 0
        %914 = vmatpush1.bf16.msra.mxu0 0
        %915 = vmatprep.subr.bf16.mxu0 0
        %916 = vmatpush1.bf16.msra.mxu0 0
        %917 = vmatprep.subr.bf16.mxu0 0
        %918 = vmatpush1.bf16.msra.mxu0 0
        %919 = vmatprep.subr.bf16.mxu0 0
        %920 = vmatpush1.bf16.msra.mxu0 %v832
        %921 = vmatprep.subr.bf16.mxu0 0
        %922 = vmatpush2.bf16.msra.mxu0 0
        %923 = vmatprep.subr.bf16.mxu0 0
        %924 = vmatpush2.bf16.msra.mxu0 0
        %925 = vmatprep.subr.bf16.mxu0 0
        %926 = vmatpush2.bf16.msra.mxu0 0
        %927 = vmatprep.subr.bf16.mxu0 0
        %928 = vmatpush2.bf16.msra.mxu0 0
        %929 = vmatprep.subr.bf16.mxu0 0
        %930 = vmatpush2.bf16.msra.mxu0 0
        %931 = vmatprep.subr.bf16.mxu0 0
        %932 = vmatpush2.bf16.msra.mxu0 0
        %933 = vmatprep.subr.bf16.mxu0 0
        %934 = vmatpush2.bf16.msra.mxu0 0
        %935 = vmatprep.subr.bf16.mxu0 0
        %936 = vmatpush2.bf16.msra.mxu0 0
        %937 = vmatprep.mubr.bf16.mxu0 0
        %938 = vmatmul.mubr.bf16.gmra.mxu0 %v903
        %v939 = vpop.f32.mrf.mxu0
        %v940 = vadd.f32 0.0, %v939
        %v941 = vpop.f32.mrf.mxu0
        %v942 = vpop.f32.mrf.mxu0
        %v943 = vpop.f32.mrf.mxu0
        %944 = vdwg.mxu0
        %v945 = vadd.f32 %v900, %v940
        %v946 = vxor.u32 %v897, 2147483648
        %v947 = vmul.f32 %v946, 1.442695
        %v948 = vpow.pop %v947
        %v949 = vadd.f32 %v948, 1.0
        %v950 = vrcp.pop %v949
        %v951 = vmul.f32 1.0, %v950
        %v952 = vtanh.pop %v897
        %v955 = vunpack.c.l.s4 1983009808
        %v956 = vunpack.c.0.s8 %v955
        %v957 = vlaneseq
        %v958 = vshrl.u32 %v957, 7
        %v959 = vsub.s32 %v956, %v958
        %v960 = vrot.slane %v846, %v959
        %961 = vrot.lane.b32.xlu0 %v960, 16
        %v962 = vpop.permute.xlu0 %961
        %v964 = vmul.f32 %v951, %v962
        %966 = vrot.lane.b32.xlu0 %v952, 96
        %v967 = vpop.permute.xlu0 %966
        %v969 = vmul.f32 %v951, %v967
        %971 = vrot.lane.b32.xlu0 %v969, 16
        %v972 = vpop.permute.xlu0 %971
        %v974 = vadd.f32 %v964, %v972
        %v975 = vtanh.pop %v974
        %977 = vrot.lane.b32.xlu0 %v975, 32
        %v978 = vpop.permute.xlu0 %977
        %v980 = vmul.f32 %v951, %v978
        %v981 = vxor.u32 %v945, 2147483648
        %v982 = vmul.f32 %v981, 1.442695
        %v983 = vpow.pop %v982
        %v984 = vadd.f32 %v983, 1.0
        %v985 = vrcp.pop %v984
        %v986 = vmul.f32 1.0, %v985
        %v987 = vtanh.pop %v945
        %v990 = vunpack.c.l.s4 1983009808
        %v991 = vunpack.c.0.s8 %v990
        %v992 = vlaneseq
        %v993 = vshrl.u32 %v992, 7
        %v994 = vsub.s32 %v991, %v993
        %v995 = vrot.slane %v848, %v994
        %996 = vrot.lane.b32.xlu0 %v995, 16
        %v997 = vpop.permute.xlu0 %996
        %v999 = vmul.f32 %v986, %v997
        %1001 = vrot.lane.b32.xlu0 %v987, 96
        %v1002 = vpop.permute.xlu0 %1001
        %v1004 = vmul.f32 %v986, %v1002
        %1006 = vrot.lane.b32.xlu0 %v1004, 16
        %v1007 = vpop.permute.xlu0 %1006
        %v1009 = vadd.f32 %v999, %v1007
        %v1010 = vtanh.pop %v1009
        %1012 = vrot.lane.b32.xlu0 %v1010, 32
        %v1013 = vpop.permute.xlu0 %1012
        %v1015 = vmul.f32 %v986, %v1013
        %v1018 = vunpack.c.l.s4 1983009808
        %v1019 = vunpack.c.0.s8 %v1018
        %v1020 = vlaneseq
        %v1021 = vshrl.u32 %v1020, 7
        %v1022 = vsub.s32 %v1019, %v1021
        %v1023 = vrot.slane %v980, %v1022
        %1024 = vrot.lane.b32.xlu0 %v1023, 80
        %v1025 = vpop.permute.xlu0 %1024
        %s1027 = smul.u32 %s840, 2
        %s1028 = scalar_lea.vmem %s413, %s1027
        %vm1029 = vcmask 123904
        %1030 = vst.msk [vmem:[%s1028] sm:$0x3] %vm1029, %v1025
        %v1033 = vunpack.c.l.s4 1983009808
        %v1034 = vunpack.c.0.s8 %v1033
        %v1035 = vlaneseq
        %v1036 = vshrl.u32 %v1035, 7
        %v1037 = vsub.s32 %v1034, %v1036
        %v1038 = vrot.slane %v1015, %v1037
        %1039 = vrot.lane.b32.xlu0 %v1038, 80
        %v1040 = vpop.permute.xlu0 %1039
        %s1042 = smul.u32 %s849, 2
        %s1043 = scalar_lea.vmem %s420, %s1042
        %1044 = vst.msk [vmem:[%s1043] sm:$0x3] %vm1029, %v1040
        %v1047 = vunpack.c.l.s4 1983009808
        %v1048 = vunpack.c.0.s8 %v1047
        %v1049 = vlaneseq
        %v1050 = vshrl.u32 %v1049, 7
        %v1051 = vsub.s32 %v1048, %v1050
        %v1052 = vrot.slane %v974, %v1051
        %1053 = vrot.lane.b32.xlu0 %v1052, 112
        %v1054 = vpop.permute.xlu0 %1053
        %v1058 = vunpack.c.l.s4 1983009808
        %v1059 = vunpack.c.0.s8 %v1058
        %v1060 = vlaneseq
        %v1061 = vshrl.u32 %v1060, 7
        %v1062 = vsub.s32 %v1059, %v1061
        %v1063 = vrot.slane %v1009, %v1062
        %1064 = vrot.lane.b32.xlu0 %v1063, 112
        %v1065 = vpop.permute.xlu0 %1064
      $region61: #{_lambda_.4} parent=51 // loop_footer
        %s844 = sadd.s32 1, %s840
      $region62: #{_lambda_.4} parent=51 // loop_footer_branch
        %839 = sbr.rel target = $region58
      $region63: #{_lambda_.4} parent=51 // loop_exit
        _
      %vm1067 = vcmask 123904
      %1068 = vst.msk [vmem:[#allocation4] sm:$0x3] %vm1067, %v845
      %1069 = vst.msk [vmem:[#allocation5] sm:$0x3] %vm1067, %v846
      %1070 = vst.msk [vmem:[%s835] sm:$0x3] %vm1067, %v847
      %1071 = vst.msk [vmem:[%s837] sm:$0x3] %vm1067, %v848
      %s1072 = smul.u32 4, %s21
      %p1073 = scmp.lt.s32.totalorder %s1072, 7
      %s1074 = scalar_select %p1073, %s1072, 7
      %s1075 = smul.addr %s1074, 2
      %s1076 = scalar_lea.vmem %s8, %s1075
      %s1077 = ssub.s32 1, %s21
      %s1078 = smul.u32 4, %s1077
      %p1079 = scmp.lt.s32.totalorder %s1078, 7
      %s1080 = scalar_select %p1079, %s1078, 7
      %s1081 = smul.addr %s1080, 2
      %s1082 = scalar_lea.vmem %s9, %s1081
      // Predicated region
      $region64: #{_lambda_.4} parent=51 // pred_check
        %p1083 = pneg %p231
      $region65: #{_lambda_.4} parent=51 // pred_check_branch
        %1085 = sbr.rel (%p1083) target = $region67
      $region66: #{_lambda_.4} parent=51 // pred_region
        %s1086 = smul.u32 4, %s21
      $region67: #{_lambda_.4} parent=51 // pred_fallthru
        _
      // Predicated region
      $region68: #{_lambda_.4} parent=51 // pred_check
        %p1087 = pneg %p259
      $region69: #{_lambda_.4} parent=51 // pred_check_branch
        %1089 = sbr.rel (%p1087) target = $region71
      $region70: #{_lambda_.4} parent=51 // pred_region
        %s1090 = ssub.s32 1, %s21
        %s1091 = smul.u32 4, %s1090
      $region71: #{_lambda_.4} parent=51 // pred_fallthru
        _
    $region52: #{_lambda_.4} parent=5 // pred_fallthru
      _
    %p1092 = scmp.le.s32.totalorder 2, %s16
    // Predicated region
    $region72: #{_lambda_.4} parent=5 // pred_check
      %p1093 = pneg %p1092
    $region73: #{_lambda_.4} parent=5 // pred_check_branch
      %1095 = sbr.rel (%p1093) target = $region75
    $region74: #{_lambda_.4} parent=5 // pred_region
      %s1096 = ssub.s32 %s16, 2
      // Predicated region
      $region76: #{_lambda_.4} parent=74 // pred_check
        %p1097 = pneg %p237
      $region77: #{_lambda_.4} parent=74 // pred_check_branch
        %1099 = sbr.rel (%p1097) target = $region79
      $region78: #{_lambda_.4} parent=74 // pred_region
        %s1100 = smul.u32 4, %s22
        %p1101 = scmp.lt.s32.totalorder %s1100, 7
        %s1102 = scalar_select %p1101, %s1100, 7
        %s1103 = smul.addr %s1102, 2
        %s1104 = scalar_lea.vmem %s8, %s1103
      $region79: #{_lambda_.4} parent=74 // pred_fallthru
        _
      // Predicated region
      $region80: #{_lambda_.4} parent=74 // pred_check
        %p1105 = pneg %p265
      $region81: #{_lambda_.4} parent=74 // pred_check_branch
        %1107 = sbr.rel (%p1105) target = $region83
      $region82: #{_lambda_.4} parent=74 // pred_region
        %s1108 = ssub.s32 1, %s22
        %s1109 = smul.u32 4, %s1108
        %p1110 = scmp.lt.s32.totalorder %s1109, 7
        %s1111 = scalar_select %p1110, %s1109, 7
        %s1112 = smul.addr %s1111, 2
        %s1113 = scalar_lea.vmem %s9, %s1112
      $region83: #{_lambda_.4} parent=74 // pred_fallthru
        _
    $region75: #{_lambda_.4} parent=5 // pred_fallthru
      _
  $region6: #{_lambda_.4} parent=0 // loop_footer
    %s20 = sadd.s32 1, %s16
  $region7: #{_lambda_.4} parent=0 // loop_footer_branch
    %15 = sbr.rel target = $region3
  $region8: #{_lambda_.4} parent=0 // loop_exit
    _

</llo_original>
